<compile_context>
chip_gen: v7x
topology: tpu7x:2x2x1
jax: 0.10.0
libtpu: 0.0.40
codegen_flags: <defaults>
</compile_context>

<pallas_src>
import functools

import jax
import jax.numpy as jnp
import numpy as np
from jax import lax
from jax.experimental import pallas as pl
from jax.experimental.pallas import tpu as pltpu


def _round_up(x, m):
    return (x + m - 1) // m * m


def _double_conv_kernel(x_ref, w1_ref, b1_ref, w2_ref, b2_ref, o_ref,
                        xp_ref, hp_ref, *, H, W, TH, WP, n_strips):
    """Fused 3x3 conv -> ReLU -> 3x3 conv for one (batch, row-strip) grid step.

    x_ref : (1, H, W, Cin)     full image (resident across the strip axis)
    w1_ref: (3, 3*Cin, Cmid)   bf16, indexed [dx, dy*Cin + ci, co]
    b1_ref: (1, Cmid)          f32
    w2_ref: (3, 3*Cmid, Cout)  bf16
    b2_ref: (1, Cout)          f32
    o_ref : (1, TH, W, Cout)   output strip
    xp_ref: (TH+4, WP, Cin)    f32 scratch: zero-padded input strip (+2 halo)
    hp_ref: (TH+2, WP, Cmid)   f32 scratch: conv1 output (+1 halo), zero-padded,
                               i.e. conv2's padded input
    """
    Cin = x_ref.shape[-1]
    Cmid = w1_ref.shape[-1]
    Cout = w2_ref.shape[-1]
    s = pl.program_id(1)

    # ---- stage 0: build the zero-padded input strip in VMEM (no HBM-side pad).
    # xp row r <-> input row s*TH - 2 + r ; xp col c <-> input col c - 1.
    xp_ref[...] = jnp.zeros_like(xp_ref)
    if n_strips == 1:
        xp_ref[2:H + 2, 1:W + 1, :] = x_ref[0]
    else:
        @pl.when(s == 0)
        def _():
            xp_ref[2:TH + 4, 1:W + 1, :] = x_ref[0, 0:TH + 2, :, :]

        if n_strips >= 3:
            @pl.when(jnp.logical_and(s > 0, s < n_strips - 1))
            def _():
                xp_ref[0:TH + 4, 1:W + 1, :] = (
                    x_ref[0, pl.ds(s * TH - 2, TH + 4), :, :])

        @pl.when(s == n_strips - 1)
        def _():
            xp_ref[0:TH + 2, 1:W + 1, :] = (
                x_ref[0, pl.ds(s * TH - 2, TH + 2), :, :])

    # ---- conv1: 3 matmuls with K = 3*Cin (dy packed into K); dx via result
    # roll along the flattened (row, padded-col) axis (XLU, no input relayout).
    M1 = (TH + 2) * WP
    acat1 = jnp.concatenate(
        [xp_ref[dy:dy + TH + 2, :, :] for dy in range(3)], axis=-1,
    ).reshape(M1, 3 * Cin).astype(jnp.bfloat16)

    acc1 = jnp.zeros((M1, Cmid), jnp.float32)
    for dx in range(3):
        p = jnp.dot(acat1, w1_ref[dx], preferred_element_type=jnp.float32)
        shift = (1 - dx) % M1            # result[i] needs p[i + dx - 1]
        if shift:
            p = pltpu.roll(p, shift, axis=0)
        acc1 = acc1 + p

    h = jnp.maximum(acc1 + b1_ref[...], 0.0).reshape(TH + 2, WP, Cmid)

    # Zero the halo rows / pad columns so hp is exactly conv2's padded input.
    r_idx = lax.broadcasted_iota(jnp.int32, (TH + 2, WP, 1), 0)
    c_idx = lax.broadcasted_iota(jnp.int32, (TH + 2, WP, 1), 1)
    g_row = r_idx + (s * TH - 1)
    valid = (g_row >= 0) & (g_row < H) & (c_idx >= 1) & (c_idx <= W)
    hp_ref[...] = jnp.where(valid, h, 0.0)

    # ---- conv2: same structure, reading the VMEM-resident intermediate.
    M2 = TH * WP
    acat2 = jnp.concatenate(
        [hp_ref[dy:dy + TH, :, :] for dy in range(3)], axis=-1,
    ).reshape(M2, 3 * Cmid).astype(jnp.bfloat16)

    acc2 = jnp.zeros((M2, Cout), jnp.float32)
    for dx in range(3):
        p = jnp.dot(acat2, w2_ref[dx], preferred_element_type=jnp.float32)
        shift = (-dx) % M2               # result[i] needs p[i + dx]
        if shift:
            p = pltpu.roll(p, shift, axis=0)
        acc2 = acc2 + p

    y = (acc2 + b2_ref[...]).reshape(TH, WP, Cout)
    o_ref[0] = y[:, :W, :].astype(o_ref.dtype)


def _pick_tile_h(H, tile_h):
    if tile_h is not None:
        if tile_h != H and (H % tile_h != 0 or tile_h < 2):
            raise ValueError(f"tile_h={tile_h} must divide H={H} and be >= 2")
        return tile_h
    # Largest divisor of H that keeps the strip VMEM-friendly (v7x-safe).
    best = H
    for d in range(2, H + 1):
        if H % d == 0 and d <= 64:
            best = d
    return best


def double_conv_nhwc(x_nhwc, params, *, tile_h=None):
    """Fused DoubleConv on an NHWC tensor: (N, H, W, Cin) -> (N, H, W, Cout)."""
    w1, b1, w2, b2 = params                      # w*: (3, 3, Ci, Co) f32, HWIO
    N, H, W, Cin = x_nhwc.shape
    Cmid = w1.shape[-1]
    Cout = w2.shape[-1]
    TH = _pick_tile_h(H, tile_h)
    n_strips = H // TH
    WP = _round_up(W + 2, 8)                     # padded width, sublane aligned

    # Pack weights for the K = 3*Cin contraction: wp[dx, dy*Ci + ci, co].
    w1p = jnp.transpose(w1, (1, 0, 2, 3)).reshape(3, 3 * Cin, Cmid)
    w1p = w1p.astype(jnp.bfloat16)
    w2p = jnp.transpose(w2, (1, 0, 2, 3)).reshape(3, 3 * Cmid, Cout)
    w2p = w2p.astype(jnp.bfloat16)
    b1r = b1.reshape(1, Cmid).astype(jnp.float32)
    b2r = b2.reshape(1, Cout).astype(jnp.float32)

    kernel = functools.partial(_double_conv_kernel, H=H, W=W, TH=TH, WP=WP,
                               n_strips=n_strips)

    flops = 2 * N * H * W * 9 * (Cin * Cmid + Cmid * Cout)
    bytes_accessed = (int(x_nhwc.size) * 4 + N * H * W * Cout * 4
                      + int(w1p.size) * 2 + int(w2p.size) * 2
                      + (Cmid + Cout) * 4)

    return pl.pallas_call(
        kernel,
        out_shape=jax.ShapeDtypeStruct((N, H, W, Cout), jnp.float32),
        grid=(N, n_strips),
        in_specs=[
            pl.BlockSpec((1, H, W, Cin), lambda n, t: (n, 0, 0, 0)),
            pl.BlockSpec((3, 3 * Cin, Cmid), lambda n, t: (0, 0, 0)),
            pl.BlockSpec((1, Cmid), lambda n, t: (0, 0)),
            pl.BlockSpec((3, 3 * Cmid, Cout), lambda n, t: (0, 0, 0)),
            pl.BlockSpec((1, Cout), lambda n, t: (0, 0)),
        ],
        out_specs=pl.BlockSpec((1, TH, W, Cout), lambda n, t: (n, t, 0, 0)),
        scratch_shapes=[
            pltpu.VMEM((TH + 4, WP, Cin), jnp.float32),   # padded input strip
            pltpu.VMEM((TH + 2, WP, Cmid), jnp.float32),  # conv1 output strip
        ],
        compiler_params=pltpu.CompilerParams(
            dimension_semantics=("parallel", "parallel")),
        cost_estimate=pl.CostEstimate(flops=flops, transcendentals=0,
                                      bytes_accessed=bytes_accessed),
    )(x_nhwc, w1p, b1r, w2p, b2r)


def double_conv(x_nchw, params, *, tile_h=None):
    """PyTorch-layout forward: (N, Cin, H, W) -> (N, Cout, H, W)."""
    # TODO(synk): in a full AE/VAE keep the whole network NHWC and transpose
    # only once at the model boundary instead of per DoubleConv call.
    x = jnp.transpose(x_nchw, (0, 2, 3, 1))
    y = double_conv_nhwc(x, params, tile_h=tile_h)
    return jnp.transpose(y, (0, 3, 1, 2))


def init_params(key, in_channels, out_channels):
    """Deterministic init matching PyTorch's Conv2d default (uniform +-1/sqrt(fan_in)).
    Weights stored as (kh, kw, Cin, Cout) (HWIO)."""
    k1, k2, k3, k4 = jax.random.split(key, 4)
    fan_in1 = in_channels * 9
    fan_in2 = out_channels * 9
    bound1 = 1.0 / np.sqrt(fan_in1)
    bound2 = 1.0 / np.sqrt(fan_in2)
    w1 = jax.random.uniform(k1, (3, 3, in_channels, out_channels),
                            jnp.float32, -bound1, bound1)
    b1 = jax.random.uniform(k2, (out_channels,), jnp.float32, -bound1, bound1)
    w2 = jax.random.uniform(k3, (3, 3, out_channels, out_channels),
                            jnp.float32, -bound2, bound2)
    b2 = jax.random.uniform(k4, (out_channels,), jnp.float32, -bound2, bound2)
    return w1, b1, w2, b2


def _reference_double_conv_nhwc(x_nhwc, params):
    """Pure-JAX reference with the same bf16 operand rounding as the kernel."""
    w1, b1, w2, b2 = params
    f32 = jnp.float32
    xq = x_nhwc.astype(jnp.bfloat16).astype(f32)
    w1q = w1.astype(jnp.bfloat16).astype(f32)
    w2q = w2.astype(jnp.bfloat16).astype(f32)
    dn = ("NHWC", "HWIO", "NHWC")
    h = lax.conv_general_dilated(xq, w1q, (1, 1), "SAME", dimension_numbers=dn,
                                 precision=lax.Precision.HIGHEST) + b1
    h = jnp.maximum(h, 0.0)
    hq = h.astype(jnp.bfloat16).astype(f32)
    y = lax.conv_general_dilated(hq, w2q, (1, 1), "SAME", dimension_numbers=dn,
                                 precision=lax.Precision.HIGHEST) + b2
    return y


if __name__ == "__main__":
    key = jax.random.PRNGKey(0)
    kx, kp = jax.random.split(key)

    N, Cin, Cout, H, W = 2, 4, 8, 16, 16
    x = jax.random.normal(kx, (N, Cin, H, W), jnp.float32)
    params = init_params(kp, Cin, Cout)

    ref_nhwc = _reference_double_conv_nhwc(jnp.transpose(x, (0, 2, 3, 1)), params)
    ref = np.asarray(jnp.transpose(ref_nhwc, (0, 3, 1, 2)))

    # Default tiling (single strip) plus forced multi-strip tilings, which
    # exercise the first / middle / last halo branches of the fused kernel.
    for th in (None, 8, 4):
        out = double_conv(x, params, tile_h=th)
        out = jax.block_until_ready(out)
        assert out.shape == (N, Cout, H, W), out.shape
        np.testing.assert_allclose(np.asarray(out), ref, rtol=5e-3, atol=5e-3)

    print("KERNEL_OK")
</pallas_src>

<mosaic_0001>
module attributes {stable_mosaic.version = 11 : i64} {
  func.func @_double_conv_kernel(%arg0: i32, %arg1: i32, %arg2: memref<1x16x16x4xf32, #tpu.memory_space<vmem>>, %arg3: memref<3x12x8xbf16, #tpu.memory_space<vmem>>, %arg4: memref<1x8xf32, #tpu.memory_space<vmem>>, %arg5: memref<3x24x8xbf16, #tpu.memory_space<vmem>>, %arg6: memref<1x8xf32, #tpu.memory_space<vmem>>, %arg7: memref<1x16x16x8xf32, #tpu.memory_space<vmem>>, %arg8: memref<20x24x4xf32, #tpu.memory_space<vmem>>, %arg9: memref<18x24x8xf32, #tpu.memory_space<vmem>>) attributes {dimension_semantics = [#tpu.dimension_semantics<parallel>, #tpu.dimension_semantics<parallel>], iteration_bounds = array<i64: 2, 1>, scalar_prefetch = 0 : i64, scratch_operands = 2 : i64, tpu.core_type = #tpu.core_type<tc>, window_params = [{transform_indices = @transform_0, window_bounds = array<i64: 1, 16, 16, 4>}, {pipeline_mode = #tpu.pipeline_mode<synchronous>, transform_indices = @transform_1, window_bounds = array<i64: 3, 12, 8>}, {pipeline_mode = #tpu.pipeline_mode<synchronous>, transform_indices = @transform_2, window_bounds = array<i64: 1, 8>}, {pipeline_mode = #tpu.pipeline_mode<synchronous>, transform_indices = @transform_3, window_bounds = array<i64: 3, 24, 8>}, {pipeline_mode = #tpu.pipeline_mode<synchronous>, transform_indices = @transform_4, window_bounds = array<i64: 1, 8>}, {transform_indices = @transform_5, window_bounds = array<i64: 1, 16, 16, 8>}]} {
    %cst = arith.constant 0.000000e+00 : f32
    %0 = vector.broadcast %cst : f32 to vector<20x24x4xf32>
    %c0 = arith.constant 0 : index
    %c0_0 = arith.constant 0 : index
    %c0_1 = arith.constant 0 : index
    %1 = vector.load %arg8[%c0, %c0_0, %c0_1] : memref<20x24x4xf32, #tpu.memory_space<vmem>>, vector<20x24x4xf32>
    tpu.vector_store %arg8[%c0, %c0_0, %c0_1], %0 {strides = array<i32>} : memref<20x24x4xf32, #tpu.memory_space<vmem>>, vector<20x24x4xf32>,
    %c0_2 = arith.constant 0 : index
    %c0_3 = arith.constant 0 : index
    %c0_4 = arith.constant 0 : index
    %c0_5 = arith.constant 0 : index
    %2 = vector.load %arg2[%c0_2, %c0_3, %c0_4, %c0_5] : memref<1x16x16x4xf32, #tpu.memory_space<vmem>>, vector<1x16x16x4xf32>
    %3 = vector.shape_cast %2 : vector<1x16x16x4xf32> to vector<16x16x4xf32>
    %c2 = arith.constant 2 : index
    %c1 = arith.constant 1 : index
    %c0_6 = arith.constant 0 : index
    %4 = vector.load %arg8[%c2, %c1, %c0_6] : memref<20x24x4xf32, #tpu.memory_space<vmem>>, vector<16x16x4xf32>
    tpu.vector_store %arg8[%c2, %c1, %c0_6], %3 {strides = array<i32>} : memref<20x24x4xf32, #tpu.memory_space<vmem>>, vector<16x16x4xf32>,
    %c0_7 = arith.constant 0 : index
    %c0_8 = arith.constant 0 : index
    %c0_9 = arith.constant 0 : index
    %5 = vector.load %arg8[%c0_7, %c0_8, %c0_9] : memref<20x24x4xf32, #tpu.memory_space<vmem>>, vector<18x24x4xf32>
    %c1_10 = arith.constant 1 : index
    %c0_11 = arith.constant 0 : index
    %c0_12 = arith.constant 0 : index
    %6 = vector.load %arg8[%c1_10, %c0_11, %c0_12] : memref<20x24x4xf32, #tpu.memory_space<vmem>>, vector<18x24x4xf32>
    %c2_13 = arith.constant 2 : index
    %c0_14 = arith.constant 0 : index
    %c0_15 = arith.constant 0 : index
    %7 = vector.load %arg8[%c2_13, %c0_14, %c0_15] : memref<20x24x4xf32, #tpu.memory_space<vmem>>, vector<18x24x4xf32>
    %8 = tpu.concatenate %5, %6, %7 in 2 : vector<18x24x4xf32>, vector<18x24x4xf32>, vector<18x24x4xf32> -> vector<18x24x12xf32>
    %9 = vector.shape_cast %8 : vector<18x24x12xf32> to vector<432x12xf32>
    %10 = arith.truncf %9 : vector<432x12xf32> to vector<432x12xbf16>
    %cst_16 = arith.constant 0.000000e+00 : f32
    %11 = vector.broadcast %cst_16 : f32 to vector<432x8xf32>
    %c0_17 = arith.constant 0 : index
    %c0_18 = arith.constant 0 : index
    %c0_19 = arith.constant 0 : index
    %12 = vector.load %arg3[%c0_17, %c0_18, %c0_19] : memref<3x12x8xbf16, #tpu.memory_space<vmem>>, vector<1x12x8xbf16>
    %13 = vector.shape_cast %12 : vector<1x12x8xbf16> to vector<12x8xbf16>
    %cst_20 = arith.constant dense<0.000000e+00> : vector<432x8xf32>
    %14 = tpu.matmul %10, %13, %cst_20 {dimension_numbers = #tpu.dot_dimension_numbers<[1], [0], [0], [1], [0, 0, 1, 1], [], []>} : vector<432x12xbf16>, vector<12x8xbf16>, vector<432x8xf32> -> vector<432x8xf32>
    %c1_i32 = arith.constant 1 : i32
    %15 = tpu.dynamic_rotate %14 by %c1_i32 dim 0 : vector<432x8xf32>, i32 -> vector<432x8xf32>
    %16 = arith.addf %11, %15 : vector<432x8xf32>
    %c1_21 = arith.constant 1 : index
    %c0_22 = arith.constant 0 : index
    %c0_23 = arith.constant 0 : index
    %17 = vector.load %arg3[%c1_21, %c0_22, %c0_23] : memref<3x12x8xbf16, #tpu.memory_space<vmem>>, vector<1x12x8xbf16>
    %18 = vector.shape_cast %17 : vector<1x12x8xbf16> to vector<12x8xbf16>
    %cst_24 = arith.constant dense<0.000000e+00> : vector<432x8xf32>
    %19 = tpu.matmul %10, %18, %cst_24 {dimension_numbers = #tpu.dot_dimension_numbers<[1], [0], [0], [1], [0, 0, 1, 1], [], []>} : vector<432x12xbf16>, vector<12x8xbf16>, vector<432x8xf32> -> vector<432x8xf32>
    %20 = arith.addf %16, %19 : vector<432x8xf32>
    %c2_25 = arith.constant 2 : index
    %c0_26 = arith.constant 0 : index
    %c0_27 = arith.constant 0 : index
    %21 = vector.load %arg3[%c2_25, %c0_26, %c0_27] : memref<3x12x8xbf16, #tpu.memory_space<vmem>>, vector<1x12x8xbf16>
    %22 = vector.shape_cast %21 : vector<1x12x8xbf16> to vector<12x8xbf16>
    %cst_28 = arith.constant dense<0.000000e+00> : vector<432x8xf32>
    %23 = tpu.matmul %10, %22, %cst_28 {dimension_numbers = #tpu.dot_dimension_numbers<[1], [0], [0], [1], [0, 0, 1, 1], [], []>} : vector<432x12xbf16>, vector<12x8xbf16>, vector<432x8xf32> -> vector<432x8xf32>
    %c431_i32 = arith.constant 431 : i32
    %24 = tpu.dynamic_rotate %23 by %c431_i32 dim 0 : vector<432x8xf32>, i32 -> vector<432x8xf32>
    %25 = arith.addf %20, %24 : vector<432x8xf32>
    %c0_29 = arith.constant 0 : index
    %c0_30 = arith.constant 0 : index
    %26 = vector.load %arg4[%c0_29, %c0_30] : memref<1x8xf32, #tpu.memory_space<vmem>>, vector<1x8xf32>
    %27 = vector.broadcast %26 : vector<1x8xf32> to vector<432x8xf32>
    %28 = arith.addf %25, %27 : vector<432x8xf32>
    %cst_31 = arith.constant 0.000000e+00 : f32
    %29 = vector.broadcast %cst_31 : f32 to vector<432x8xf32>
    %30 = arith.maximumf %28, %29 : vector<432x8xf32>
    %31 = vector.shape_cast %30 : vector<432x8xf32> to vector<18x24x8xf32>
    %32 = tpu.iota {dimensions = array<i32: 0>} : vector<18x24x1xi32>
    %33 = tpu.iota {dimensions = array<i32: 1>} : vector<18x24x1xi32>
    %c16_i32 = arith.constant 16 : i32
    %34 = arith.muli %arg1, %c16_i32 : i32
    %c1_i32_32 = arith.constant 1 : i32
    %35 = arith.subi %34, %c1_i32_32 : i32
    %36 = vector.broadcast %35 : i32 to vector<18x24x1xi32>
    %37 = arith.addi %32, %36 : vector<18x24x1xi32>
    %c0_i32 = arith.constant 0 : i32
    %38 = vector.broadcast %c0_i32 : i32 to vector<18x24x1xi32>
    %39 = arith.cmpi sge, %37, %38 : vector<18x24x1xi32>
    %c16_i32_33 = arith.constant 16 : i32
    %40 = vector.broadcast %c16_i32_33 : i32 to vector<18x24x1xi32>
    %41 = arith.cmpi slt, %37, %40 : vector<18x24x1xi32>
    %42 = arith.andi %39, %41 : vector<18x24x1xi1>
    %c1_i32_34 = arith.constant 1 : i32
    %43 = vector.broadcast %c1_i32_34 : i32 to vector<18x24x1xi32>
    %44 = arith.cmpi sge, %33, %43 : vector<18x24x1xi32>
    %45 = arith.andi %42, %44 : vector<18x24x1xi1>
    %c16_i32_35 = arith.constant 16 : i32
    %46 = vector.broadcast %c16_i32_35 : i32 to vector<18x24x1xi32>
    %47 = arith.cmpi sle, %33, %46 : vector<18x24x1xi32>
    %48 = arith.andi %45, %47 : vector<18x24x1xi1>
    %cst_36 = arith.constant 0.000000e+00 : f32
    %49 = vector.shape_cast %48 : vector<18x24x1xi1> to vector<18x24x1xi1>
    %50 = vector.broadcast %49 : vector<18x24x1xi1> to vector<18x24x8xi1>
    %51 = vector.broadcast %cst_36 : f32 to vector<18x24x8xf32>
    %52 = arith.select %50, %31, %51 : vector<18x24x8xi1>, vector<18x24x8xf32>
    %c0_37 = arith.constant 0 : index
    %c0_38 = arith.constant 0 : index
    %c0_39 = arith.constant 0 : index
    %53 = vector.load %arg9[%c0_37, %c0_38, %c0_39] : memref<18x24x8xf32, #tpu.memory_space<vmem>>, vector<18x24x8xf32>
    tpu.vector_store %arg9[%c0_37, %c0_38, %c0_39], %52 {strides = array<i32>} : memref<18x24x8xf32, #tpu.memory_space<vmem>>, vector<18x24x8xf32>,
    %c0_40 = arith.constant 0 : index
    %c0_41 = arith.constant 0 : index
    %c0_42 = arith.constant 0 : index
    %54 = vector.load %arg9[%c0_40, %c0_41, %c0_42] : memref<18x24x8xf32, #tpu.memory_space<vmem>>, vector<16x24x8xf32>
    %c1_43 = arith.constant 1 : index
    %c0_44 = arith.constant 0 : index
    %c0_45 = arith.constant 0 : index
    %55 = vector.load %arg9[%c1_43, %c0_44, %c0_45] : memref<18x24x8xf32, #tpu.memory_space<vmem>>, vector<16x24x8xf32>
    %c2_46 = arith.constant 2 : index
    %c0_47 = arith.constant 0 : index
    %c0_48 = arith.constant 0 : index
    %56 = vector.load %arg9[%c2_46, %c0_47, %c0_48] : memref<18x24x8xf32, #tpu.memory_space<vmem>>, vector<16x24x8xf32>
    %57 = tpu.concatenate %54, %55, %56 in 2 : vector<16x24x8xf32>, vector<16x24x8xf32>, vector<16x24x8xf32> -> vector<16x24x24xf32>
    %58 = vector.shape_cast %57 : vector<16x24x24xf32> to vector<384x24xf32>
    %59 = arith.truncf %58 : vector<384x24xf32> to vector<384x24xbf16>
    %cst_49 = arith.constant 0.000000e+00 : f32
    %60 = vector.broadcast %cst_49 : f32 to vector<384x8xf32>
    %c0_50 = arith.constant 0 : index
    %c0_51 = arith.constant 0 : index
    %c0_52 = arith.constant 0 : index
    %61 = vector.load %arg5[%c0_50, %c0_51, %c0_52] : memref<3x24x8xbf16, #tpu.memory_space<vmem>>, vector<1x24x8xbf16>
    %62 = vector.shape_cast %61 : vector<1x24x8xbf16> to vector<24x8xbf16>
    %cst_53 = arith.constant dense<0.000000e+00> : vector<384x8xf32>
    %63 = tpu.matmul %59, %62, %cst_53 {dimension_numbers = #tpu.dot_dimension_numbers<[1], [0], [0], [1], [0, 0, 1, 1], [], []>} : vector<384x24xbf16>, vector<24x8xbf16>, vector<384x8xf32> -> vector<384x8xf32>
    %64 = arith.addf %60, %63 : vector<384x8xf32>
    %c1_54 = arith.constant 1 : index
    %c0_55 = arith.constant 0 : index
    %c0_56 = arith.constant 0 : index
    %65 = vector.load %arg5[%c1_54, %c0_55, %c0_56] : memref<3x24x8xbf16, #tpu.memory_space<vmem>>, vector<1x24x8xbf16>
    %66 = vector.shape_cast %65 : vector<1x24x8xbf16> to vector<24x8xbf16>
    %cst_57 = arith.constant dense<0.000000e+00> : vector<384x8xf32>
    %67 = tpu.matmul %59, %66, %cst_57 {dimension_numbers = #tpu.dot_dimension_numbers<[1], [0], [0], [1], [0, 0, 1, 1], [], []>} : vector<384x24xbf16>, vector<24x8xbf16>, vector<384x8xf32> -> vector<384x8xf32>
    %c383_i32 = arith.constant 383 : i32
    %68 = tpu.dynamic_rotate %67 by %c383_i32 dim 0 : vector<384x8xf32>, i32 -> vector<384x8xf32>
    %69 = arith.addf %64, %68 : vector<384x8xf32>
    %c2_58 = arith.constant 2 : index
    %c0_59 = arith.constant 0 : index
    %c0_60 = arith.constant 0 : index
    %70 = vector.load %arg5[%c2_58, %c0_59, %c0_60] : memref<3x24x8xbf16, #tpu.memory_space<vmem>>, vector<1x24x8xbf16>
    %71 = vector.shape_cast %70 : vector<1x24x8xbf16> to vector<24x8xbf16>
    %cst_61 = arith.constant dense<0.000000e+00> : vector<384x8xf32>
    %72 = tpu.matmul %59, %71, %cst_61 {dimension_numbers = #tpu.dot_dimension_numbers<[1], [0], [0], [1], [0, 0, 1, 1], [], []>} : vector<384x24xbf16>, vector<24x8xbf16>, vector<384x8xf32> -> vector<384x8xf32>
    %c382_i32 = arith.constant 382 : i32
    %73 = tpu.dynamic_rotate %72 by %c382_i32 dim 0 : vector<384x8xf32>, i32 -> vector<384x8xf32>
    %74 = arith.addf %69, %73 : vector<384x8xf32>
    %c0_62 = arith.constant 0 : index
    %c0_63 = arith.constant 0 : index
    %75 = vector.load %arg6[%c0_62, %c0_63] : memref<1x8xf32, #tpu.memory_space<vmem>>, vector<1x8xf32>
    %76 = vector.broadcast %75 : vector<1x8xf32> to vector<384x8xf32>
    %77 = arith.addf %74, %76 : vector<384x8xf32>
    %78 = vector.shape_cast %77 : vector<384x8xf32> to vector<16x24x8xf32>
    %79 = vector.extract_strided_slice %78 {offsets = [0, 0, 0], sizes = [16, 16, 8], strides = [1, 1, 1]} : vector<16x24x8xf32> to vector<16x16x8xf32>
    %c0_64 = arith.constant 0 : index
    %c0_65 = arith.constant 0 : index
    %c0_66 = arith.constant 0 : index
    %c0_67 = arith.constant 0 : index
    %80 = vector.load %arg7[%c0_64, %c0_65, %c0_66, %c0_67] : memref<1x16x16x8xf32, #tpu.memory_space<vmem>>, vector<1x16x16x8xf32>
    %81 = vector.shape_cast %80 : vector<1x16x16x8xf32> to vector<16x16x8xf32>
    %82 = vector.shape_cast %79 : vector<16x16x8xf32> to vector<1x16x16x8xf32>
    tpu.vector_store %arg7[%c0_64, %c0_65, %c0_66, %c0_67], %82 {strides = array<i32>} : memref<1x16x16x8xf32, #tpu.memory_space<vmem>>, vector<1x16x16x8xf32>,
    return
  }
  func.func @transform_0(%arg0: i32, %arg1: i32) -> (i32, i32, i32, i32) {
    %c0_i32 = arith.constant 0 : i32
    %c0_i32_0 = arith.constant 0 : i32
    %c0_i32_1 = arith.constant 0 : i32
    %c0_i32_2 = arith.constant 0 : i32
    return %arg0, %c0_i32, %c0_i32_0, %c0_i32_1 : i32, i32, i32, i32
  }
  func.func @transform_1(%arg0: i32, %arg1: i32) -> (i32, i32, i32) {
    %c0_i32 = arith.constant 0 : i32
    %c0_i32_0 = arith.constant 0 : i32
    %c0_i32_1 = arith.constant 0 : i32
    %c0_i32_2 = arith.constant 0 : i32
    return %c0_i32, %c0_i32_0, %c0_i32_1 : i32, i32, i32
  }
  func.func @transform_2(%arg0: i32, %arg1: i32) -> (i32, i32) {
    %c0_i32 = arith.constant 0 : i32
    %c0_i32_0 = arith.constant 0 : i32
    %c0_i32_1 = arith.constant 0 : i32
    return %c0_i32, %c0_i32_0 : i32, i32
  }
  func.func @transform_3(%arg0: i32, %arg1: i32) -> (i32, i32, i32) {
    %c0_i32 = arith.constant 0 : i32
    %c0_i32_0 = arith.constant 0 : i32
    %c0_i32_1 = arith.constant 0 : i32
    %c0_i32_2 = arith.constant 0 : i32
    return %c0_i32, %c0_i32_0, %c0_i32_1 : i32, i32, i32
  }
  func.func @transform_4(%arg0: i32, %arg1: i32) -> (i32, i32) {
    %c0_i32 = arith.constant 0 : i32
    %c0_i32_0 = arith.constant 0 : i32
    %c0_i32_1 = arith.constant 0 : i32
    return %c0_i32, %c0_i32_0 : i32, i32
  }
  func.func @transform_5(%arg0: i32, %arg1: i32) -> (i32, i32, i32, i32) {
    %c0_i32 = arith.constant 0 : i32
    %c0_i32_0 = arith.constant 0 : i32
    %c0_i32_1 = arith.constant 0 : i32
    return %arg0, %arg1, %c0_i32, %c0_i32_0 : i32, i32, i32, i32
  }
}

</mosaic_0001>

<llo_original>
// kernel: tpu_custom_call.1
$region0: #{tpu_custom_call.1}
  #allocation0 [shape = 'u32[]', space=smem, size = 0x4, offset = 0x4, fixed_abs, tag = 'smem constant byte address 0x4 - core index']
  #allocation1 [shape = 'u32[144,128]{1,0:T(1,128)}', space=vmem, size = 0x12000, scoped, tag = 'internal scratch']
  #allocation2 [shape = 'f32[20,24,4]{2,1,0:T(8,128)}', space=vmem, size = 0x3c000, scoped, tag = 'scratch operand']
  #allocation3 [shape = 'f32[18,24,8]{2,1,0:T(8,128)}', space=vmem, size = 0x36000, scoped, tag = 'scratch operand']
  %s0 = inlined_call_operand.vmem [shape: f32[2,16,16,4], index: 0, kind: input, shape index: {}]
  %s1 = inlined_call_operand.vmem [shape: bf16[3,12,8], index: 1, kind: input, shape index: {}]
  %s2 = inlined_call_operand.vmem [shape: f32[1,8], index: 2, kind: input, shape index: {}]
  %s3 = inlined_call_operand.vmem [shape: bf16[3,24,8], index: 3, kind: input, shape index: {}]
  %s4 = inlined_call_operand.vmem [shape: f32[1,8], index: 4, kind: input, shape index: {}]
  %s5 = inlined_call_operand.vmem [shape: f32[2,16,16,8], index: 5, kind: output, shape index: {}]
  %s6 = sld [smem:[#allocation0]]
  $region53: #{tpu_custom_call.1} parent=0
    _
  %s8 = ssub.s32 1, %s6
  %s9 = scalar_select 0, %s8, %s6
  loop: start=0, step=1, limit=4
  $region2: #{tpu_custom_call.1} parent=0 // loop_pre_header
    _
  $region3: #{tpu_custom_call.1} parent=0 // loop_header
    %s11 = sphi 0, %s15
    %p12 = scmp.ge.s32.totalorder %s11, 4
    %s18 = sphi 0, %s30
    %s19 = sphi 0, %s26
    %s20 = sphi 0, %s18
    %s21 = sphi 0, %s19
    %s22 = sphi 0, %s20
    %s23 = sphi 0, %s21
    %s33 = sphi 0, %s35
    %s36 = sphi 0, %s33
    %s37 = sphi 0, %s36
    %s53 = sphi 0, %s37
    %s57 = sphi 0, %s57
    %s59 = sphi 0, %s57
    %s60 = sphi 0, %s59
    %s74 = sphi 0, %s60
    %s78 = sphi 0, %s78
    %s80 = sphi 0, %s78
    %s81 = sphi 0, %s80
    %s95 = sphi 0, %s81
    %s99 = sphi 0, %s99
    %s101 = sphi 0, %s99
    %s102 = sphi 0, %s101
    %s116 = sphi 0, %s102
    %s120 = sphi 0, %s120
    %s122 = sphi 0, %s120
    %s123 = sphi 0, %s122
    %s137 = sphi 0, %s123
    %s145 = sphi 0, %s147
    %s148 = sphi 0, %s145
    %s149 = sphi 0, %s148
    %s165 = sphi 0, %s149
  $region4: #{tpu_custom_call.1} parent=0 // loop_header_branch
    %14 = sbr.rel (%p12) target = $region8
  $region5: #{tpu_custom_call.1} parent=0 // loop_body
    %s16 = ssub.s32 %s11, 1
    %s17 = ssub.s32 %s11, 2
    %s24 = sadd.s32 1, %s19
    %p25 = scmp.ge.s32.totalorder %s24, 1
    %s26 = scalar_select %p25, 0, %s24
    %s27 = sadd.s32 1, %s18
    %s28 = scalar_select %p25, %s27, %s18
    %p29 = scmp.ge.s32.totalorder %s28, 2
    %s30 = scalar_select %p29, 0, %s28
    %s31 = ssub.s32 %s18, %s30
    %p32 = scmp.eq.s32.totalorder %s31, 0
    %s34 = sadd.s32 %s33, 1
    %s35 = scalar_select %p32, %s33, %s34
    %p38 = pneg %p32
    %p39 = scmp.eq.s32.totalorder %s11, 1
    %p40 = por %p38, %p39
    %p41 = scmp.ne.s32.totalorder %s33, %s36
    %p42 = scmp.eq.s32.totalorder %s11, 0
    %p43 = por %p41, %p42
    %p44 = scmp.ne.s32.totalorder %s33, %s36
    %p45 = scmp.eq.s32.totalorder %s16, 1
    %p46 = por %p44, %p45
    %p47 = scmp.ne.s32.totalorder %s36, %s37
    %p48 = scmp.eq.s32.totalorder %s16, 0
    %p49 = por %p47, %p48
    %p50 = scmp.ne.s32.totalorder %s36, %s37
    %p51 = scmp.eq.s32.totalorder %s17, 1
    %p52 = por %p50, %p51
    %p54 = scmp.ne.s32.totalorder %s37, %s53
    %p55 = scmp.eq.s32.totalorder %s17, 0
    %p56 = por %p54, %p55
    %s58 = sadd.s32 %s57, 1
    %p61 = scmp.eq.s32.totalorder %s11, 1
    %p62 = scmp.ne.s32.totalorder %s57, %s59
    %p63 = scmp.eq.s32.totalorder %s11, 0
    %p64 = por %p62, %p63
    %p65 = scmp.ne.s32.totalorder %s57, %s59
    %p66 = scmp.eq.s32.totalorder %s16, 1
    %p67 = por %p65, %p66
    %p68 = scmp.ne.s32.totalorder %s59, %s60
    %p69 = scmp.eq.s32.totalorder %s16, 0
    %p70 = por %p68, %p69
    %p71 = scmp.ne.s32.totalorder %s59, %s60
    %p72 = scmp.eq.s32.totalorder %s17, 1
    %p73 = por %p71, %p72
    %p75 = scmp.ne.s32.totalorder %s60, %s74
    %p76 = scmp.eq.s32.totalorder %s17, 0
    %p77 = por %p75, %p76
    %s79 = sadd.s32 %s78, 1
    %p82 = scmp.eq.s32.totalorder %s11, 1
    %p83 = scmp.ne.s32.totalorder %s78, %s80
    %p84 = scmp.eq.s32.totalorder %s11, 0
    %p85 = por %p83, %p84
    %p86 = scmp.ne.s32.totalorder %s78, %s80
    %p87 = scmp.eq.s32.totalorder %s16, 1
    %p88 = por %p86, %p87
    %p89 = scmp.ne.s32.totalorder %s80, %s81
    %p90 = scmp.eq.s32.totalorder %s16, 0
    %p91 = por %p89, %p90
    %p92 = scmp.ne.s32.totalorder %s80, %s81
    %p93 = scmp.eq.s32.totalorder %s17, 1
    %p94 = por %p92, %p93
    %p96 = scmp.ne.s32.totalorder %s81, %s95
    %p97 = scmp.eq.s32.totalorder %s17, 0
    %p98 = por %p96, %p97
    %s100 = sadd.s32 %s99, 1
    %p103 = scmp.eq.s32.totalorder %s11, 1
    %p104 = scmp.ne.s32.totalorder %s99, %s101
    %p105 = scmp.eq.s32.totalorder %s11, 0
    %p106 = por %p104, %p105
    %p107 = scmp.ne.s32.totalorder %s99, %s101
    %p108 = scmp.eq.s32.totalorder %s16, 1
    %p109 = por %p107, %p108
    %p110 = scmp.ne.s32.totalorder %s101, %s102
    %p111 = scmp.eq.s32.totalorder %s16, 0
    %p112 = por %p110, %p111
    %p113 = scmp.ne.s32.totalorder %s101, %s102
    %p114 = scmp.eq.s32.totalorder %s17, 1
    %p115 = por %p113, %p114
    %p117 = scmp.ne.s32.totalorder %s102, %s116
    %p118 = scmp.eq.s32.totalorder %s17, 0
    %p119 = por %p117, %p118
    %s121 = sadd.s32 %s120, 1
    %p124 = scmp.eq.s32.totalorder %s11, 1
    %p125 = scmp.ne.s32.totalorder %s120, %s122
    %p126 = scmp.eq.s32.totalorder %s11, 0
    %p127 = por %p125, %p126
    %p128 = scmp.ne.s32.totalorder %s120, %s122
    %p129 = scmp.eq.s32.totalorder %s16, 1
    %p130 = por %p128, %p129
    %p131 = scmp.ne.s32.totalorder %s122, %s123
    %p132 = scmp.eq.s32.totalorder %s16, 0
    %p133 = por %p131, %p132
    %p134 = scmp.ne.s32.totalorder %s122, %s123
    %p135 = scmp.eq.s32.totalorder %s17, 1
    %p136 = por %p134, %p135
    %p138 = scmp.ne.s32.totalorder %s123, %s137
    %p139 = scmp.eq.s32.totalorder %s17, 0
    %p140 = por %p138, %p139
    %s141 = ssub.s32 %s18, %s30
    %s142 = ssub.s32 %s19, %s26
    %s143 = sor.u32 %s141, %s142
    %p144 = scmp.eq.s32.totalorder %s143, 0
    %s146 = sadd.s32 %s145, 1
    %s147 = scalar_select %p144, %s145, %s146
    %p150 = pneg %p144
    %p151 = scmp.eq.s32.totalorder %s11, 1
    %p152 = por %p150, %p151
    %p153 = scmp.ne.s32.totalorder %s145, %s148
    %p154 = scmp.eq.s32.totalorder %s11, 0
    %p155 = por %p153, %p154
    %p156 = scmp.ne.s32.totalorder %s145, %s148
    %p157 = scmp.eq.s32.totalorder %s16, 1
    %p158 = por %p156, %p157
    %p159 = scmp.ne.s32.totalorder %s148, %s149
    %p160 = scmp.eq.s32.totalorder %s16, 0
    %p161 = por %p159, %p160
    %p162 = scmp.ne.s32.totalorder %s148, %s149
    %p163 = scmp.eq.s32.totalorder %s17, 1
    %p164 = por %p162, %p163
    %p166 = scmp.ne.s32.totalorder %s149, %s165
    %p167 = scmp.eq.s32.totalorder %s17, 0
    %p168 = por %p166, %p167
    %p169 = scmp.le.s32.totalorder 1, %s11
    %p170 = scmp.lt.s32.totalorder %s11, 3
    %p171 = pnand %p169, %p170
    %p172 = pneg %p171
    // Predicated region
    $region9: #{tpu_custom_call.1} parent=5 // pred_check
      _
    $region10: #{tpu_custom_call.1} parent=5 // pred_check_branch
      %174 = sbr.rel (%p171) target = $region12
    $region11: #{tpu_custom_call.1} parent=5 // pred_region
      %s175 = ssub.s32 %s11, 1
      // Predicated region
      $region13: #{tpu_custom_call.1} parent=11 // pred_check
        %p176 = pneg %p70
      $region14: #{tpu_custom_call.1} parent=11 // pred_check_branch
        %178 = sbr.rel (%p176) target = $region16
      $region15: #{tpu_custom_call.1} parent=11 // pred_region
        _
      $region16: #{tpu_custom_call.1} parent=11 // pred_fallthru
        _
      // Predicated region
      $region17: #{tpu_custom_call.1} parent=11 // pred_check
        %p179 = pneg %p91
      $region18: #{tpu_custom_call.1} parent=11 // pred_check_branch
        %181 = sbr.rel (%p179) target = $region20
      $region19: #{tpu_custom_call.1} parent=11 // pred_region
        _
      $region20: #{tpu_custom_call.1} parent=11 // pred_fallthru
        _
      // Predicated region
      $region21: #{tpu_custom_call.1} parent=11 // pred_check
        %p182 = pneg %p112
      $region22: #{tpu_custom_call.1} parent=11 // pred_check_branch
        %184 = sbr.rel (%p182) target = $region24
      $region23: #{tpu_custom_call.1} parent=11 // pred_region
        _
      $region24: #{tpu_custom_call.1} parent=11 // pred_fallthru
        _
      // Predicated region
      $region25: #{tpu_custom_call.1} parent=11 // pred_check
        %p185 = pneg %p133
      $region26: #{tpu_custom_call.1} parent=11 // pred_check_branch
        %187 = sbr.rel (%p185) target = $region28
      $region27: #{tpu_custom_call.1} parent=11 // pred_region
        _
      $region28: #{tpu_custom_call.1} parent=11 // pred_fallthru
        _
    $region12: #{tpu_custom_call.1} parent=5 // pred_fallthru
      _
    %p188 = scmp.lt.s32.totalorder %s11, 2
    // Predicated region
    $region29: #{tpu_custom_call.1} parent=5 // pred_check
      %p189 = pneg %p188
    $region30: #{tpu_custom_call.1} parent=5 // pred_check_branch
      %191 = sbr.rel (%p189) target = $region32
    $region31: #{tpu_custom_call.1} parent=5 // pred_region
      // Predicated region
      $region33: #{tpu_custom_call.1} parent=31 // pred_check
        %p192 = pneg %p43
      $region34: #{tpu_custom_call.1} parent=31 // pred_check_branch
        %194 = sbr.rel (%p192) target = $region36
      $region35: #{tpu_custom_call.1} parent=31 // pred_region
        %p195 = scmp.lt.s32.totalorder %s18, 1
        %s196 = scalar_select %p195, %s18, 1
        %s197 = smul.addr %s196, 32
        %s198 = smul.addr %s197, 8
        %s199 = scalar_lea.vmem %s0, %s198
      $region36: #{tpu_custom_call.1} parent=31 // pred_fallthru
        _
    $region32: #{tpu_custom_call.1} parent=5 // pred_fallthru
      _
    %p200 = scmp.le.s32.totalorder 1, %s11
    %p201 = scmp.lt.s32.totalorder %s11, 3
    %p202 = pnand %p200, %p201
    %p203 = pneg %p202
    // Predicated region
    $region37: #{tpu_custom_call.1} parent=5 // pred_check
      _
    $region38: #{tpu_custom_call.1} parent=5 // pred_check_branch
      %205 = sbr.rel (%p202) target = $region40
    $region39: #{tpu_custom_call.1} parent=5 // pred_region
      %s206 = ssub.s32 %s11, 1
      %p207 = scmp.lt.s32.totalorder %s20, 1
      %s208 = scalar_select %p207, %s20, 1
      %s209 = smul.addr %s208, 32
      %s210 = smul.addr %s209, 8
      %s211 = scalar_lea.vmem %s0, %s210
      %p212 = pneg %p49
      %p213 = pneg %p46
      %p214 = pneg %p70
      %p215 = pneg %p67
      %p216 = pneg %p91
      %p217 = pneg %p88
      %p218 = pneg %p112
      %p219 = pneg %p109
      %p220 = pneg %p133
      %p221 = pneg %p130
      %p222 = pneg %p161
      %p223 = pneg %p158
      %s224 = smul.u32 16, %s21
      %p225 = scmp.lt.s32.totalorder %s20, 1
      %s226 = scalar_select %p225, %s20, 1
      %p227 = scmp.lt.s32.totalorder %s224, 15
      %s228 = scalar_select %p227, %s224, 15
      %s229 = smul.addr %s228, 2
      %s230 = smul.addr %s226, 32
      %s231 = sadd.s32 %s229, %s230
      %s232 = smul.addr %s231, 8
      %s233 = scalar_lea.vmem %s5, %s232
      %p234 = scmp.lt.s32.totalorder %s20, 1
      %s235 = scalar_select %p234, %s20, 1
      %s236 = smul.addr %s235, 32
      %s237 = smul.addr %s236, 8
      %s238 = scalar_lea.vmem %s0, %s237
      %s239 = smul.u32 16, %s21
      %p240 = scmp.lt.s32.totalorder %s20, 1
      %s241 = scalar_select %p240, %s20, 1
      %p242 = scmp.lt.s32.totalorder %s239, 15
      %s243 = scalar_select %p242, %s239, 15
      %s244 = smul.addr %s243, 2
      %s245 = smul.addr %s241, 32
      %s246 = sadd.s32 %s244, %s245
      %s247 = smul.addr %s246, 8
      %s248 = scalar_lea.vmem %s5, %s247
      %s249 = smul.u32 16, %s21
      %vm251 = vcmask 31744
      %252 = vst.msk [vmem:[#allocation2] sm:$0xff] %vm251, 0.0
      %253 = vst.msk [vmem:[#allocation2 + $0x8] sm:$0xff] %vm251, 0.0
      %254 = vst.msk [vmem:[#allocation2 + $0x10] sm:$0xff] %vm251, 0.0
      %255 = vst.msk [vmem:[#allocation2 + $0x18] sm:$0xff] %vm251, 0.0
      %256 = vst.msk [vmem:[#allocation2 + $0x20] sm:$0xff] %vm251, 0.0
      %257 = vst.msk [vmem:[#allocation2 + $0x28] sm:$0xff] %vm251, 0.0
      %258 = vst.msk [vmem:[#allocation2 + $0x30] sm:$0xff] %vm251, 0.0
      %259 = vst.msk [vmem:[#allocation2 + $0x38] sm:$0xff] %vm251, 0.0
      %260 = vst.msk [vmem:[#allocation2 + $0x40] sm:$0xff] %vm251, 0.0
      %261 = vst.msk [vmem:[#allocation2 + $0x48] sm:$0xff] %vm251, 0.0
      %262 = vst.msk [vmem:[#allocation2 + $0x50] sm:$0xff] %vm251, 0.0
      %263 = vst.msk [vmem:[#allocation2 + $0x58] sm:$0xff] %vm251, 0.0
      %264 = vst.msk [vmem:[#allocation2 + $0x60] sm:$0xff] %vm251, 0.0
      %265 = vst.msk [vmem:[#allocation2 + $0x68] sm:$0xff] %vm251, 0.0
      %266 = vst.msk [vmem:[#allocation2 + $0x70] sm:$0xff] %vm251, 0.0
      %267 = vst.msk [vmem:[#allocation2 + $0x78] sm:$0xff] %vm251, 0.0
      %268 = vst.msk [vmem:[#allocation2 + $0x80] sm:$0xff] %vm251, 0.0
      %269 = vst.msk [vmem:[#allocation2 + $0x88] sm:$0xff] %vm251, 0.0
      %270 = vst.msk [vmem:[#allocation2 + $0x90] sm:$0xff] %vm251, 0.0
      %271 = vst.msk [vmem:[#allocation2 + $0x98] sm:$0xff] %vm251, 0.0
      %272 = vst.msk [vmem:[#allocation2 + $0xa0] sm:$0xff] %vm251, 0.0
      %273 = vst.msk [vmem:[#allocation2 + $0xa8] sm:$0xff] %vm251, 0.0
      %274 = vst.msk [vmem:[#allocation2 + $0xb0] sm:$0xff] %vm251, 0.0
      %275 = vst.msk [vmem:[#allocation2 + $0xb8] sm:$0xff] %vm251, 0.0
      %276 = vst.msk [vmem:[#allocation2 + $0xc0] sm:$0xff] %vm251, 0.0
      %277 = vst.msk [vmem:[#allocation2 + $0xc8] sm:$0xff] %vm251, 0.0
      %278 = vst.msk [vmem:[#allocation2 + $0xd0] sm:$0xff] %vm251, 0.0
      %279 = vst.msk [vmem:[#allocation2 + $0xd8] sm:$0xff] %vm251, 0.0
      %280 = vst.msk [vmem:[#allocation2 + $0xe0] sm:$0xff] %vm251, 0.0
      %281 = vst.msk [vmem:[#allocation2 + $0xe8] sm:$0xff] %vm251, 0.0
      %282 = vst.msk [vmem:[#allocation2 + $0xf0] sm:$0xff] %vm251, 0.0
      %283 = vst.msk [vmem:[#allocation2 + $0xf8] sm:$0xff] %vm251, 0.0
      %284 = vst.msk [vmem:[#allocation2 + $0x100] sm:$0xff] %vm251, 0.0
      %285 = vst.msk [vmem:[#allocation2 + $0x108] sm:$0xff] %vm251, 0.0
      %286 = vst.msk [vmem:[#allocation2 + $0x110] sm:$0xff] %vm251, 0.0
      %287 = vst.msk [vmem:[#allocation2 + $0x118] sm:$0xff] %vm251, 0.0
      %288 = vst.msk [vmem:[#allocation2 + $0x120] sm:$0xff] %vm251, 0.0
      %289 = vst.msk [vmem:[#allocation2 + $0x128] sm:$0xff] %vm251, 0.0
      %290 = vst.msk [vmem:[#allocation2 + $0x130] sm:$0xff] %vm251, 0.0
      %291 = vst.msk [vmem:[#allocation2 + $0x138] sm:$0xff] %vm251, 0.0
      %292 = vst.msk [vmem:[#allocation2 + $0x140] sm:$0xff] %vm251, 0.0
      %293 = vst.msk [vmem:[#allocation2 + $0x148] sm:$0xff] %vm251, 0.0
      %294 = vst.msk [vmem:[#allocation2 + $0x150] sm:$0xff] %vm251, 0.0
      %295 = vst.msk [vmem:[#allocation2 + $0x158] sm:$0xff] %vm251, 0.0
      %296 = vst.msk [vmem:[#allocation2 + $0x160] sm:$0xff] %vm251, 0.0
      %297 = vst.msk [vmem:[#allocation2 + $0x168] sm:$0xff] %vm251, 0.0
      %298 = vst.msk [vmem:[#allocation2 + $0x170] sm:$0xff] %vm251, 0.0
      %299 = vst.msk [vmem:[#allocation2 + $0x178] sm:$0xff] %vm251, 0.0
      %300 = vst.msk [vmem:[#allocation2 + $0x180] sm:$0xff] %vm251, 0.0
      %301 = vst.msk [vmem:[#allocation2 + $0x188] sm:$0xff] %vm251, 0.0
      %302 = vst.msk [vmem:[#allocation2 + $0x190] sm:$0xff] %vm251, 0.0
      %303 = vst.msk [vmem:[#allocation2 + $0x198] sm:$0xff] %vm251, 0.0
      %304 = vst.msk [vmem:[#allocation2 + $0x1a0] sm:$0xff] %vm251, 0.0
      %305 = vst.msk [vmem:[#allocation2 + $0x1a8] sm:$0xff] %vm251, 0.0
      %306 = vst.msk [vmem:[#allocation2 + $0x1b0] sm:$0xff] %vm251, 0.0
      %307 = vst.msk [vmem:[#allocation2 + $0x1b8] sm:$0xff] %vm251, 0.0
      %308 = vst.msk [vmem:[#allocation2 + $0x1c0] sm:$0xff] %vm251, 0.0
      %309 = vst.msk [vmem:[#allocation2 + $0x1c8] sm:$0xff] %vm251, 0.0
      %310 = vst.msk [vmem:[#allocation2 + $0x1d0] sm:$0xff] %vm251, 0.0
      %311 = vst.msk [vmem:[#allocation2 + $0x1d8] sm:$0xff] %vm251, 0.0
      %v312 = vld [vmem:[%s238] sm:$0xff]
      %v313 = vld [vmem:[%s238 + $0x8] sm:$0xff]
      %v314 = vld [vmem:[%s238 + $0x10] sm:$0xff]
      %v315 = vld [vmem:[%s238 + $0x18] sm:$0xff]
      %v316 = vld [vmem:[%s238 + $0x20] sm:$0xff]
      %v317 = vld [vmem:[%s238 + $0x28] sm:$0xff]
      %v318 = vld [vmem:[%s238 + $0x30] sm:$0xff]
      %v319 = vld [vmem:[%s238 + $0x38] sm:$0xff]
      %v320 = vld [vmem:[%s238 + $0x40] sm:$0xff]
      %v321 = vld [vmem:[%s238 + $0x48] sm:$0xff]
      %v322 = vld [vmem:[%s238 + $0x50] sm:$0xff]
      %v323 = vld [vmem:[%s238 + $0x58] sm:$0xff]
      %v324 = vld [vmem:[%s238 + $0x60] sm:$0xff]
      %v325 = vld [vmem:[%s238 + $0x68] sm:$0xff]
      %v326 = vld [vmem:[%s238 + $0x70] sm:$0xff]
      %v327 = vld [vmem:[%s238 + $0x78] sm:$0xff]
      %v328 = vld [vmem:[%s238 + $0x80] sm:$0xff]
      %v329 = vld [vmem:[%s238 + $0x88] sm:$0xff]
      %v330 = vld [vmem:[%s238 + $0x90] sm:$0xff]
      %v331 = vld [vmem:[%s238 + $0x98] sm:$0xff]
      %v332 = vld [vmem:[%s238 + $0xa0] sm:$0xff]
      %v333 = vld [vmem:[%s238 + $0xa8] sm:$0xff]
      %v334 = vld [vmem:[%s238 + $0xb0] sm:$0xff]
      %v335 = vld [vmem:[%s238 + $0xb8] sm:$0xff]
      %v336 = vld [vmem:[%s238 + $0xc0] sm:$0xff]
      %v337 = vld [vmem:[%s238 + $0xc8] sm:$0xff]
      %v338 = vld [vmem:[%s238 + $0xd0] sm:$0xff]
      %v339 = vld [vmem:[%s238 + $0xd8] sm:$0xff]
      %v340 = vld [vmem:[%s238 + $0xe0] sm:$0xff]
      %v341 = vld [vmem:[%s238 + $0xe8] sm:$0xff]
      %v342 = vld [vmem:[%s238 + $0xf0] sm:$0xff]
      %v343 = vld [vmem:[%s238 + $0xf8] sm:$0xff]
      %s344 = scalar_lea.vmem [#allocation2], 48
      %345 = vst.msk [vmem:[%s344 + $0x1] sm:$0xff] %vm251, %v312
      %346 = vst.msk [vmem:[%s344 + $0x9] sm:$0xff] %vm251, %v313
      %347 = vst.msk [vmem:[%s344 + $0x19] sm:$0xff] %vm251, %v314
      %348 = vst.msk [vmem:[%s344 + $0x21] sm:$0xff] %vm251, %v315
      %349 = vst.msk [vmem:[%s344 + $0x31] sm:$0xff] %vm251, %v316
      %350 = vst.msk [vmem:[%s344 + $0x39] sm:$0xff] %vm251, %v317
      %351 = vst.msk [vmem:[%s344 + $0x49] sm:$0xff] %vm251, %v318
      %352 = vst.msk [vmem:[%s344 + $0x51] sm:$0xff] %vm251, %v319
      %353 = vst.msk [vmem:[%s344 + $0x61] sm:$0xff] %vm251, %v320
      %354 = vst.msk [vmem:[%s344 + $0x69] sm:$0xff] %vm251, %v321
      %355 = vst.msk [vmem:[%s344 + $0x79] sm:$0xff] %vm251, %v322
      %356 = vst.msk [vmem:[%s344 + $0x81] sm:$0xff] %vm251, %v323
      %357 = vst.msk [vmem:[%s344 + $0x91] sm:$0xff] %vm251, %v324
      %358 = vst.msk [vmem:[%s344 + $0x99] sm:$0xff] %vm251, %v325
      %359 = vst.msk [vmem:[%s344 + $0xa9] sm:$0xff] %vm251, %v326
      %360 = vst.msk [vmem:[%s344 + $0xb1] sm:$0xff] %vm251, %v327
      %361 = vst.msk [vmem:[%s344 + $0xc1] sm:$0xff] %vm251, %v328
      %362 = vst.msk [vmem:[%s344 + $0xc9] sm:$0xff] %vm251, %v329
      %363 = vst.msk [vmem:[%s344 + $0xd9] sm:$0xff] %vm251, %v330
      %364 = vst.msk [vmem:[%s344 + $0xe1] sm:$0xff] %vm251, %v331
      %365 = vst.msk [vmem:[%s344 + $0xf1] sm:$0xff] %vm251, %v332
      %366 = vst.msk [vmem:[%s344 + $0xf9] sm:$0xff] %vm251, %v333
      %367 = vst.msk [vmem:[%s344 + $0x109] sm:$0xff] %vm251, %v334
      %368 = vst.msk [vmem:[%s344 + $0x111] sm:$0xff] %vm251, %v335
      %369 = vst.msk [vmem:[%s344 + $0x121] sm:$0xff] %vm251, %v336
      %370 = vst.msk [vmem:[%s344 + $0x129] sm:$0xff] %vm251, %v337
      %371 = vst.msk [vmem:[%s344 + $0x139] sm:$0xff] %vm251, %v338
      %372 = vst.msk [vmem:[%s344 + $0x141] sm:$0xff] %vm251, %v339
      %373 = vst.msk [vmem:[%s344 + $0x151] sm:$0xff] %vm251, %v340
      %374 = vst.msk [vmem:[%s344 + $0x159] sm:$0xff] %vm251, %v341
      %375 = vst.msk [vmem:[%s344 + $0x169] sm:$0xff] %vm251, %v342
      %376 = vst.msk [vmem:[%s344 + $0x171] sm:$0xff] %vm251, %v343
      %v377 = vld [vmem:[#allocation2] sm:$0xff]
      %v378 = vld [vmem:[#allocation2 + $0x8] sm:$0xff]
      %v379 = vld [vmem:[#allocation2 + $0x10] sm:$0xff]
      %v380 = vld [vmem:[#allocation2 + $0x18] sm:$0xff]
      %v381 = vld [vmem:[#allocation2 + $0x20] sm:$0xff]
      %v382 = vld [vmem:[#allocation2 + $0x28] sm:$0xff]
      %v383 = vld [vmem:[#allocation2 + $0x30] sm:$0xff]
      %v384 = vld [vmem:[#allocation2 + $0x38] sm:$0xff]
      %v385 = vld [vmem:[#allocation2 + $0x40] sm:$0xff]
      %v386 = vld [vmem:[#allocation2 + $0x48] sm:$0xff]
      %v387 = vld [vmem:[#allocation2 + $0x50] sm:$0xff]
      %v388 = vld [vmem:[#allocation2 + $0x58] sm:$0xff]
      %v389 = vld [vmem:[#allocation2 + $0x60] sm:$0xff]
      %v390 = vld [vmem:[#allocation2 + $0x68] sm:$0xff]
      %v391 = vld [vmem:[#allocation2 + $0x70] sm:$0xff]
      %v392 = vld [vmem:[#allocation2 + $0x78] sm:$0xff]
      %v393 = vld [vmem:[#allocation2 + $0x80] sm:$0xff]
      %v394 = vld [vmem:[#allocation2 + $0x88] sm:$0xff]
      %v395 = vld [vmem:[#allocation2 + $0x90] sm:$0xff]
      %v396 = vld [vmem:[#allocation2 + $0x98] sm:$0xff]
      %v397 = vld [vmem:[#allocation2 + $0xa0] sm:$0xff]
      %v398 = vld [vmem:[#allocation2 + $0xa8] sm:$0xff]
      %v399 = vld [vmem:[#allocation2 + $0xb0] sm:$0xff]
      %v400 = vld [vmem:[#allocation2 + $0xb8] sm:$0xff]
      %v401 = vld [vmem:[#allocation2 + $0xc0] sm:$0xff]
      %v402 = vld [vmem:[#allocation2 + $0xc8] sm:$0xff]
      %v403 = vld [vmem:[#allocation2 + $0xd0] sm:$0xff]
      %v404 = vld [vmem:[#allocation2 + $0xd8] sm:$0xff]
      %v405 = vld [vmem:[#allocation2 + $0xe0] sm:$0xff]
      %v406 = vld [vmem:[#allocation2 + $0xe8] sm:$0xff]
      %v407 = vld [vmem:[#allocation2 + $0xf0] sm:$0xff]
      %v408 = vld [vmem:[#allocation2 + $0xf8] sm:$0xff]
      %v409 = vld [vmem:[#allocation2 + $0x100] sm:$0xff]
      %v410 = vld [vmem:[#allocation2 + $0x108] sm:$0xff]
      %v411 = vld [vmem:[#allocation2 + $0x110] sm:$0xff]
      %v412 = vld [vmem:[#allocation2 + $0x118] sm:$0xff]
      %v413 = vld [vmem:[#allocation2 + $0x120] sm:$0xff]
      %v414 = vld [vmem:[#allocation2 + $0x128] sm:$0xff]
      %v415 = vld [vmem:[#allocation2 + $0x130] sm:$0xff]
      %v416 = vld [vmem:[#allocation2 + $0x138] sm:$0xff]
      %v417 = vld [vmem:[#allocation2 + $0x140] sm:$0xff]
      %v418 = vld [vmem:[#allocation2 + $0x148] sm:$0xff]
      %v419 = vld [vmem:[#allocation2 + $0x150] sm:$0xff]
      %v420 = vld [vmem:[#allocation2 + $0x158] sm:$0xff]
      %v421 = vld [vmem:[#allocation2 + $0x160] sm:$0xff]
      %v422 = vld [vmem:[#allocation2 + $0x168] sm:$0xff]
      %v423 = vld [vmem:[#allocation2 + $0x170] sm:$0xff]
      %v424 = vld [vmem:[#allocation2 + $0x178] sm:$0xff]
      %v425 = vld [vmem:[#allocation2 + $0x180] sm:$0xff]
      %v426 = vld [vmem:[#allocation2 + $0x188] sm:$0xff]
      %v427 = vld [vmem:[#allocation2 + $0x190] sm:$0xff]
      %v428 = vld [vmem:[#allocation2 + $0x198] sm:$0xff]
      %v429 = vld [vmem:[#allocation2 + $0x1a0] sm:$0xff]
      %v430 = vld [vmem:[#allocation2 + $0x1a8] sm:$0xff]
      %s431 = scalar_lea.vmem [#allocation2], 24
      %v432 = vld [vmem:[%s431] sm:$0xff]
      %v433 = vld [vmem:[%s431 + $0x8] sm:$0xff]
      %v434 = vld [vmem:[%s431 + $0x10] sm:$0xff]
      %v435 = vld [vmem:[%s431 + $0x18] sm:$0xff]
      %v436 = vld [vmem:[%s431 + $0x20] sm:$0xff]
      %v437 = vld [vmem:[%s431 + $0x28] sm:$0xff]
      %v438 = vld [vmem:[%s431 + $0x30] sm:$0xff]
      %v439 = vld [vmem:[%s431 + $0x38] sm:$0xff]
      %v440 = vld [vmem:[%s431 + $0x40] sm:$0xff]
      %v441 = vld [vmem:[%s431 + $0x48] sm:$0xff]
      %v442 = vld [vmem:[%s431 + $0x50] sm:$0xff]
      %v443 = vld [vmem:[%s431 + $0x58] sm:$0xff]
      %v444 = vld [vmem:[%s431 + $0x60] sm:$0xff]
      %v445 = vld [vmem:[%s431 + $0x68] sm:$0xff]
      %v446 = vld [vmem:[%s431 + $0x70] sm:$0xff]
      %v447 = vld [vmem:[%s431 + $0x78] sm:$0xff]
      %v448 = vld [vmem:[%s431 + $0x80] sm:$0xff]
      %v449 = vld [vmem:[%s431 + $0x88] sm:$0xff]
      %v450 = vld [vmem:[%s431 + $0x90] sm:$0xff]
      %v451 = vld [vmem:[%s431 + $0x98] sm:$0xff]
      %v452 = vld [vmem:[%s431 + $0xa0] sm:$0xff]
      %v453 = vld [vmem:[%s431 + $0xa8] sm:$0xff]
      %v454 = vld [vmem:[%s431 + $0xb0] sm:$0xff]
      %v455 = vld [vmem:[%s431 + $0xb8] sm:$0xff]
      %v456 = vld [vmem:[%s431 + $0xc0] sm:$0xff]
      %v457 = vld [vmem:[%s431 + $0xc8] sm:$0xff]
      %v458 = vld [vmem:[%s431 + $0xd0] sm:$0xff]
      %v459 = vld [vmem:[%s431 + $0xd8] sm:$0xff]
      %v460 = vld [vmem:[%s431 + $0xe0] sm:$0xff]
      %v461 = vld [vmem:[%s431 + $0xe8] sm:$0xff]
      %v462 = vld [vmem:[%s431 + $0xf0] sm:$0xff]
      %v463 = vld [vmem:[%s431 + $0xf8] sm:$0xff]
      %v464 = vld [vmem:[%s431 + $0x100] sm:$0xff]
      %v465 = vld [vmem:[%s431 + $0x108] sm:$0xff]
      %v466 = vld [vmem:[%s431 + $0x110] sm:$0xff]
      %v467 = vld [vmem:[%s431 + $0x118] sm:$0xff]
      %v468 = vld [vmem:[%s431 + $0x120] sm:$0xff]
      %v469 = vld [vmem:[%s431 + $0x128] sm:$0xff]
      %v470 = vld [vmem:[%s431 + $0x130] sm:$0xff]
      %v471 = vld [vmem:[%s431 + $0x138] sm:$0xff]
      %v472 = vld [vmem:[%s431 + $0x140] sm:$0xff]
      %v473 = vld [vmem:[%s431 + $0x148] sm:$0xff]
      %v474 = vld [vmem:[%s431 + $0x150] sm:$0xff]
      %v475 = vld [vmem:[%s431 + $0x158] sm:$0xff]
      %v476 = vld [vmem:[%s431 + $0x160] sm:$0xff]
      %v477 = vld [vmem:[%s431 + $0x168] sm:$0xff]
      %v478 = vld [vmem:[%s431 + $0x170] sm:$0xff]
      %v479 = vld [vmem:[%s431 + $0x178] sm:$0xff]
      %v480 = vld [vmem:[%s431 + $0x180] sm:$0xff]
      %v481 = vld [vmem:[%s431 + $0x188] sm:$0xff]
      %v482 = vld [vmem:[%s431 + $0x190] sm:$0xff]
      %v483 = vld [vmem:[%s431 + $0x198] sm:$0xff]
      %v484 = vld [vmem:[%s431 + $0x1a0] sm:$0xff]
      %v485 = vld [vmem:[%s431 + $0x1a8] sm:$0xff]
      %v486 = vld [vmem:[%s344] sm:$0xff]
      %v487 = vld [vmem:[%s344 + $0x8] sm:$0xff]
      %v488 = vld [vmem:[%s344 + $0x10] sm:$0xff]
      %v489 = vld [vmem:[%s344 + $0x18] sm:$0xff]
      %v490 = vld [vmem:[%s344 + $0x20] sm:$0xff]
      %v491 = vld [vmem:[%s344 + $0x28] sm:$0xff]
      %v492 = vld [vmem:[%s344 + $0x30] sm:$0xff]
      %v493 = vld [vmem:[%s344 + $0x38] sm:$0xff]
      %v494 = vld [vmem:[%s344 + $0x40] sm:$0xff]
      %v495 = vld [vmem:[%s344 + $0x48] sm:$0xff]
      %v496 = vld [vmem:[%s344 + $0x50] sm:$0xff]
      %v497 = vld [vmem:[%s344 + $0x58] sm:$0xff]
      %v498 = vld [vmem:[%s344 + $0x60] sm:$0xff]
      %v499 = vld [vmem:[%s344 + $0x68] sm:$0xff]
      %v500 = vld [vmem:[%s344 + $0x70] sm:$0xff]
      %v501 = vld [vmem:[%s344 + $0x78] sm:$0xff]
      %v502 = vld [vmem:[%s344 + $0x80] sm:$0xff]
      %v503 = vld [vmem:[%s344 + $0x88] sm:$0xff]
      %v504 = vld [vmem:[%s344 + $0x90] sm:$0xff]
      %v505 = vld [vmem:[%s344 + $0x98] sm:$0xff]
      %v506 = vld [vmem:[%s344 + $0xa0] sm:$0xff]
      %v507 = vld [vmem:[%s344 + $0xa8] sm:$0xff]
      %v508 = vld [vmem:[%s344 + $0xb0] sm:$0xff]
      %v509 = vld [vmem:[%s344 + $0xb8] sm:$0xff]
      %v510 = vld [vmem:[%s344 + $0xc0] sm:$0xff]
      %v511 = vld [vmem:[%s344 + $0xc8] sm:$0xff]
      %v512 = vld [vmem:[%s344 + $0xd0] sm:$0xff]
      %v513 = vld [vmem:[%s344 + $0xd8] sm:$0xff]
      %v514 = vld [vmem:[%s344 + $0xe0] sm:$0xff]
      %v515 = vld [vmem:[%s344 + $0xe8] sm:$0xff]
      %v516 = vld [vmem:[%s344 + $0xf0] sm:$0xff]
      %v517 = vld [vmem:[%s344 + $0xf8] sm:$0xff]
      %v518 = vld [vmem:[%s344 + $0x100] sm:$0xff]
      %v519 = vld [vmem:[%s344 + $0x108] sm:$0xff]
      %v520 = vld [vmem:[%s344 + $0x110] sm:$0xff]
      %v521 = vld [vmem:[%s344 + $0x118] sm:$0xff]
      %v522 = vld [vmem:[%s344 + $0x120] sm:$0xff]
      %v523 = vld [vmem:[%s344 + $0x128] sm:$0xff]
      %v524 = vld [vmem:[%s344 + $0x130] sm:$0xff]
      %v525 = vld [vmem:[%s344 + $0x138] sm:$0xff]
      %v526 = vld [vmem:[%s344 + $0x140] sm:$0xff]
      %v527 = vld [vmem:[%s344 + $0x148] sm:$0xff]
      %v528 = vld [vmem:[%s344 + $0x150] sm:$0xff]
      %v529 = vld [vmem:[%s344 + $0x158] sm:$0xff]
      %v530 = vld [vmem:[%s344 + $0x160] sm:$0xff]
      %v531 = vld [vmem:[%s344 + $0x168] sm:$0xff]
      %v532 = vld [vmem:[%s344 + $0x170] sm:$0xff]
      %v533 = vld [vmem:[%s344 + $0x178] sm:$0xff]
      %v534 = vld [vmem:[%s344 + $0x180] sm:$0xff]
      %v535 = vld [vmem:[%s344 + $0x188] sm:$0xff]
      %v536 = vld [vmem:[%s344 + $0x190] sm:$0xff]
      %v537 = vld [vmem:[%s344 + $0x198] sm:$0xff]
      %v538 = vld [vmem:[%s344 + $0x1a0] sm:$0xff]
      %v539 = vld [vmem:[%s344 + $0x1a8] sm:$0xff]
      %594 = vrot.lane.b32.xlu0 %v432, 4
      %v595 = vpop.permute.xlu0 %594
      %596 = vrot.lane.b32.xlu0 %v433, 4
      %v597 = vpop.permute.xlu0 %596
      %598 = vrot.lane.b32.xlu0 %v434, 4
      %v599 = vpop.permute.xlu0 %598
      %600 = vrot.lane.b32.xlu0 %v435, 4
      %v601 = vpop.permute.xlu0 %600
      %602 = vrot.lane.b32.xlu0 %v436, 4
      %v603 = vpop.permute.xlu0 %602
      %604 = vrot.lane.b32.xlu0 %v437, 4
      %v605 = vpop.permute.xlu0 %604
      %606 = vrot.lane.b32.xlu0 %v438, 4
      %v607 = vpop.permute.xlu0 %606
      %608 = vrot.lane.b32.xlu0 %v439, 4
      %v609 = vpop.permute.xlu0 %608
      %610 = vrot.lane.b32.xlu0 %v440, 4
      %v611 = vpop.permute.xlu0 %610
      %612 = vrot.lane.b32.xlu0 %v441, 4
      %v613 = vpop.permute.xlu0 %612
      %614 = vrot.lane.b32.xlu0 %v442, 4
      %v615 = vpop.permute.xlu0 %614
      %616 = vrot.lane.b32.xlu0 %v443, 4
      %v617 = vpop.permute.xlu0 %616
      %618 = vrot.lane.b32.xlu0 %v444, 4
      %v619 = vpop.permute.xlu0 %618
      %620 = vrot.lane.b32.xlu0 %v445, 4
      %v621 = vpop.permute.xlu0 %620
      %622 = vrot.lane.b32.xlu0 %v446, 4
      %v623 = vpop.permute.xlu0 %622
      %624 = vrot.lane.b32.xlu0 %v447, 4
      %v625 = vpop.permute.xlu0 %624
      %626 = vrot.lane.b32.xlu0 %v448, 4
      %v627 = vpop.permute.xlu0 %626
      %628 = vrot.lane.b32.xlu0 %v449, 4
      %v629 = vpop.permute.xlu0 %628
      %630 = vrot.lane.b32.xlu0 %v450, 4
      %v631 = vpop.permute.xlu0 %630
      %632 = vrot.lane.b32.xlu0 %v451, 4
      %v633 = vpop.permute.xlu0 %632
      %634 = vrot.lane.b32.xlu0 %v452, 4
      %v635 = vpop.permute.xlu0 %634
      %636 = vrot.lane.b32.xlu0 %v453, 4
      %v637 = vpop.permute.xlu0 %636
      %638 = vrot.lane.b32.xlu0 %v454, 4
      %v639 = vpop.permute.xlu0 %638
      %640 = vrot.lane.b32.xlu0 %v455, 4
      %v641 = vpop.permute.xlu0 %640
      %642 = vrot.lane.b32.xlu0 %v456, 4
      %v643 = vpop.permute.xlu0 %642
      %644 = vrot.lane.b32.xlu0 %v457, 4
      %v645 = vpop.permute.xlu0 %644
      %646 = vrot.lane.b32.xlu0 %v458, 4
      %v647 = vpop.permute.xlu0 %646
      %648 = vrot.lane.b32.xlu0 %v459, 4
      %v649 = vpop.permute.xlu0 %648
      %650 = vrot.lane.b32.xlu0 %v460, 4
      %v651 = vpop.permute.xlu0 %650
      %652 = vrot.lane.b32.xlu0 %v461, 4
      %v653 = vpop.permute.xlu0 %652
      %654 = vrot.lane.b32.xlu0 %v462, 4
      %v655 = vpop.permute.xlu0 %654
      %656 = vrot.lane.b32.xlu0 %v463, 4
      %v657 = vpop.permute.xlu0 %656
      %658 = vrot.lane.b32.xlu0 %v464, 4
      %v659 = vpop.permute.xlu0 %658
      %660 = vrot.lane.b32.xlu0 %v465, 4
      %v661 = vpop.permute.xlu0 %660
      %662 = vrot.lane.b32.xlu0 %v466, 4
      %v663 = vpop.permute.xlu0 %662
      %664 = vrot.lane.b32.xlu0 %v467, 4
      %v665 = vpop.permute.xlu0 %664
      %666 = vrot.lane.b32.xlu0 %v468, 4
      %v667 = vpop.permute.xlu0 %666
      %668 = vrot.lane.b32.xlu0 %v469, 4
      %v669 = vpop.permute.xlu0 %668
      %670 = vrot.lane.b32.xlu0 %v470, 4
      %v671 = vpop.permute.xlu0 %670
      %672 = vrot.lane.b32.xlu0 %v471, 4
      %v673 = vpop.permute.xlu0 %672
      %674 = vrot.lane.b32.xlu0 %v472, 4
      %v675 = vpop.permute.xlu0 %674
      %676 = vrot.lane.b32.xlu0 %v473, 4
      %v677 = vpop.permute.xlu0 %676
      %678 = vrot.lane.b32.xlu0 %v474, 4
      %v679 = vpop.permute.xlu0 %678
      %680 = vrot.lane.b32.xlu0 %v475, 4
      %v681 = vpop.permute.xlu0 %680
      %682 = vrot.lane.b32.xlu0 %v476, 4
      %v683 = vpop.permute.xlu0 %682
      %684 = vrot.lane.b32.xlu0 %v477, 4
      %v685 = vpop.permute.xlu0 %684
      %686 = vrot.lane.b32.xlu0 %v478, 4
      %v687 = vpop.permute.xlu0 %686
      %688 = vrot.lane.b32.xlu0 %v479, 4
      %v689 = vpop.permute.xlu0 %688
      %690 = vrot.lane.b32.xlu0 %v480, 4
      %v691 = vpop.permute.xlu0 %690
      %692 = vrot.lane.b32.xlu0 %v481, 4
      %v693 = vpop.permute.xlu0 %692
      %694 = vrot.lane.b32.xlu0 %v482, 4
      %v695 = vpop.permute.xlu0 %694
      %696 = vrot.lane.b32.xlu0 %v483, 4
      %v697 = vpop.permute.xlu0 %696
      %698 = vrot.lane.b32.xlu0 %v484, 4
      %v699 = vpop.permute.xlu0 %698
      %700 = vrot.lane.b32.xlu0 %v485, 4
      %v701 = vpop.permute.xlu0 %700
      %810 = vrot.lane.b32.xlu0 %v486, 8
      %v811 = vpop.permute.xlu0 %810
      %812 = vrot.lane.b32.xlu0 %v487, 8
      %v813 = vpop.permute.xlu0 %812
      %814 = vrot.lane.b32.xlu0 %v488, 8
      %v815 = vpop.permute.xlu0 %814
      %816 = vrot.lane.b32.xlu0 %v489, 8
      %v817 = vpop.permute.xlu0 %816
      %818 = vrot.lane.b32.xlu0 %v490, 8
      %v819 = vpop.permute.xlu0 %818
      %820 = vrot.lane.b32.xlu0 %v491, 8
      %v821 = vpop.permute.xlu0 %820
      %822 = vrot.lane.b32.xlu0 %v492, 8
      %v823 = vpop.permute.xlu0 %822
      %824 = vrot.lane.b32.xlu0 %v493, 8
      %v825 = vpop.permute.xlu0 %824
      %826 = vrot.lane.b32.xlu0 %v494, 8
      %v827 = vpop.permute.xlu0 %826
      %828 = vrot.lane.b32.xlu0 %v495, 8
      %v829 = vpop.permute.xlu0 %828
      %830 = vrot.lane.b32.xlu0 %v496, 8
      %v831 = vpop.permute.xlu0 %830
      %832 = vrot.lane.b32.xlu0 %v497, 8
      %v833 = vpop.permute.xlu0 %832
      %834 = vrot.lane.b32.xlu0 %v498, 8
      %v835 = vpop.permute.xlu0 %834
      %836 = vrot.lane.b32.xlu0 %v499, 8
      %v837 = vpop.permute.xlu0 %836
      %838 = vrot.lane.b32.xlu0 %v500, 8
      %v839 = vpop.permute.xlu0 %838
      %840 = vrot.lane.b32.xlu0 %v501, 8
      %v841 = vpop.permute.xlu0 %840
      %842 = vrot.lane.b32.xlu0 %v502, 8
      %v843 = vpop.permute.xlu0 %842
      %844 = vrot.lane.b32.xlu0 %v503, 8
      %v845 = vpop.permute.xlu0 %844
      %846 = vrot.lane.b32.xlu0 %v504, 8
      %v847 = vpop.permute.xlu0 %846
      %848 = vrot.lane.b32.xlu0 %v505, 8
      %v849 = vpop.permute.xlu0 %848
      %850 = vrot.lane.b32.xlu0 %v506, 8
      %v851 = vpop.permute.xlu0 %850
      %852 = vrot.lane.b32.xlu0 %v507, 8
      %v853 = vpop.permute.xlu0 %852
      %854 = vrot.lane.b32.xlu0 %v508, 8
      %v855 = vpop.permute.xlu0 %854
      %856 = vrot.lane.b32.xlu0 %v509, 8
      %v857 = vpop.permute.xlu0 %856
      %858 = vrot.lane.b32.xlu0 %v510, 8
      %v859 = vpop.permute.xlu0 %858
      %860 = vrot.lane.b32.xlu0 %v511, 8
      %v861 = vpop.permute.xlu0 %860
      %862 = vrot.lane.b32.xlu0 %v512, 8
      %v863 = vpop.permute.xlu0 %862
      %864 = vrot.lane.b32.xlu0 %v513, 8
      %v865 = vpop.permute.xlu0 %864
      %866 = vrot.lane.b32.xlu0 %v514, 8
      %v867 = vpop.permute.xlu0 %866
      %868 = vrot.lane.b32.xlu0 %v515, 8
      %v869 = vpop.permute.xlu0 %868
      %870 = vrot.lane.b32.xlu0 %v516, 8
      %v871 = vpop.permute.xlu0 %870
      %872 = vrot.lane.b32.xlu0 %v517, 8
      %v873 = vpop.permute.xlu0 %872
      %874 = vrot.lane.b32.xlu0 %v518, 8
      %v875 = vpop.permute.xlu0 %874
      %876 = vrot.lane.b32.xlu0 %v519, 8
      %v877 = vpop.permute.xlu0 %876
      %878 = vrot.lane.b32.xlu0 %v520, 8
      %v879 = vpop.permute.xlu0 %878
      %880 = vrot.lane.b32.xlu0 %v521, 8
      %v881 = vpop.permute.xlu0 %880
      %882 = vrot.lane.b32.xlu0 %v522, 8
      %v883 = vpop.permute.xlu0 %882
      %884 = vrot.lane.b32.xlu0 %v523, 8
      %v885 = vpop.permute.xlu0 %884
      %886 = vrot.lane.b32.xlu0 %v524, 8
      %v887 = vpop.permute.xlu0 %886
      %888 = vrot.lane.b32.xlu0 %v525, 8
      %v889 = vpop.permute.xlu0 %888
      %890 = vrot.lane.b32.xlu0 %v526, 8
      %v891 = vpop.permute.xlu0 %890
      %892 = vrot.lane.b32.xlu0 %v527, 8
      %v893 = vpop.permute.xlu0 %892
      %894 = vrot.lane.b32.xlu0 %v528, 8
      %v895 = vpop.permute.xlu0 %894
      %896 = vrot.lane.b32.xlu0 %v529, 8
      %v897 = vpop.permute.xlu0 %896
      %898 = vrot.lane.b32.xlu0 %v530, 8
      %v899 = vpop.permute.xlu0 %898
      %900 = vrot.lane.b32.xlu0 %v531, 8
      %v901 = vpop.permute.xlu0 %900
      %902 = vrot.lane.b32.xlu0 %v532, 8
      %v903 = vpop.permute.xlu0 %902
      %904 = vrot.lane.b32.xlu0 %v533, 8
      %v905 = vpop.permute.xlu0 %904
      %906 = vrot.lane.b32.xlu0 %v534, 8
      %v907 = vpop.permute.xlu0 %906
      %908 = vrot.lane.b32.xlu0 %v535, 8
      %v909 = vpop.permute.xlu0 %908
      %910 = vrot.lane.b32.xlu0 %v536, 8
      %v911 = vpop.permute.xlu0 %910
      %912 = vrot.lane.b32.xlu0 %v537, 8
      %v913 = vpop.permute.xlu0 %912
      %914 = vrot.lane.b32.xlu0 %v538, 8
      %v915 = vpop.permute.xlu0 %914
      %916 = vrot.lane.b32.xlu0 %v539, 8
      %v917 = vpop.permute.xlu0 %916
      %v972 = vsel %vm251, %v377, %v595
      %v973 = vsel %vm251, %v378, %v597
      %v974 = vsel %vm251, %v379, %v599
      %v975 = vsel %vm251, %v380, %v601
      %v976 = vsel %vm251, %v381, %v603
      %v977 = vsel %vm251, %v382, %v605
      %v978 = vsel %vm251, %v383, %v607
      %v979 = vsel %vm251, %v384, %v609
      %v980 = vsel %vm251, %v385, %v611
      %v981 = vsel %vm251, %v386, %v613
      %v982 = vsel %vm251, %v387, %v615
      %v983 = vsel %vm251, %v388, %v617
      %v984 = vsel %vm251, %v389, %v619
      %v985 = vsel %vm251, %v390, %v621
      %v986 = vsel %vm251, %v391, %v623
      %v987 = vsel %vm251, %v392, %v625
      %v988 = vsel %vm251, %v393, %v627
      %v989 = vsel %vm251, %v394, %v629
      %v990 = vsel %vm251, %v395, %v631
      %v991 = vsel %vm251, %v396, %v633
      %v992 = vsel %vm251, %v397, %v635
      %v993 = vsel %vm251, %v398, %v637
      %v994 = vsel %vm251, %v399, %v639
      %v995 = vsel %vm251, %v400, %v641
      %v996 = vsel %vm251, %v401, %v643
      %v997 = vsel %vm251, %v402, %v645
      %v998 = vsel %vm251, %v403, %v647
      %v999 = vsel %vm251, %v404, %v649
      %v1000 = vsel %vm251, %v405, %v651
      %v1001 = vsel %vm251, %v406, %v653
      %v1002 = vsel %vm251, %v407, %v655
      %v1003 = vsel %vm251, %v408, %v657
      %v1004 = vsel %vm251, %v409, %v659
      %v1005 = vsel %vm251, %v410, %v661
      %v1006 = vsel %vm251, %v411, %v663
      %v1007 = vsel %vm251, %v412, %v665
      %v1008 = vsel %vm251, %v413, %v667
      %v1009 = vsel %vm251, %v414, %v669
      %v1010 = vsel %vm251, %v415, %v671
      %v1011 = vsel %vm251, %v416, %v673
      %v1012 = vsel %vm251, %v417, %v675
      %v1013 = vsel %vm251, %v418, %v677
      %v1014 = vsel %vm251, %v419, %v679
      %v1015 = vsel %vm251, %v420, %v681
      %v1016 = vsel %vm251, %v421, %v683
      %v1017 = vsel %vm251, %v422, %v685
      %v1018 = vsel %vm251, %v423, %v687
      %v1019 = vsel %vm251, %v424, %v689
      %v1020 = vsel %vm251, %v425, %v691
      %v1021 = vsel %vm251, %v426, %v693
      %v1022 = vsel %vm251, %v427, %v695
      %v1023 = vsel %vm251, %v428, %v697
      %v1024 = vsel %vm251, %v429, %v699
      %v1025 = vsel %vm251, %v430, %v701
      %vm1026 = vcmask 64512
      %v1027 = vsel %vm1026, %v972, %v811
      %v1028 = vsel %vm1026, %v973, %v813
      %v1029 = vsel %vm1026, %v974, %v815
      %v1030 = vsel %vm1026, %v975, %v817
      %v1031 = vsel %vm1026, %v976, %v819
      %v1032 = vsel %vm1026, %v977, %v821
      %v1033 = vsel %vm1026, %v978, %v823
      %v1034 = vsel %vm1026, %v979, %v825
      %v1035 = vsel %vm1026, %v980, %v827
      %v1036 = vsel %vm1026, %v981, %v829
      %v1037 = vsel %vm1026, %v982, %v831
      %v1038 = vsel %vm1026, %v983, %v833
      %v1039 = vsel %vm1026, %v984, %v835
      %v1040 = vsel %vm1026, %v985, %v837
      %v1041 = vsel %vm1026, %v986, %v839
      %v1042 = vsel %vm1026, %v987, %v841
      %v1043 = vsel %vm1026, %v988, %v843
      %v1044 = vsel %vm1026, %v989, %v845
      %v1045 = vsel %vm1026, %v990, %v847
      %v1046 = vsel %vm1026, %v991, %v849
      %v1047 = vsel %vm1026, %v992, %v851
      %v1048 = vsel %vm1026, %v993, %v853
      %v1049 = vsel %vm1026, %v994, %v855
      %v1050 = vsel %vm1026, %v995, %v857
      %v1051 = vsel %vm1026, %v996, %v859
      %v1052 = vsel %vm1026, %v997, %v861
      %v1053 = vsel %vm1026, %v998, %v863
      %v1054 = vsel %vm1026, %v999, %v865
      %v1055 = vsel %vm1026, %v1000, %v867
      %v1056 = vsel %vm1026, %v1001, %v869
      %v1057 = vsel %vm1026, %v1002, %v871
      %v1058 = vsel %vm1026, %v1003, %v873
      %v1059 = vsel %vm1026, %v1004, %v875
      %v1060 = vsel %vm1026, %v1005, %v877
      %v1061 = vsel %vm1026, %v1006, %v879
      %v1062 = vsel %vm1026, %v1007, %v881
      %v1063 = vsel %vm1026, %v1008, %v883
      %v1064 = vsel %vm1026, %v1009, %v885
      %v1065 = vsel %vm1026, %v1010, %v887
      %v1066 = vsel %vm1026, %v1011, %v889
      %v1067 = vsel %vm1026, %v1012, %v891
      %v1068 = vsel %vm1026, %v1013, %v893
      %v1069 = vsel %vm1026, %v1014, %v895
      %v1070 = vsel %vm1026, %v1015, %v897
      %v1071 = vsel %vm1026, %v1016, %v899
      %v1072 = vsel %vm1026, %v1017, %v901
      %v1073 = vsel %vm1026, %v1018, %v903
      %v1074 = vsel %vm1026, %v1019, %v905
      %v1075 = vsel %vm1026, %v1020, %v907
      %v1076 = vsel %vm1026, %v1021, %v909
      %v1077 = vsel %vm1026, %v1022, %v911
      %v1078 = vsel %vm1026, %v1023, %v913
      %v1079 = vsel %vm1026, %v1024, %v915
      %v1080 = vsel %vm1026, %v1025, %v917
      %v1081 = vpack.c.bf16 %v1028, %v1027
      %v1082 = vpack.c.bf16 %v1030, %v1029
      %v1083 = vpack.c.bf16 %v1032, %v1031
      %v1084 = vpack.c.bf16 %v1034, %v1033
      %v1085 = vpack.c.bf16 %v1036, %v1035
      %v1086 = vpack.c.bf16 %v1038, %v1037
      %v1087 = vpack.c.bf16 %v1040, %v1039
      %v1088 = vpack.c.bf16 %v1042, %v1041
      %v1089 = vpack.c.bf16 %v1044, %v1043
      %v1090 = vpack.c.bf16 %v1046, %v1045
      %v1091 = vpack.c.bf16 %v1048, %v1047
      %v1092 = vpack.c.bf16 %v1050, %v1049
      %v1093 = vpack.c.bf16 %v1052, %v1051
      %v1094 = vpack.c.bf16 %v1054, %v1053
      %v1095 = vpack.c.bf16 %v1056, %v1055
      %v1096 = vpack.c.bf16 %v1058, %v1057
      %v1097 = vpack.c.bf16 %v1060, %v1059
      %v1098 = vpack.c.bf16 %v1062, %v1061
      %v1099 = vpack.c.bf16 %v1064, %v1063
      %v1100 = vpack.c.bf16 %v1066, %v1065
      %v1101 = vpack.c.bf16 %v1068, %v1067
      %v1102 = vpack.c.bf16 %v1070, %v1069
      %v1103 = vpack.c.bf16 %v1072, %v1071
      %v1104 = vpack.c.bf16 %v1074, %v1073
      %v1105 = vpack.c.bf16 %v1076, %v1075
      %v1106 = vpack.c.bf16 %v1078, %v1077
      %v1107 = vpack.c.bf16 %v1080, %v1079
      %v1108 = vld [vmem:[%s1] sm:$0xf]
      %v1109 = vld [vmem:[%s1 + $0x4] sm:$0x3]
      %v1112 = vunpack.c.l.b16 %v1108
      %v1113 = vunpack.c.l.b16 %v1109
      %v1114 = vpack.c.b16 %v1113, %v1112
      %vm1115 = vcmask 97280
      %v1117 = vsel %vm1115, %v1081, 0
      %v1120 = vsel %vm1115, %v1082, 0
      %v1123 = vsel %vm1115, %v1083, 0
      %v1126 = vsel %vm1115, %v1084, 0
      %v1129 = vsel %vm1115, %v1085, 0
      %v1132 = vsel %vm1115, %v1086, 0
      %v1135 = vsel %vm1115, %v1087, 0
      %v1138 = vsel %vm1115, %v1088, 0
      %v1141 = vsel %vm1115, %v1089, 0
      %v1144 = vsel %vm1115, %v1090, 0
      %v1147 = vsel %vm1115, %v1091, 0
      %v1150 = vsel %vm1115, %v1092, 0
      %v1153 = vsel %vm1115, %v1093, 0
      %v1156 = vsel %vm1115, %v1094, 0
      %v1159 = vsel %vm1115, %v1095, 0
      %v1162 = vsel %vm1115, %v1096, 0
      %v1165 = vsel %vm1115, %v1097, 0
      %v1168 = vsel %vm1115, %v1098, 0
      %v1171 = vsel %vm1115, %v1099, 0
      %v1174 = vsel %vm1115, %v1100, 0
      %v1177 = vsel %vm1115, %v1101, 0
      %v1180 = vsel %vm1115, %v1102, 0
      %v1183 = vsel %vm1115, %v1103, 0
      %v1186 = vsel %vm1115, %v1104, 0
      %v1189 = vsel %vm1115, %v1105, 0
      %v1192 = vsel %vm1115, %v1106, 0
      %v1195 = vsel %vm1115, %v1107, 0
      %vm1197 = vcmask 1045504
      %v1199 = vsel %vm1197, %v1114, 0
      %1201 = vmatprep.subr.bf16.mxu0 0
      %1202 = vmatpush1.bf16.msra.mxu0 %v1199
      %1203 = vmatprep.subr.bf16.mxu0 0
      %1204 = vmatpush1.bf16.msra.mxu0 0
      %1205 = vmatprep.subr.bf16.mxu0 0
      %1206 = vmatpush1.bf16.msra.mxu0 0
      %1207 = vmatprep.subr.bf16.mxu0 0
      %1208 = vmatpush1.bf16.msra.mxu0 0
      %1209 = vmatprep.subr.bf16.mxu0 0
      %1210 = vmatpush1.bf16.msra.mxu0 0
      %1211 = vmatprep.subr.bf16.mxu0 0
      %1212 = vmatpush1.bf16.msra.mxu0 0
      %1213 = vmatprep.subr.bf16.mxu0 0
      %1214 = vmatpush1.bf16.msra.mxu0 0
      %1215 = vmatprep.subr.bf16.mxu0 0
      %1216 = vmatpush1.bf16.msra.mxu0 0
      %1217 = vmatprep.subr.bf16.mxu0 0
      %1218 = vmatpush1.bf16.msra.mxu0 0
      %1219 = vmatprep.subr.bf16.mxu0 0
      %1220 = vmatpush1.bf16.msra.mxu0 0
      %1221 = vmatprep.subr.bf16.mxu0 0
      %1222 = vmatpush1.bf16.msra.mxu0 0
      %1223 = vmatprep.subr.bf16.mxu0 0
      %1224 = vmatpush1.bf16.msra.mxu0 0
      %1225 = vmatprep.subr.bf16.mxu0 0
      %1226 = vmatpush1.bf16.msra.mxu0 0
      %1227 = vmatprep.subr.bf16.mxu0 0
      %1228 = vmatpush1.bf16.msra.mxu0 0
      %1229 = vmatprep.subr.bf16.mxu0 0
      %1230 = vmatpush1.bf16.msra.mxu0 0
      %1231 = vmatprep.subr.bf16.mxu0 0
      %1232 = vmatpush1.bf16.msra.mxu0 0
      %1233 = vmatprep.mubr.bf16.mxu0 0
      %1234 = vmatmul.mubr.bf16.gmra.mrb[0].mxu0 %v1117
      %v1235 = vpop.f32.mrb[0].mxu0
      %v1236 = vadd.f32 0.0, %v1235
      %v1237 = vpop.f32.mrb[0].mxu0
      %v1238 = vpop.f32.mrb[0].mxu0
      %v1239 = vadd.f32 0.0, %v1238
      %v1240 = vpop.f32.mrb[0].mxu0
      %1241 = vmatprep.mubr.bf16.mxu0 0
      %1242 = vmatmul.mubr.bf16.gmra.mrb[0].mxu0 %v1120
      %v1243 = vpop.f32.mrb[0].mxu0
      %v1244 = vadd.f32 0.0, %v1243
      %v1245 = vpop.f32.mrb[0].mxu0
      %v1246 = vpop.f32.mrb[0].mxu0
      %v1247 = vadd.f32 0.0, %v1246
      %v1248 = vpop.f32.mrb[0].mxu0
      %1249 = vmatprep.mubr.bf16.mxu0 0
      %1250 = vmatmul.mubr.bf16.gmra.mrb[0].mxu0 %v1123
      %v1251 = vpop.f32.mrb[0].mxu0
      %v1252 = vadd.f32 0.0, %v1251
      %v1253 = vpop.f32.mrb[0].mxu0
      %v1254 = vpop.f32.mrb[0].mxu0
      %v1255 = vadd.f32 0.0, %v1254
      %v1256 = vpop.f32.mrb[0].mxu0
      %1257 = vmatprep.mubr.bf16.mxu0 0
      %1258 = vmatmul.mubr.bf16.gmra.mrb[0].mxu0 %v1126
      %v1259 = vpop.f32.mrb[0].mxu0
      %v1260 = vadd.f32 0.0, %v1259
      %v1261 = vpop.f32.mrb[0].mxu0
      %v1262 = vpop.f32.mrb[0].mxu0
      %v1263 = vadd.f32 0.0, %v1262
      %v1264 = vpop.f32.mrb[0].mxu0
      %1265 = vmatprep.mubr.bf16.mxu0 0
      %1266 = vmatmul.mubr.bf16.gmra.mrb[0].mxu0 %v1129
      %v1267 = vpop.f32.mrb[0].mxu0
      %v1268 = vadd.f32 0.0, %v1267
      %v1269 = vpop.f32.mrb[0].mxu0
      %v1270 = vpop.f32.mrb[0].mxu0
      %v1271 = vadd.f32 0.0, %v1270
      %v1272 = vpop.f32.mrb[0].mxu0
      %1273 = vmatprep.mubr.bf16.mxu0 0
      %1274 = vmatmul.mubr.bf16.gmra.mrb[0].mxu0 %v1132
      %v1275 = vpop.f32.mrb[0].mxu0
      %v1276 = vadd.f32 0.0, %v1275
      %v1277 = vpop.f32.mrb[0].mxu0
      %v1278 = vpop.f32.mrb[0].mxu0
      %v1279 = vadd.f32 0.0, %v1278
      %v1280 = vpop.f32.mrb[0].mxu0
      %1281 = vmatprep.mubr.bf16.mxu0 0
      %1282 = vmatmul.mubr.bf16.gmra.mrb[0].mxu0 %v1135
      %v1283 = vpop.f32.mrb[0].mxu0
      %v1284 = vadd.f32 0.0, %v1283
      %v1285 = vpop.f32.mrb[0].mxu0
      %v1286 = vpop.f32.mrb[0].mxu0
      %v1287 = vadd.f32 0.0, %v1286
      %v1288 = vpop.f32.mrb[0].mxu0
      %1289 = vmatprep.mubr.bf16.mxu0 0
      %1290 = vmatmul.mubr.bf16.gmra.mrb[0].mxu0 %v1138
      %v1291 = vpop.f32.mrb[0].mxu0
      %v1292 = vadd.f32 0.0, %v1291
      %v1293 = vpop.f32.mrb[0].mxu0
      %v1294 = vpop.f32.mrb[0].mxu0
      %v1295 = vadd.f32 0.0, %v1294
      %v1296 = vpop.f32.mrb[0].mxu0
      %1297 = vmatprep.mubr.bf16.mxu0 0
      %1298 = vmatmul.mubr.bf16.gmra.mrb[0].mxu0 %v1141
      %v1299 = vpop.f32.mrb[0].mxu0
      %v1300 = vadd.f32 0.0, %v1299
      %v1301 = vpop.f32.mrb[0].mxu0
      %v1302 = vpop.f32.mrb[0].mxu0
      %v1303 = vadd.f32 0.0, %v1302
      %v1304 = vpop.f32.mrb[0].mxu0
      %1305 = vmatprep.mubr.bf16.mxu0 0
      %1306 = vmatmul.mubr.bf16.gmra.mrb[0].mxu0 %v1144
      %v1307 = vpop.f32.mrb[0].mxu0
      %v1308 = vadd.f32 0.0, %v1307
      %v1309 = vpop.f32.mrb[0].mxu0
      %v1310 = vpop.f32.mrb[0].mxu0
      %v1311 = vadd.f32 0.0, %v1310
      %v1312 = vpop.f32.mrb[0].mxu0
      %1313 = vmatprep.mubr.bf16.mxu0 0
      %1314 = vmatmul.mubr.bf16.gmra.mrb[0].mxu0 %v1147
      %v1315 = vpop.f32.mrb[0].mxu0
      %v1316 = vadd.f32 0.0, %v1315
      %v1317 = vpop.f32.mrb[0].mxu0
      %v1318 = vpop.f32.mrb[0].mxu0
      %v1319 = vadd.f32 0.0, %v1318
      %v1320 = vpop.f32.mrb[0].mxu0
      %1321 = vmatprep.mubr.bf16.mxu0 0
      %1322 = vmatmul.mubr.bf16.gmra.mrb[0].mxu0 %v1150
      %v1323 = vpop.f32.mrb[0].mxu0
      %v1324 = vadd.f32 0.0, %v1323
      %v1325 = vpop.f32.mrb[0].mxu0
      %v1326 = vpop.f32.mrb[0].mxu0
      %v1327 = vadd.f32 0.0, %v1326
      %v1328 = vpop.f32.mrb[0].mxu0
      %1329 = vmatprep.mubr.bf16.mxu0 0
      %1330 = vmatmul.mubr.bf16.gmra.mrb[0].mxu0 %v1153
      %v1331 = vpop.f32.mrb[0].mxu0
      %v1332 = vadd.f32 0.0, %v1331
      %v1333 = vpop.f32.mrb[0].mxu0
      %v1334 = vpop.f32.mrb[0].mxu0
      %v1335 = vadd.f32 0.0, %v1334
      %v1336 = vpop.f32.mrb[0].mxu0
      %1337 = vmatprep.mubr.bf16.mxu0 0
      %1338 = vmatmul.mubr.bf16.gmra.mrb[0].mxu0 %v1156
      %v1339 = vpop.f32.mrb[0].mxu0
      %v1340 = vadd.f32 0.0, %v1339
      %v1341 = vpop.f32.mrb[0].mxu0
      %v1342 = vpop.f32.mrb[0].mxu0
      %v1343 = vadd.f32 0.0, %v1342
      %v1344 = vpop.f32.mrb[0].mxu0
      %1345 = vmatprep.mubr.bf16.mxu0 0
      %1346 = vmatmul.mubr.bf16.gmra.mrb[0].mxu0 %v1159
      %v1347 = vpop.f32.mrb[0].mxu0
      %v1348 = vadd.f32 0.0, %v1347
      %v1349 = vpop.f32.mrb[0].mxu0
      %v1350 = vpop.f32.mrb[0].mxu0
      %v1351 = vadd.f32 0.0, %v1350
      %v1352 = vpop.f32.mrb[0].mxu0
      %1353 = vmatprep.mubr.bf16.mxu0 0
      %1354 = vmatmul.mubr.bf16.gmra.mrb[0].mxu0 %v1162
      %v1355 = vpop.f32.mrb[0].mxu0
      %v1356 = vadd.f32 0.0, %v1355
      %v1357 = vpop.f32.mrb[0].mxu0
      %v1358 = vpop.f32.mrb[0].mxu0
      %v1359 = vadd.f32 0.0, %v1358
      %v1360 = vpop.f32.mrb[0].mxu0
      %1361 = vmatprep.mubr.bf16.mxu0 0
      %1362 = vmatmul.mubr.bf16.gmra.mrb[0].mxu0 %v1165
      %v1363 = vpop.f32.mrb[0].mxu0
      %v1364 = vadd.f32 0.0, %v1363
      %v1365 = vpop.f32.mrb[0].mxu0
      %v1366 = vpop.f32.mrb[0].mxu0
      %v1367 = vadd.f32 0.0, %v1366
      %v1368 = vpop.f32.mrb[0].mxu0
      %1369 = vmatprep.mubr.bf16.mxu0 0
      %1370 = vmatmul.mubr.bf16.gmra.mrb[0].mxu0 %v1168
      %v1371 = vpop.f32.mrb[0].mxu0
      %v1372 = vadd.f32 0.0, %v1371
      %v1373 = vpop.f32.mrb[0].mxu0
      %v1374 = vpop.f32.mrb[0].mxu0
      %v1375 = vadd.f32 0.0, %v1374
      %v1376 = vpop.f32.mrb[0].mxu0
      %1377 = vmatprep.mubr.bf16.mxu0 0
      %1378 = vmatmul.mubr.bf16.gmra.mrb[0].mxu0 %v1171
      %v1379 = vpop.f32.mrb[0].mxu0
      %v1380 = vadd.f32 0.0, %v1379
      %v1381 = vpop.f32.mrb[0].mxu0
      %v1382 = vpop.f32.mrb[0].mxu0
      %v1383 = vadd.f32 0.0, %v1382
      %v1384 = vpop.f32.mrb[0].mxu0
      %1385 = vmatprep.mubr.bf16.mxu0 0
      %1386 = vmatmul.mubr.bf16.gmra.mrb[0].mxu0 %v1174
      %v1387 = vpop.f32.mrb[0].mxu0
      %v1388 = vadd.f32 0.0, %v1387
      %v1389 = vpop.f32.mrb[0].mxu0
      %v1390 = vpop.f32.mrb[0].mxu0
      %v1391 = vadd.f32 0.0, %v1390
      %v1392 = vpop.f32.mrb[0].mxu0
      %1393 = vmatprep.mubr.bf16.mxu0 0
      %1394 = vmatmul.mubr.bf16.gmra.mrb[0].mxu0 %v1177
      %v1395 = vpop.f32.mrb[0].mxu0
      %v1396 = vadd.f32 0.0, %v1395
      %v1397 = vpop.f32.mrb[0].mxu0
      %v1398 = vpop.f32.mrb[0].mxu0
      %v1399 = vadd.f32 0.0, %v1398
      %v1400 = vpop.f32.mrb[0].mxu0
      %1401 = vmatprep.mubr.bf16.mxu0 0
      %1402 = vmatmul.mubr.bf16.gmra.mrb[0].mxu0 %v1180
      %v1403 = vpop.f32.mrb[0].mxu0
      %v1404 = vadd.f32 0.0, %v1403
      %v1405 = vpop.f32.mrb[0].mxu0
      %v1406 = vpop.f32.mrb[0].mxu0
      %v1407 = vadd.f32 0.0, %v1406
      %v1408 = vpop.f32.mrb[0].mxu0
      %1409 = vmatprep.mubr.bf16.mxu0 0
      %1410 = vmatmul.mubr.bf16.gmra.mrb[0].mxu0 %v1183
      %v1411 = vpop.f32.mrb[0].mxu0
      %v1412 = vadd.f32 0.0, %v1411
      %v1413 = vpop.f32.mrb[0].mxu0
      %v1414 = vpop.f32.mrb[0].mxu0
      %v1415 = vadd.f32 0.0, %v1414
      %v1416 = vpop.f32.mrb[0].mxu0
      %1417 = vmatprep.mubr.bf16.mxu0 0
      %1418 = vmatmul.mubr.bf16.gmra.mrb[0].mxu0 %v1186
      %v1419 = vpop.f32.mrb[0].mxu0
      %v1420 = vadd.f32 0.0, %v1419
      %v1421 = vpop.f32.mrb[0].mxu0
      %v1422 = vpop.f32.mrb[0].mxu0
      %v1423 = vadd.f32 0.0, %v1422
      %v1424 = vpop.f32.mrb[0].mxu0
      %1425 = vmatprep.mubr.bf16.mxu0 0
      %1426 = vmatmul.mubr.bf16.gmra.mrb[0].mxu0 %v1189
      %v1427 = vpop.f32.mrb[0].mxu0
      %v1428 = vadd.f32 0.0, %v1427
      %v1429 = vpop.f32.mrb[0].mxu0
      %v1430 = vpop.f32.mrb[0].mxu0
      %v1431 = vadd.f32 0.0, %v1430
      %v1432 = vpop.f32.mrb[0].mxu0
      %1433 = vmatprep.mubr.bf16.mxu0 0
      %1434 = vmatmul.mubr.bf16.gmra.mrb[0].mxu0 %v1192
      %v1435 = vpop.f32.mrb[0].mxu0
      %v1436 = vadd.f32 0.0, %v1435
      %v1437 = vpop.f32.mrb[0].mxu0
      %v1438 = vpop.f32.mrb[0].mxu0
      %v1439 = vadd.f32 0.0, %v1438
      %v1440 = vpop.f32.mrb[0].mxu0
      %1441 = vmatprep.mubr.bf16.mxu0 0
      %1442 = vmatmul.mubr.bf16.gmra.mrb[0].mxu0 %v1195
      %v1443 = vpop.f32.mrb[0].mxu0
      %v1444 = vadd.f32 0.0, %v1443
      %v1445 = vpop.f32.mrb[0].mxu0
      %v1446 = vpop.f32.mrb[0].mxu0
      %v1447 = vadd.f32 0.0, %v1446
      %v1448 = vpop.f32.mrb[0].mxu0
      %1449 = vdwg.mxu0
      %v1450 = vrot.slane %v1236, 7
      %v1451 = vrot.slane %v1239, 7
      %v1452 = vrot.slane %v1244, 7
      %v1453 = vrot.slane %v1247, 7
      %v1454 = vrot.slane %v1252, 7
      %v1455 = vrot.slane %v1255, 7
      %v1456 = vrot.slane %v1260, 7
      %v1457 = vrot.slane %v1263, 7
      %v1458 = vrot.slane %v1268, 7
      %v1459 = vrot.slane %v1271, 7
      %v1460 = vrot.slane %v1276, 7
      %v1461 = vrot.slane %v1279, 7
      %v1462 = vrot.slane %v1284, 7
      %v1463 = vrot.slane %v1287, 7
      %v1464 = vrot.slane %v1292, 7
      %v1465 = vrot.slane %v1295, 7
      %v1466 = vrot.slane %v1300, 7
      %v1467 = vrot.slane %v1303, 7
      %v1468 = vrot.slane %v1308, 7
      %v1469 = vrot.slane %v1311, 7
      %v1470 = vrot.slane %v1316, 7
      %v1471 = vrot.slane %v1319, 7
      %v1472 = vrot.slane %v1324, 7
      %v1473 = vrot.slane %v1327, 7
      %v1474 = vrot.slane %v1332, 7
      %v1475 = vrot.slane %v1335, 7
      %v1476 = vrot.slane %v1340, 7
      %v1477 = vrot.slane %v1343, 7
      %v1478 = vrot.slane %v1348, 7
      %v1479 = vrot.slane %v1351, 7
      %v1480 = vrot.slane %v1356, 7
      %v1481 = vrot.slane %v1359, 7
      %v1482 = vrot.slane %v1364, 7
      %v1483 = vrot.slane %v1367, 7
      %v1484 = vrot.slane %v1372, 7
      %v1485 = vrot.slane %v1375, 7
      %v1486 = vrot.slane %v1380, 7
      %v1487 = vrot.slane %v1383, 7
      %v1488 = vrot.slane %v1388, 7
      %v1489 = vrot.slane %v1391, 7
      %v1490 = vrot.slane %v1396, 7
      %v1491 = vrot.slane %v1399, 7
      %v1492 = vrot.slane %v1404, 7
      %v1493 = vrot.slane %v1407, 7
      %v1494 = vrot.slane %v1412, 7
      %v1495 = vrot.slane %v1415, 7
      %v1496 = vrot.slane %v1420, 7
      %v1497 = vrot.slane %v1423, 7
      %v1498 = vrot.slane %v1428, 7
      %v1499 = vrot.slane %v1431, 7
      %v1500 = vrot.slane %v1436, 7
      %v1501 = vrot.slane %v1439, 7
      %v1502 = vrot.slane %v1444, 7
      %v1503 = vrot.slane %v1447, 7
      %v1504 = vlaneseq
      %v1505 = vshrl.u32 %v1504, 7
      %vm1506 = vcmp.lt.s32.totalorder %v1505, 1
      %v1507 = vsel %vm1506, %v1502, %v1503
      %v1508 = vsel %vm1506, %v1501, %v1502
      %v1509 = vsel %vm1506, %v1500, %v1501
      %v1510 = vsel %vm1506, %v1499, %v1500
      %v1511 = vsel %vm1506, %v1498, %v1499
      %v1512 = vsel %vm1506, %v1497, %v1498
      %v1513 = vsel %vm1506, %v1496, %v1497
      %v1514 = vsel %vm1506, %v1495, %v1496
      %v1515 = vsel %vm1506, %v1494, %v1495
      %v1516 = vsel %vm1506, %v1493, %v1494
      %v1517 = vsel %vm1506, %v1492, %v1493
      %v1518 = vsel %vm1506, %v1491, %v1492
      %v1519 = vsel %vm1506, %v1490, %v1491
      %v1520 = vsel %vm1506, %v1489, %v1490
      %v1521 = vsel %vm1506, %v1488, %v1489
      %v1522 = vsel %vm1506, %v1487, %v1488
      %v1523 = vsel %vm1506, %v1486, %v1487
      %v1524 = vsel %vm1506, %v1485, %v1486
      %v1525 = vsel %vm1506, %v1484, %v1485
      %v1526 = vsel %vm1506, %v1483, %v1484
      %v1527 = vsel %vm1506, %v1482, %v1483
      %v1528 = vsel %vm1506, %v1481, %v1482
      %v1529 = vsel %vm1506, %v1480, %v1481
      %v1530 = vsel %vm1506, %v1479, %v1480
      %v1531 = vsel %vm1506, %v1478, %v1479
      %v1532 = vsel %vm1506, %v1477, %v1478
      %v1533 = vsel %vm1506, %v1476, %v1477
      %v1534 = vsel %vm1506, %v1475, %v1476
      %v1535 = vsel %vm1506, %v1474, %v1475
      %v1536 = vsel %vm1506, %v1473, %v1474
      %v1537 = vsel %vm1506, %v1472, %v1473
      %v1538 = vsel %vm1506, %v1471, %v1472
      %v1539 = vsel %vm1506, %v1470, %v1471
      %v1540 = vsel %vm1506, %v1469, %v1470
      %v1541 = vsel %vm1506, %v1468, %v1469
      %v1542 = vsel %vm1506, %v1467, %v1468
      %v1543 = vsel %vm1506, %v1466, %v1467
      %v1544 = vsel %vm1506, %v1465, %v1466
      %v1545 = vsel %vm1506, %v1464, %v1465
      %v1546 = vsel %vm1506, %v1463, %v1464
      %v1547 = vsel %vm1506, %v1462, %v1463
      %v1548 = vsel %vm1506, %v1461, %v1462
      %v1549 = vsel %vm1506, %v1460, %v1461
      %v1550 = vsel %vm1506, %v1459, %v1460
      %v1551 = vsel %vm1506, %v1458, %v1459
      %v1552 = vsel %vm1506, %v1457, %v1458
      %v1553 = vsel %vm1506, %v1456, %v1457
      %v1554 = vsel %vm1506, %v1455, %v1456
      %v1555 = vsel %vm1506, %v1454, %v1455
      %v1556 = vsel %vm1506, %v1453, %v1454
      %v1557 = vsel %vm1506, %v1452, %v1453
      %v1558 = vsel %vm1506, %v1451, %v1452
      %v1559 = vsel %vm1506, %v1450, %v1451
      %v1560 = vsel %vm1506, %v1503, %v1450
      %v1561 = vadd.f32 %v1560, 0.0
      %v1562 = vadd.f32 %v1559, 0.0
      %v1563 = vadd.f32 %v1558, 0.0
      %v1564 = vadd.f32 %v1557, 0.0
      %v1565 = vadd.f32 %v1556, 0.0
      %v1566 = vadd.f32 %v1555, 0.0
      %v1567 = vadd.f32 %v1554, 0.0
      %v1568 = vadd.f32 %v1553, 0.0
      %v1569 = vadd.f32 %v1552, 0.0
      %v1570 = vadd.f32 %v1551, 0.0
      %v1571 = vadd.f32 %v1550, 0.0
      %v1572 = vadd.f32 %v1549, 0.0
      %v1573 = vadd.f32 %v1548, 0.0
      %v1574 = vadd.f32 %v1547, 0.0
      %v1575 = vadd.f32 %v1546, 0.0
      %v1576 = vadd.f32 %v1545, 0.0
      %v1577 = vadd.f32 %v1544, 0.0
      %v1578 = vadd.f32 %v1543, 0.0
      %v1579 = vadd.f32 %v1542, 0.0
      %v1580 = vadd.f32 %v1541, 0.0
      %v1581 = vadd.f32 %v1540, 0.0
      %v1582 = vadd.f32 %v1539, 0.0
      %v1583 = vadd.f32 %v1538, 0.0
      %v1584 = vadd.f32 %v1537, 0.0
      %v1585 = vadd.f32 %v1536, 0.0
      %v1586 = vadd.f32 %v1535, 0.0
      %v1587 = vadd.f32 %v1534, 0.0
      %v1588 = vadd.f32 %v1533, 0.0
      %v1589 = vadd.f32 %v1532, 0.0
      %v1590 = vadd.f32 %v1531, 0.0
      %v1591 = vadd.f32 %v1530, 0.0
      %v1592 = vadd.f32 %v1529, 0.0
      %v1593 = vadd.f32 %v1528, 0.0
      %v1594 = vadd.f32 %v1527, 0.0
      %v1595 = vadd.f32 %v1526, 0.0
      %v1596 = vadd.f32 %v1525, 0.0
      %v1597 = vadd.f32 %v1524, 0.0
      %v1598 = vadd.f32 %v1523, 0.0
      %v1599 = vadd.f32 %v1522, 0.0
      %v1600 = vadd.f32 %v1521, 0.0
      %v1601 = vadd.f32 %v1520, 0.0
      %v1602 = vadd.f32 %v1519, 0.0
      %v1603 = vadd.f32 %v1518, 0.0
      %v1604 = vadd.f32 %v1517, 0.0
      %v1605 = vadd.f32 %v1516, 0.0
      %v1606 = vadd.f32 %v1515, 0.0
      %v1607 = vadd.f32 %v1514, 0.0
      %v1608 = vadd.f32 %v1513, 0.0
      %v1609 = vadd.f32 %v1512, 0.0
      %v1610 = vadd.f32 %v1511, 0.0
      %v1611 = vadd.f32 %v1510, 0.0
      %v1612 = vadd.f32 %v1509, 0.0
      %v1613 = vadd.f32 %v1508, 0.0
      %v1614 = vadd.f32 %v1507, 0.0
      %s1615 = scalar_lea.vmem %s1, 8
      %v1616 = vld [vmem:[%s1615] sm:$0xf]
      %v1617 = vld [vmem:[%s1615 + $0x4] sm:$0x3]
      %v1620 = vunpack.c.l.b16 %v1616
      %v1621 = vunpack.c.l.b16 %v1617
      %v1622 = vpack.c.b16 %v1621, %v1620
      %v1624 = vsel %vm1197, %v1622, 0
      %1626 = vmatprep.subr.bf16.mxu0 0
      %1627 = vmatpush1.bf16.msra.mxu0 %v1624
      %1628 = vmatprep.subr.bf16.mxu0 0
      %1629 = vmatpush1.bf16.msra.mxu0 0
      %1630 = vmatprep.subr.bf16.mxu0 0
      %1631 = vmatpush1.bf16.msra.mxu0 0
      %1632 = vmatprep.subr.bf16.mxu0 0
      %1633 = vmatpush1.bf16.msra.mxu0 0
      %1634 = vmatprep.subr.bf16.mxu0 0
      %1635 = vmatpush1.bf16.msra.mxu0 0
      %1636 = vmatprep.subr.bf16.mxu0 0
      %1637 = vmatpush1.bf16.msra.mxu0 0
      %1638 = vmatprep.subr.bf16.mxu0 0
      %1639 = vmatpush1.bf16.msra.mxu0 0
      %1640 = vmatprep.subr.bf16.mxu0 0
      %1641 = vmatpush1.bf16.msra.mxu0 0
      %1642 = vmatprep.subr.bf16.mxu0 0
      %1643 = vmatpush1.bf16.msra.mxu0 0
      %1644 = vmatprep.subr.bf16.mxu0 0
      %1645 = vmatpush1.bf16.msra.mxu0 0
      %1646 = vmatprep.subr.bf16.mxu0 0
      %1647 = vmatpush1.bf16.msra.mxu0 0
      %1648 = vmatprep.subr.bf16.mxu0 0
      %1649 = vmatpush1.bf16.msra.mxu0 0
      %1650 = vmatprep.subr.bf16.mxu0 0
      %1651 = vmatpush1.bf16.msra.mxu0 0
      %1652 = vmatprep.subr.bf16.mxu0 0
      %1653 = vmatpush1.bf16.msra.mxu0 0
      %1654 = vmatprep.subr.bf16.mxu0 0
      %1655 = vmatpush1.bf16.msra.mxu0 0
      %1656 = vmatprep.subr.bf16.mxu0 0
      %1657 = vmatpush1.bf16.msra.mxu0 0
      %1658 = vmatprep.mubr.bf16.mxu0 0
      %1659 = vmatmul.mubr.bf16.gmra.mrb[0].mxu0 %v1117
      %v1660 = vpop.f32.mrb[0].mxu0
      %v1661 = vadd.f32 0.0, %v1660
      %v1662 = vpop.f32.mrb[0].mxu0
      %v1663 = vpop.f32.mrb[0].mxu0
      %v1664 = vadd.f32 0.0, %v1663
      %v1665 = vpop.f32.mrb[0].mxu0
      %1666 = vmatprep.mubr.bf16.mxu0 0
      %1667 = vmatmul.mubr.bf16.gmra.mrb[0].mxu0 %v1120
      %v1668 = vpop.f32.mrb[0].mxu0
      %v1669 = vadd.f32 0.0, %v1668
      %v1670 = vpop.f32.mrb[0].mxu0
      %v1671 = vpop.f32.mrb[0].mxu0
      %v1672 = vadd.f32 0.0, %v1671
      %v1673 = vpop.f32.mrb[0].mxu0
      %1674 = vmatprep.mubr.bf16.mxu0 0
      %1675 = vmatmul.mubr.bf16.gmra.mrb[0].mxu0 %v1123
      %v1676 = vpop.f32.mrb[0].mxu0
      %v1677 = vadd.f32 0.0, %v1676
      %v1678 = vpop.f32.mrb[0].mxu0
      %v1679 = vpop.f32.mrb[0].mxu0
      %v1680 = vadd.f32 0.0, %v1679
      %v1681 = vpop.f32.mrb[0].mxu0
      %1682 = vmatprep.mubr.bf16.mxu0 0
      %1683 = vmatmul.mubr.bf16.gmra.mrb[0].mxu0 %v1126
      %v1684 = vpop.f32.mrb[0].mxu0
      %v1685 = vadd.f32 0.0, %v1684
      %v1686 = vpop.f32.mrb[0].mxu0
      %v1687 = vpop.f32.mrb[0].mxu0
      %v1688 = vadd.f32 0.0, %v1687
      %v1689 = vpop.f32.mrb[0].mxu0
      %1690 = vmatprep.mubr.bf16.mxu0 0
      %1691 = vmatmul.mubr.bf16.gmra.mrb[0].mxu0 %v1129
      %v1692 = vpop.f32.mrb[0].mxu0
      %v1693 = vadd.f32 0.0, %v1692
      %v1694 = vpop.f32.mrb[0].mxu0
      %v1695 = vpop.f32.mrb[0].mxu0
      %v1696 = vadd.f32 0.0, %v1695
      %v1697 = vpop.f32.mrb[0].mxu0
      %1698 = vmatprep.mubr.bf16.mxu0 0
      %1699 = vmatmul.mubr.bf16.gmra.mrb[0].mxu0 %v1132
      %v1700 = vpop.f32.mrb[0].mxu0
      %v1701 = vadd.f32 0.0, %v1700
      %v1702 = vpop.f32.mrb[0].mxu0
      %v1703 = vpop.f32.mrb[0].mxu0
      %v1704 = vadd.f32 0.0, %v1703
      %v1705 = vpop.f32.mrb[0].mxu0
      %1706 = vmatprep.mubr.bf16.mxu0 0
      %1707 = vmatmul.mubr.bf16.gmra.mrb[0].mxu0 %v1135
      %v1708 = vpop.f32.mrb[0].mxu0
      %v1709 = vadd.f32 0.0, %v1708
      %v1710 = vpop.f32.mrb[0].mxu0
      %v1711 = vpop.f32.mrb[0].mxu0
      %v1712 = vadd.f32 0.0, %v1711
      %v1713 = vpop.f32.mrb[0].mxu0
      %1714 = vmatprep.mubr.bf16.mxu0 0
      %1715 = vmatmul.mubr.bf16.gmra.mrb[0].mxu0 %v1138
      %v1716 = vpop.f32.mrb[0].mxu0
      %v1717 = vadd.f32 0.0, %v1716
      %v1718 = vpop.f32.mrb[0].mxu0
      %v1719 = vpop.f32.mrb[0].mxu0
      %v1720 = vadd.f32 0.0, %v1719
      %v1721 = vpop.f32.mrb[0].mxu0
      %1722 = vmatprep.mubr.bf16.mxu0 0
      %1723 = vmatmul.mubr.bf16.gmra.mrb[0].mxu0 %v1141
      %v1724 = vpop.f32.mrb[0].mxu0
      %v1725 = vadd.f32 0.0, %v1724
      %v1726 = vpop.f32.mrb[0].mxu0
      %v1727 = vpop.f32.mrb[0].mxu0
      %v1728 = vadd.f32 0.0, %v1727
      %v1729 = vpop.f32.mrb[0].mxu0
      %1730 = vmatprep.mubr.bf16.mxu0 0
      %1731 = vmatmul.mubr.bf16.gmra.mrb[0].mxu0 %v1144
      %v1732 = vpop.f32.mrb[0].mxu0
      %v1733 = vadd.f32 0.0, %v1732
      %v1734 = vpop.f32.mrb[0].mxu0
      %v1735 = vpop.f32.mrb[0].mxu0
      %v1736 = vadd.f32 0.0, %v1735
      %v1737 = vpop.f32.mrb[0].mxu0
      %1738 = vmatprep.mubr.bf16.mxu0 0
      %1739 = vmatmul.mubr.bf16.gmra.mrb[0].mxu0 %v1147
      %v1740 = vpop.f32.mrb[0].mxu0
      %v1741 = vadd.f32 0.0, %v1740
      %v1742 = vpop.f32.mrb[0].mxu0
      %v1743 = vpop.f32.mrb[0].mxu0
      %v1744 = vadd.f32 0.0, %v1743
      %v1745 = vpop.f32.mrb[0].mxu0
      %1746 = vmatprep.mubr.bf16.mxu0 0
      %1747 = vmatmul.mubr.bf16.gmra.mrb[0].mxu0 %v1150
      %v1748 = vpop.f32.mrb[0].mxu0
      %v1749 = vadd.f32 0.0, %v1748
      %v1750 = vpop.f32.mrb[0].mxu0
      %v1751 = vpop.f32.mrb[0].mxu0
      %v1752 = vadd.f32 0.0, %v1751
      %v1753 = vpop.f32.mrb[0].mxu0
      %1754 = vmatprep.mubr.bf16.mxu0 0
      %1755 = vmatmul.mubr.bf16.gmra.mrb[0].mxu0 %v1153
      %v1756 = vpop.f32.mrb[0].mxu0
      %v1757 = vadd.f32 0.0, %v1756
      %v1758 = vpop.f32.mrb[0].mxu0
      %v1759 = vpop.f32.mrb[0].mxu0
      %v1760 = vadd.f32 0.0, %v1759
      %v1761 = vpop.f32.mrb[0].mxu0
      %1762 = vmatprep.mubr.bf16.mxu0 0
      %1763 = vmatmul.mubr.bf16.gmra.mrb[0].mxu0 %v1156
      %v1764 = vpop.f32.mrb[0].mxu0
      %v1765 = vadd.f32 0.0, %v1764
      %v1766 = vpop.f32.mrb[0].mxu0
      %v1767 = vpop.f32.mrb[0].mxu0
      %v1768 = vadd.f32 0.0, %v1767
      %v1769 = vpop.f32.mrb[0].mxu0
      %1770 = vmatprep.mubr.bf16.mxu0 0
      %1771 = vmatmul.mubr.bf16.gmra.mrb[0].mxu0 %v1159
      %v1772 = vpop.f32.mrb[0].mxu0
      %v1773 = vadd.f32 0.0, %v1772
      %v1774 = vpop.f32.mrb[0].mxu0
      %v1775 = vpop.f32.mrb[0].mxu0
      %v1776 = vadd.f32 0.0, %v1775
      %v1777 = vpop.f32.mrb[0].mxu0
      %1778 = vmatprep.mubr.bf16.mxu0 0
      %1779 = vmatmul.mubr.bf16.gmra.mrb[0].mxu0 %v1162
      %v1780 = vpop.f32.mrb[0].mxu0
      %v1781 = vadd.f32 0.0, %v1780
      %v1782 = vpop.f32.mrb[0].mxu0
      %v1783 = vpop.f32.mrb[0].mxu0
      %v1784 = vadd.f32 0.0, %v1783
      %v1785 = vpop.f32.mrb[0].mxu0
      %1786 = vmatprep.mubr.bf16.mxu0 0
      %1787 = vmatmul.mubr.bf16.gmra.mrb[0].mxu0 %v1165
      %v1788 = vpop.f32.mrb[0].mxu0
      %v1789 = vadd.f32 0.0, %v1788
      %v1790 = vpop.f32.mrb[0].mxu0
      %v1791 = vpop.f32.mrb[0].mxu0
      %v1792 = vadd.f32 0.0, %v1791
      %v1793 = vpop.f32.mrb[0].mxu0
      %1794 = vmatprep.mubr.bf16.mxu0 0
      %1795 = vmatmul.mubr.bf16.gmra.mrb[0].mxu0 %v1168
      %v1796 = vpop.f32.mrb[0].mxu0
      %v1797 = vadd.f32 0.0, %v1796
      %v1798 = vpop.f32.mrb[0].mxu0
      %v1799 = vpop.f32.mrb[0].mxu0
      %v1800 = vadd.f32 0.0, %v1799
      %v1801 = vpop.f32.mrb[0].mxu0
      %1802 = vmatprep.mubr.bf16.mxu0 0
      %1803 = vmatmul.mubr.bf16.gmra.mrb[0].mxu0 %v1171
      %v1804 = vpop.f32.mrb[0].mxu0
      %v1805 = vadd.f32 0.0, %v1804
      %v1806 = vpop.f32.mrb[0].mxu0
      %v1807 = vpop.f32.mrb[0].mxu0
      %v1808 = vadd.f32 0.0, %v1807
      %v1809 = vpop.f32.mrb[0].mxu0
      %1810 = vmatprep.mubr.bf16.mxu0 0
      %1811 = vmatmul.mubr.bf16.gmra.mrb[0].mxu0 %v1174
      %v1812 = vpop.f32.mrb[0].mxu0
      %v1813 = vadd.f32 0.0, %v1812
      %v1814 = vpop.f32.mrb[0].mxu0
      %v1815 = vpop.f32.mrb[0].mxu0
      %v1816 = vadd.f32 0.0, %v1815
      %v1817 = vpop.f32.mrb[0].mxu0
      %1818 = vmatprep.mubr.bf16.mxu0 0
      %1819 = vmatmul.mubr.bf16.gmra.mrb[0].mxu0 %v1177
      %v1820 = vpop.f32.mrb[0].mxu0
      %v1821 = vadd.f32 0.0, %v1820
      %v1822 = vpop.f32.mrb[0].mxu0
      %v1823 = vpop.f32.mrb[0].mxu0
      %v1824 = vadd.f32 0.0, %v1823
      %v1825 = vpop.f32.mrb[0].mxu0
      %1826 = vmatprep.mubr.bf16.mxu0 0
      %1827 = vmatmul.mubr.bf16.gmra.mrb[0].mxu0 %v1180
      %v1828 = vpop.f32.mrb[0].mxu0
      %v1829 = vadd.f32 0.0, %v1828
      %v1830 = vpop.f32.mrb[0].mxu0
      %v1831 = vpop.f32.mrb[0].mxu0
      %v1832 = vadd.f32 0.0, %v1831
      %v1833 = vpop.f32.mrb[0].mxu0
      %1834 = vmatprep.mubr.bf16.mxu0 0
      %1835 = vmatmul.mubr.bf16.gmra.mrb[0].mxu0 %v1183
      %v1836 = vpop.f32.mrb[0].mxu0
      %v1837 = vadd.f32 0.0, %v1836
      %v1838 = vpop.f32.mrb[0].mxu0
      %v1839 = vpop.f32.mrb[0].mxu0
      %v1840 = vadd.f32 0.0, %v1839
      %v1841 = vpop.f32.mrb[0].mxu0
      %1842 = vmatprep.mubr.bf16.mxu0 0
      %1843 = vmatmul.mubr.bf16.gmra.mrb[0].mxu0 %v1186
      %v1844 = vpop.f32.mrb[0].mxu0
      %v1845 = vadd.f32 0.0, %v1844
      %v1846 = vpop.f32.mrb[0].mxu0
      %v1847 = vpop.f32.mrb[0].mxu0
      %v1848 = vadd.f32 0.0, %v1847
      %v1849 = vpop.f32.mrb[0].mxu0
      %1850 = vmatprep.mubr.bf16.mxu0 0
      %1851 = vmatmul.mubr.bf16.gmra.mrb[0].mxu0 %v1189
      %v1852 = vpop.f32.mrb[0].mxu0
      %v1853 = vadd.f32 0.0, %v1852
      %v1854 = vpop.f32.mrb[0].mxu0
      %v1855 = vpop.f32.mrb[0].mxu0
      %v1856 = vadd.f32 0.0, %v1855
      %v1857 = vpop.f32.mrb[0].mxu0
      %1858 = vmatprep.mubr.bf16.mxu0 0
      %1859 = vmatmul.mubr.bf16.gmra.mrb[0].mxu0 %v1192
      %v1860 = vpop.f32.mrb[0].mxu0
      %v1861 = vadd.f32 0.0, %v1860
      %v1862 = vpop.f32.mrb[0].mxu0
      %v1863 = vpop.f32.mrb[0].mxu0
      %v1864 = vadd.f32 0.0, %v1863
      %v1865 = vpop.f32.mrb[0].mxu0
      %1866 = vmatprep.mubr.bf16.mxu0 0
      %1867 = vmatmul.mubr.bf16.gmra.mrb[0].mxu0 %v1195
      %v1868 = vpop.f32.mrb[0].mxu0
      %v1869 = vadd.f32 0.0, %v1868
      %v1870 = vpop.f32.mrb[0].mxu0
      %v1871 = vpop.f32.mrb[0].mxu0
      %v1872 = vadd.f32 0.0, %v1871
      %v1873 = vpop.f32.mrb[0].mxu0
      %1874 = vdwg.mxu0
      %v1875 = vadd.f32 %v1561, %v1661
      %v1876 = vadd.f32 %v1562, %v1664
      %v1877 = vadd.f32 %v1563, %v1669
      %v1878 = vadd.f32 %v1564, %v1672
      %v1879 = vadd.f32 %v1565, %v1677
      %v1880 = vadd.f32 %v1566, %v1680
      %v1881 = vadd.f32 %v1567, %v1685
      %v1882 = vadd.f32 %v1568, %v1688
      %v1883 = vadd.f32 %v1569, %v1693
      %v1884 = vadd.f32 %v1570, %v1696
      %v1885 = vadd.f32 %v1571, %v1701
      %v1886 = vadd.f32 %v1572, %v1704
      %v1887 = vadd.f32 %v1573, %v1709
      %v1888 = vadd.f32 %v1574, %v1712
      %v1889 = vadd.f32 %v1575, %v1717
      %v1890 = vadd.f32 %v1576, %v1720
      %v1891 = vadd.f32 %v1577, %v1725
      %v1892 = vadd.f32 %v1578, %v1728
      %v1893 = vadd.f32 %v1579, %v1733
      %v1894 = vadd.f32 %v1580, %v1736
      %v1895 = vadd.f32 %v1581, %v1741
      %v1896 = vadd.f32 %v1582, %v1744
      %v1897 = vadd.f32 %v1583, %v1749
      %v1898 = vadd.f32 %v1584, %v1752
      %v1899 = vadd.f32 %v1585, %v1757
      %v1900 = vadd.f32 %v1586, %v1760
      %v1901 = vadd.f32 %v1587, %v1765
      %v1902 = vadd.f32 %v1588, %v1768
      %v1903 = vadd.f32 %v1589, %v1773
      %v1904 = vadd.f32 %v1590, %v1776
      %v1905 = vadd.f32 %v1591, %v1781
      %v1906 = vadd.f32 %v1592, %v1784
      %v1907 = vadd.f32 %v1593, %v1789
      %v1908 = vadd.f32 %v1594, %v1792
      %v1909 = vadd.f32 %v1595, %v1797
      %v1910 = vadd.f32 %v1596, %v1800
      %v1911 = vadd.f32 %v1597, %v1805
      %v1912 = vadd.f32 %v1598, %v1808
      %v1913 = vadd.f32 %v1599, %v1813
      %v1914 = vadd.f32 %v1600, %v1816
      %v1915 = vadd.f32 %v1601, %v1821
      %v1916 = vadd.f32 %v1602, %v1824
      %v1917 = vadd.f32 %v1603, %v1829
      %v1918 = vadd.f32 %v1604, %v1832
      %v1919 = vadd.f32 %v1605, %v1837
      %v1920 = vadd.f32 %v1606, %v1840
      %v1921 = vadd.f32 %v1607, %v1845
      %v1922 = vadd.f32 %v1608, %v1848
      %v1923 = vadd.f32 %v1609, %v1853
      %v1924 = vadd.f32 %v1610, %v1856
      %v1925 = vadd.f32 %v1611, %v1861
      %v1926 = vadd.f32 %v1612, %v1864
      %v1927 = vadd.f32 %v1613, %v1869
      %v1928 = vadd.f32 %v1614, %v1872
      %s1929 = scalar_lea.vmem %s1, 16
      %v1930 = vld [vmem:[%s1929] sm:$0xf]
      %v1931 = vld [vmem:[%s1929 + $0x4] sm:$0x3]
      %v1934 = vunpack.c.l.b16 %v1930
      %v1935 = vunpack.c.l.b16 %v1931
      %v1936 = vpack.c.b16 %v1935, %v1934
      %v1938 = vsel %vm1197, %v1936, 0
      %1940 = vmatprep.subr.bf16.mxu0 0
      %1941 = vmatpush1.bf16.msra.mxu0 %v1938
      %1942 = vmatprep.subr.bf16.mxu0 0
      %1943 = vmatpush1.bf16.msra.mxu0 0
      %1944 = vmatprep.subr.bf16.mxu0 0
      %1945 = vmatpush1.bf16.msra.mxu0 0
      %1946 = vmatprep.subr.bf16.mxu0 0
      %1947 = vmatpush1.bf16.msra.mxu0 0
      %1948 = vmatprep.subr.bf16.mxu0 0
      %1949 = vmatpush1.bf16.msra.mxu0 0
      %1950 = vmatprep.subr.bf16.mxu0 0
      %1951 = vmatpush1.bf16.msra.mxu0 0
      %1952 = vmatprep.subr.bf16.mxu0 0
      %1953 = vmatpush1.bf16.msra.mxu0 0
      %1954 = vmatprep.subr.bf16.mxu0 0
      %1955 = vmatpush1.bf16.msra.mxu0 0
      %1956 = vmatprep.subr.bf16.mxu0 0
      %1957 = vmatpush1.bf16.msra.mxu0 0
      %1958 = vmatprep.subr.bf16.mxu0 0
      %1959 = vmatpush1.bf16.msra.mxu0 0
      %1960 = vmatprep.subr.bf16.mxu0 0
      %1961 = vmatpush1.bf16.msra.mxu0 0
      %1962 = vmatprep.subr.bf16.mxu0 0
      %1963 = vmatpush1.bf16.msra.mxu0 0
      %1964 = vmatprep.subr.bf16.mxu0 0
      %1965 = vmatpush1.bf16.msra.mxu0 0
      %1966 = vmatprep.subr.bf16.mxu0 0
      %1967 = vmatpush1.bf16.msra.mxu0 0
      %1968 = vmatprep.subr.bf16.mxu0 0
      %1969 = vmatpush1.bf16.msra.mxu0 0
      %1970 = vmatprep.subr.bf16.mxu0 0
      %1971 = vmatpush1.bf16.msra.mxu0 0
      %1972 = vmatprep.mubr.bf16.mxu0 0
      %1973 = vmatmul.mubr.bf16.gmra.mrb[0].mxu0 %v1117
      %v1974 = vpop.f32.mrb[0].mxu0
      %v1975 = vadd.f32 0.0, %v1974
      %v1976 = vpop.f32.mrb[0].mxu0
      %v1977 = vpop.f32.mrb[0].mxu0
      %v1978 = vadd.f32 0.0, %v1977
      %v1979 = vpop.f32.mrb[0].mxu0
      %1980 = vmatprep.mubr.bf16.mxu0 0
      %1981 = vmatmul.mubr.bf16.gmra.mrb[0].mxu0 %v1120
      %v1982 = vpop.f32.mrb[0].mxu0
      %v1983 = vadd.f32 0.0, %v1982
      %v1984 = vpop.f32.mrb[0].mxu0
      %v1985 = vpop.f32.mrb[0].mxu0
      %v1986 = vadd.f32 0.0, %v1985
      %v1987 = vpop.f32.mrb[0].mxu0
      %1988 = vmatprep.mubr.bf16.mxu0 0
      %1989 = vmatmul.mubr.bf16.gmra.mrb[0].mxu0 %v1123
      %v1990 = vpop.f32.mrb[0].mxu0
      %v1991 = vadd.f32 0.0, %v1990
      %v1992 = vpop.f32.mrb[0].mxu0
      %v1993 = vpop.f32.mrb[0].mxu0
      %v1994 = vadd.f32 0.0, %v1993
      %v1995 = vpop.f32.mrb[0].mxu0
      %1996 = vmatprep.mubr.bf16.mxu0 0
      %1997 = vmatmul.mubr.bf16.gmra.mrb[0].mxu0 %v1126
      %v1998 = vpop.f32.mrb[0].mxu0
      %v1999 = vadd.f32 0.0, %v1998
      %v2000 = vpop.f32.mrb[0].mxu0
      %v2001 = vpop.f32.mrb[0].mxu0
      %v2002 = vadd.f32 0.0, %v2001
      %v2003 = vpop.f32.mrb[0].mxu0
      %2004 = vmatprep.mubr.bf16.mxu0 0
      %2005 = vmatmul.mubr.bf16.gmra.mrb[0].mxu0 %v1129
      %v2006 = vpop.f32.mrb[0].mxu0
      %v2007 = vadd.f32 0.0, %v2006
      %v2008 = vpop.f32.mrb[0].mxu0
      %v2009 = vpop.f32.mrb[0].mxu0
      %v2010 = vadd.f32 0.0, %v2009
      %v2011 = vpop.f32.mrb[0].mxu0
      %2012 = vmatprep.mubr.bf16.mxu0 0
      %2013 = vmatmul.mubr.bf16.gmra.mrb[0].mxu0 %v1132
      %v2014 = vpop.f32.mrb[0].mxu0
      %v2015 = vadd.f32 0.0, %v2014
      %v2016 = vpop.f32.mrb[0].mxu0
      %v2017 = vpop.f32.mrb[0].mxu0
      %v2018 = vadd.f32 0.0, %v2017
      %v2019 = vpop.f32.mrb[0].mxu0
      %2020 = vmatprep.mubr.bf16.mxu0 0
      %2021 = vmatmul.mubr.bf16.gmra.mrb[0].mxu0 %v1135
      %v2022 = vpop.f32.mrb[0].mxu0
      %v2023 = vadd.f32 0.0, %v2022
      %v2024 = vpop.f32.mrb[0].mxu0
      %v2025 = vpop.f32.mrb[0].mxu0
      %v2026 = vadd.f32 0.0, %v2025
      %v2027 = vpop.f32.mrb[0].mxu0
      %2028 = vmatprep.mubr.bf16.mxu0 0
      %2029 = vmatmul.mubr.bf16.gmra.mrb[0].mxu0 %v1138
      %v2030 = vpop.f32.mrb[0].mxu0
      %v2031 = vadd.f32 0.0, %v2030
      %v2032 = vpop.f32.mrb[0].mxu0
      %v2033 = vpop.f32.mrb[0].mxu0
      %v2034 = vadd.f32 0.0, %v2033
      %v2035 = vpop.f32.mrb[0].mxu0
      %2036 = vmatprep.mubr.bf16.mxu0 0
      %2037 = vmatmul.mubr.bf16.gmra.mrb[0].mxu0 %v1141
      %v2038 = vpop.f32.mrb[0].mxu0
      %v2039 = vadd.f32 0.0, %v2038
      %v2040 = vpop.f32.mrb[0].mxu0
      %v2041 = vpop.f32.mrb[0].mxu0
      %v2042 = vadd.f32 0.0, %v2041
      %v2043 = vpop.f32.mrb[0].mxu0
      %2044 = vmatprep.mubr.bf16.mxu0 0
      %2045 = vmatmul.mubr.bf16.gmra.mrb[0].mxu0 %v1144
      %v2046 = vpop.f32.mrb[0].mxu0
      %v2047 = vadd.f32 0.0, %v2046
      %v2048 = vpop.f32.mrb[0].mxu0
      %v2049 = vpop.f32.mrb[0].mxu0
      %v2050 = vadd.f32 0.0, %v2049
      %v2051 = vpop.f32.mrb[0].mxu0
      %2052 = vmatprep.mubr.bf16.mxu0 0
      %2053 = vmatmul.mubr.bf16.gmra.mrb[0].mxu0 %v1147
      %v2054 = vpop.f32.mrb[0].mxu0
      %v2055 = vadd.f32 0.0, %v2054
      %v2056 = vpop.f32.mrb[0].mxu0
      %v2057 = vpop.f32.mrb[0].mxu0
      %v2058 = vadd.f32 0.0, %v2057
      %v2059 = vpop.f32.mrb[0].mxu0
      %2060 = vmatprep.mubr.bf16.mxu0 0
      %2061 = vmatmul.mubr.bf16.gmra.mrb[0].mxu0 %v1150
      %v2062 = vpop.f32.mrb[0].mxu0
      %v2063 = vadd.f32 0.0, %v2062
      %v2064 = vpop.f32.mrb[0].mxu0
      %v2065 = vpop.f32.mrb[0].mxu0
      %v2066 = vadd.f32 0.0, %v2065
      %v2067 = vpop.f32.mrb[0].mxu0
      %2068 = vmatprep.mubr.bf16.mxu0 0
      %2069 = vmatmul.mubr.bf16.gmra.mrb[0].mxu0 %v1153
      %v2070 = vpop.f32.mrb[0].mxu0
      %v2071 = vadd.f32 0.0, %v2070
      %v2072 = vpop.f32.mrb[0].mxu0
      %v2073 = vpop.f32.mrb[0].mxu0
      %v2074 = vadd.f32 0.0, %v2073
      %v2075 = vpop.f32.mrb[0].mxu0
      %2076 = vmatprep.mubr.bf16.mxu0 0
      %2077 = vmatmul.mubr.bf16.gmra.mrb[0].mxu0 %v1156
      %v2078 = vpop.f32.mrb[0].mxu0
      %v2079 = vadd.f32 0.0, %v2078
      %v2080 = vpop.f32.mrb[0].mxu0
      %v2081 = vpop.f32.mrb[0].mxu0
      %v2082 = vadd.f32 0.0, %v2081
      %v2083 = vpop.f32.mrb[0].mxu0
      %2084 = vmatprep.mubr.bf16.mxu0 0
      %2085 = vmatmul.mubr.bf16.gmra.mrb[0].mxu0 %v1159
      %v2086 = vpop.f32.mrb[0].mxu0
      %v2087 = vadd.f32 0.0, %v2086
      %v2088 = vpop.f32.mrb[0].mxu0
      %v2089 = vpop.f32.mrb[0].mxu0
      %v2090 = vadd.f32 0.0, %v2089
      %v2091 = vpop.f32.mrb[0].mxu0
      %2092 = vmatprep.mubr.bf16.mxu0 0
      %2093 = vmatmul.mubr.bf16.gmra.mrb[0].mxu0 %v1162
      %v2094 = vpop.f32.mrb[0].mxu0
      %v2095 = vadd.f32 0.0, %v2094
      %v2096 = vpop.f32.mrb[0].mxu0
      %v2097 = vpop.f32.mrb[0].mxu0
      %v2098 = vadd.f32 0.0, %v2097
      %v2099 = vpop.f32.mrb[0].mxu0
      %2100 = vmatprep.mubr.bf16.mxu0 0
      %2101 = vmatmul.mubr.bf16.gmra.mrb[0].mxu0 %v1165
      %v2102 = vpop.f32.mrb[0].mxu0
      %v2103 = vadd.f32 0.0, %v2102
      %v2104 = vpop.f32.mrb[0].mxu0
      %v2105 = vpop.f32.mrb[0].mxu0
      %v2106 = vadd.f32 0.0, %v2105
      %v2107 = vpop.f32.mrb[0].mxu0
      %2108 = vmatprep.mubr.bf16.mxu0 0
      %2109 = vmatmul.mubr.bf16.gmra.mrb[0].mxu0 %v1168
      %v2110 = vpop.f32.mrb[0].mxu0
      %v2111 = vadd.f32 0.0, %v2110
      %v2112 = vpop.f32.mrb[0].mxu0
      %v2113 = vpop.f32.mrb[0].mxu0
      %v2114 = vadd.f32 0.0, %v2113
      %v2115 = vpop.f32.mrb[0].mxu0
      %2116 = vmatprep.mubr.bf16.mxu0 0
      %2117 = vmatmul.mubr.bf16.gmra.mrb[0].mxu0 %v1171
      %v2118 = vpop.f32.mrb[0].mxu0
      %v2119 = vadd.f32 0.0, %v2118
      %v2120 = vpop.f32.mrb[0].mxu0
      %v2121 = vpop.f32.mrb[0].mxu0
      %v2122 = vadd.f32 0.0, %v2121
      %v2123 = vpop.f32.mrb[0].mxu0
      %2124 = vmatprep.mubr.bf16.mxu0 0
      %2125 = vmatmul.mubr.bf16.gmra.mrb[0].mxu0 %v1174
      %v2126 = vpop.f32.mrb[0].mxu0
      %v2127 = vadd.f32 0.0, %v2126
      %v2128 = vpop.f32.mrb[0].mxu0
      %v2129 = vpop.f32.mrb[0].mxu0
      %v2130 = vadd.f32 0.0, %v2129
      %v2131 = vpop.f32.mrb[0].mxu0
      %2132 = vmatprep.mubr.bf16.mxu0 0
      %2133 = vmatmul.mubr.bf16.gmra.mrb[0].mxu0 %v1177
      %v2134 = vpop.f32.mrb[0].mxu0
      %v2135 = vadd.f32 0.0, %v2134
      %v2136 = vpop.f32.mrb[0].mxu0
      %v2137 = vpop.f32.mrb[0].mxu0
      %v2138 = vadd.f32 0.0, %v2137
      %v2139 = vpop.f32.mrb[0].mxu0
      %2140 = vmatprep.mubr.bf16.mxu0 0
      %2141 = vmatmul.mubr.bf16.gmra.mrb[0].mxu0 %v1180
      %v2142 = vpop.f32.mrb[0].mxu0
      %v2143 = vadd.f32 0.0, %v2142
      %v2144 = vpop.f32.mrb[0].mxu0
      %v2145 = vpop.f32.mrb[0].mxu0
      %v2146 = vadd.f32 0.0, %v2145
      %v2147 = vpop.f32.mrb[0].mxu0
      %2148 = vmatprep.mubr.bf16.mxu0 0
      %2149 = vmatmul.mubr.bf16.gmra.mrb[0].mxu0 %v1183
      %v2150 = vpop.f32.mrb[0].mxu0
      %v2151 = vadd.f32 0.0, %v2150
      %v2152 = vpop.f32.mrb[0].mxu0
      %v2153 = vpop.f32.mrb[0].mxu0
      %v2154 = vadd.f32 0.0, %v2153
      %v2155 = vpop.f32.mrb[0].mxu0
      %2156 = vmatprep.mubr.bf16.mxu0 0
      %2157 = vmatmul.mubr.bf16.gmra.mrb[0].mxu0 %v1186
      %v2158 = vpop.f32.mrb[0].mxu0
      %v2159 = vadd.f32 0.0, %v2158
      %v2160 = vpop.f32.mrb[0].mxu0
      %v2161 = vpop.f32.mrb[0].mxu0
      %v2162 = vadd.f32 0.0, %v2161
      %v2163 = vpop.f32.mrb[0].mxu0
      %2164 = vmatprep.mubr.bf16.mxu0 0
      %2165 = vmatmul.mubr.bf16.gmra.mrb[0].mxu0 %v1189
      %v2166 = vpop.f32.mrb[0].mxu0
      %v2167 = vadd.f32 0.0, %v2166
      %v2168 = vpop.f32.mrb[0].mxu0
      %v2169 = vpop.f32.mrb[0].mxu0
      %v2170 = vadd.f32 0.0, %v2169
      %v2171 = vpop.f32.mrb[0].mxu0
      %2172 = vmatprep.mubr.bf16.mxu0 0
      %2173 = vmatmul.mubr.bf16.gmra.mrb[0].mxu0 %v1192
      %v2174 = vpop.f32.mrb[0].mxu0
      %v2175 = vadd.f32 0.0, %v2174
      %v2176 = vpop.f32.mrb[0].mxu0
      %v2177 = vpop.f32.mrb[0].mxu0
      %v2178 = vadd.f32 0.0, %v2177
      %v2179 = vpop.f32.mrb[0].mxu0
      %2180 = vmatprep.mubr.bf16.mxu0 0
      %2181 = vmatmul.mubr.bf16.gmra.mrb[0].mxu0 %v1195
      %v2182 = vpop.f32.mrb[0].mxu0
      %v2183 = vadd.f32 0.0, %v2182
      %v2184 = vpop.f32.mrb[0].mxu0
      %v2185 = vpop.f32.mrb[0].mxu0
      %v2186 = vadd.f32 0.0, %v2185
      %v2187 = vpop.f32.mrb[0].mxu0
      %2188 = vdwg.mxu0
      %v2189 = vrot.slane %v1975, 1
      %v2190 = vrot.slane %v1978, 1
      %v2191 = vrot.slane %v1983, 1
      %v2192 = vrot.slane %v1986, 1
      %v2193 = vrot.slane %v1991, 1
      %v2194 = vrot.slane %v1994, 1
      %v2195 = vrot.slane %v1999, 1
      %v2196 = vrot.slane %v2002, 1
      %v2197 = vrot.slane %v2007, 1
      %v2198 = vrot.slane %v2010, 1
      %v2199 = vrot.slane %v2015, 1
      %v2200 = vrot.slane %v2018, 1
      %v2201 = vrot.slane %v2023, 1
      %v2202 = vrot.slane %v2026, 1
      %v2203 = vrot.slane %v2031, 1
      %v2204 = vrot.slane %v2034, 1
      %v2205 = vrot.slane %v2039, 1
      %v2206 = vrot.slane %v2042, 1
      %v2207 = vrot.slane %v2047, 1
      %v2208 = vrot.slane %v2050, 1
      %v2209 = vrot.slane %v2055, 1
      %v2210 = vrot.slane %v2058, 1
      %v2211 = vrot.slane %v2063, 1
      %v2212 = vrot.slane %v2066, 1
      %v2213 = vrot.slane %v2071, 1
      %v2214 = vrot.slane %v2074, 1
      %v2215 = vrot.slane %v2079, 1
      %v2216 = vrot.slane %v2082, 1
      %v2217 = vrot.slane %v2087, 1
      %v2218 = vrot.slane %v2090, 1
      %v2219 = vrot.slane %v2095, 1
      %v2220 = vrot.slane %v2098, 1
      %v2221 = vrot.slane %v2103, 1
      %v2222 = vrot.slane %v2106, 1
      %v2223 = vrot.slane %v2111, 1
      %v2224 = vrot.slane %v2114, 1
      %v2225 = vrot.slane %v2119, 1
      %v2226 = vrot.slane %v2122, 1
      %v2227 = vrot.slane %v2127, 1
      %v2228 = vrot.slane %v2130, 1
      %v2229 = vrot.slane %v2135, 1
      %v2230 = vrot.slane %v2138, 1
      %v2231 = vrot.slane %v2143, 1
      %v2232 = vrot.slane %v2146, 1
      %v2233 = vrot.slane %v2151, 1
      %v2234 = vrot.slane %v2154, 1
      %v2235 = vrot.slane %v2159, 1
      %v2236 = vrot.slane %v2162, 1
      %v2237 = vrot.slane %v2167, 1
      %v2238 = vrot.slane %v2170, 1
      %v2239 = vrot.slane %v2175, 1
      %v2240 = vrot.slane %v2178, 1
      %v2241 = vrot.slane %v2183, 1
      %v2242 = vrot.slane %v2186, 1
      %vm2243 = vcmp.lt.s32.totalorder %v1505, 7
      %v2244 = vsel %vm2243, %v2241, %v2242
      %v2245 = vsel %vm2243, %v2240, %v2241
      %v2246 = vsel %vm2243, %v2239, %v2240
      %v2247 = vsel %vm2243, %v2238, %v2239
      %v2248 = vsel %vm2243, %v2237, %v2238
      %v2249 = vsel %vm2243, %v2236, %v2237
      %v2250 = vsel %vm2243, %v2235, %v2236
      %v2251 = vsel %vm2243, %v2234, %v2235
      %v2252 = vsel %vm2243, %v2233, %v2234
      %v2253 = vsel %vm2243, %v2232, %v2233
      %v2254 = vsel %vm2243, %v2231, %v2232
      %v2255 = vsel %vm2243, %v2230, %v2231
      %v2256 = vsel %vm2243, %v2229, %v2230
      %v2257 = vsel %vm2243, %v2228, %v2229
      %v2258 = vsel %vm2243, %v2227, %v2228
      %v2259 = vsel %vm2243, %v2226, %v2227
      %v2260 = vsel %vm2243, %v2225, %v2226
      %v2261 = vsel %vm2243, %v2224, %v2225
      %v2262 = vsel %vm2243, %v2223, %v2224
      %v2263 = vsel %vm2243, %v2222, %v2223
      %v2264 = vsel %vm2243, %v2221, %v2222
      %v2265 = vsel %vm2243, %v2220, %v2221
      %v2266 = vsel %vm2243, %v2219, %v2220
      %v2267 = vsel %vm2243, %v2218, %v2219
      %v2268 = vsel %vm2243, %v2217, %v2218
      %v2269 = vsel %vm2243, %v2216, %v2217
      %v2270 = vsel %vm2243, %v2215, %v2216
      %v2271 = vsel %vm2243, %v2214, %v2215
      %v2272 = vsel %vm2243, %v2213, %v2214
      %v2273 = vsel %vm2243, %v2212, %v2213
      %v2274 = vsel %vm2243, %v2211, %v2212
      %v2275 = vsel %vm2243, %v2210, %v2211
      %v2276 = vsel %vm2243, %v2209, %v2210
      %v2277 = vsel %vm2243, %v2208, %v2209
      %v2278 = vsel %vm2243, %v2207, %v2208
      %v2279 = vsel %vm2243, %v2206, %v2207
      %v2280 = vsel %vm2243, %v2205, %v2206
      %v2281 = vsel %vm2243, %v2204, %v2205
      %v2282 = vsel %vm2243, %v2203, %v2204
      %v2283 = vsel %vm2243, %v2202, %v2203
      %v2284 = vsel %vm2243, %v2201, %v2202
      %v2285 = vsel %vm2243, %v2200, %v2201
      %v2286 = vsel %vm2243, %v2199, %v2200
      %v2287 = vsel %vm2243, %v2198, %v2199
      %v2288 = vsel %vm2243, %v2197, %v2198
      %v2289 = vsel %vm2243, %v2196, %v2197
      %v2290 = vsel %vm2243, %v2195, %v2196
      %v2291 = vsel %vm2243, %v2194, %v2195
      %v2292 = vsel %vm2243, %v2193, %v2194
      %v2293 = vsel %vm2243, %v2192, %v2193
      %v2294 = vsel %vm2243, %v2191, %v2192
      %v2295 = vsel %vm2243, %v2190, %v2191
      %v2296 = vsel %vm2243, %v2189, %v2190
      %v2297 = vsel %vm2243, %v2242, %v2189
      %v2298 = vadd.f32 %v1875, %v2296
      %v2299 = vadd.f32 %v1876, %v2295
      %v2300 = vadd.f32 %v1877, %v2294
      %v2301 = vadd.f32 %v1878, %v2293
      %v2302 = vadd.f32 %v1879, %v2292
      %v2303 = vadd.f32 %v1880, %v2291
      %v2304 = vadd.f32 %v1881, %v2290
      %v2305 = vadd.f32 %v1882, %v2289
      %v2306 = vadd.f32 %v1883, %v2288
      %v2307 = vadd.f32 %v1884, %v2287
      %v2308 = vadd.f32 %v1885, %v2286
      %v2309 = vadd.f32 %v1886, %v2285
      %v2310 = vadd.f32 %v1887, %v2284
      %v2311 = vadd.f32 %v1888, %v2283
      %v2312 = vadd.f32 %v1889, %v2282
      %v2313 = vadd.f32 %v1890, %v2281
      %v2314 = vadd.f32 %v1891, %v2280
      %v2315 = vadd.f32 %v1892, %v2279
      %v2316 = vadd.f32 %v1893, %v2278
      %v2317 = vadd.f32 %v1894, %v2277
      %v2318 = vadd.f32 %v1895, %v2276
      %v2319 = vadd.f32 %v1896, %v2275
      %v2320 = vadd.f32 %v1897, %v2274
      %v2321 = vadd.f32 %v1898, %v2273
      %v2322 = vadd.f32 %v1899, %v2272
      %v2323 = vadd.f32 %v1900, %v2271
      %v2324 = vadd.f32 %v1901, %v2270
      %v2325 = vadd.f32 %v1902, %v2269
      %v2326 = vadd.f32 %v1903, %v2268
      %v2327 = vadd.f32 %v1904, %v2267
      %v2328 = vadd.f32 %v1905, %v2266
      %v2329 = vadd.f32 %v1906, %v2265
      %v2330 = vadd.f32 %v1907, %v2264
      %v2331 = vadd.f32 %v1908, %v2263
      %v2332 = vadd.f32 %v1909, %v2262
      %v2333 = vadd.f32 %v1910, %v2261
      %v2334 = vadd.f32 %v1911, %v2260
      %v2335 = vadd.f32 %v1912, %v2259
      %v2336 = vadd.f32 %v1913, %v2258
      %v2337 = vadd.f32 %v1914, %v2257
      %v2338 = vadd.f32 %v1915, %v2256
      %v2339 = vadd.f32 %v1916, %v2255
      %v2340 = vadd.f32 %v1917, %v2254
      %v2341 = vadd.f32 %v1918, %v2253
      %v2342 = vadd.f32 %v1919, %v2252
      %v2343 = vadd.f32 %v1920, %v2251
      %v2344 = vadd.f32 %v1921, %v2250
      %v2345 = vadd.f32 %v1922, %v2249
      %v2346 = vadd.f32 %v1923, %v2248
      %v2347 = vadd.f32 %v1924, %v2247
      %v2348 = vadd.f32 %v1925, %v2246
      %v2349 = vadd.f32 %v1926, %v2245
      %v2350 = vadd.f32 %v1927, %v2244
      %v2351 = vadd.f32 %v1928, %v2297
      %v2352 = vld [vmem:[%s2] sm:$0x1]
      %v2354 = vlaneseq
      %v2355 = vshrl.u32 %v2354, 7
      %v2356 = vsub.s32 0, %v2355
      %v2357 = vrot.slane %v2352, %v2356
      %v2359 = vadd.f32 %v2298, %v2357
      %v2360 = vadd.f32 %v2299, %v2357
      %v2361 = vadd.f32 %v2300, %v2357
      %v2362 = vadd.f32 %v2301, %v2357
      %v2363 = vadd.f32 %v2302, %v2357
      %v2364 = vadd.f32 %v2303, %v2357
      %v2365 = vadd.f32 %v2304, %v2357
      %v2366 = vadd.f32 %v2305, %v2357
      %v2367 = vadd.f32 %v2306, %v2357
      %v2368 = vadd.f32 %v2307, %v2357
      %v2369 = vadd.f32 %v2308, %v2357
      %v2370 = vadd.f32 %v2309, %v2357
      %v2371 = vadd.f32 %v2310, %v2357
      %v2372 = vadd.f32 %v2311, %v2357
      %v2373 = vadd.f32 %v2312, %v2357
      %v2374 = vadd.f32 %v2313, %v2357
      %v2375 = vadd.f32 %v2314, %v2357
      %v2376 = vadd.f32 %v2315, %v2357
      %v2377 = vadd.f32 %v2316, %v2357
      %v2378 = vadd.f32 %v2317, %v2357
      %v2379 = vadd.f32 %v2318, %v2357
      %v2380 = vadd.f32 %v2319, %v2357
      %v2381 = vadd.f32 %v2320, %v2357
      %v2382 = vadd.f32 %v2321, %v2357
      %v2383 = vadd.f32 %v2322, %v2357
      %v2384 = vadd.f32 %v2323, %v2357
      %v2385 = vadd.f32 %v2324, %v2357
      %v2386 = vadd.f32 %v2325, %v2357
      %v2387 = vadd.f32 %v2326, %v2357
      %v2388 = vadd.f32 %v2327, %v2357
      %v2389 = vadd.f32 %v2328, %v2357
      %v2390 = vadd.f32 %v2329, %v2357
      %v2391 = vadd.f32 %v2330, %v2357
      %v2392 = vadd.f32 %v2331, %v2357
      %v2393 = vadd.f32 %v2332, %v2357
      %v2394 = vadd.f32 %v2333, %v2357
      %v2395 = vadd.f32 %v2334, %v2357
      %v2396 = vadd.f32 %v2335, %v2357
      %v2397 = vadd.f32 %v2336, %v2357
      %v2398 = vadd.f32 %v2337, %v2357
      %v2399 = vadd.f32 %v2338, %v2357
      %v2400 = vadd.f32 %v2339, %v2357
      %v2401 = vadd.f32 %v2340, %v2357
      %v2402 = vadd.f32 %v2341, %v2357
      %v2403 = vadd.f32 %v2342, %v2357
      %v2404 = vadd.f32 %v2343, %v2357
      %v2405 = vadd.f32 %v2344, %v2357
      %v2406 = vadd.f32 %v2345, %v2357
      %v2407 = vadd.f32 %v2346, %v2357
      %v2408 = vadd.f32 %v2347, %v2357
      %v2409 = vadd.f32 %v2348, %v2357
      %v2410 = vadd.f32 %v2349, %v2357
      %v2411 = vadd.f32 %v2350, %v2357
      %v2412 = vadd.f32 %v2351, %v2357
      %v2413 = vmax.f32 %v2359, 0.0
      %v2414 = vmax.f32 %v2360, 0.0
      %v2415 = vmax.f32 %v2361, 0.0
      %v2416 = vmax.f32 %v2362, 0.0
      %v2417 = vmax.f32 %v2363, 0.0
      %v2418 = vmax.f32 %v2364, 0.0
      %v2419 = vmax.f32 %v2365, 0.0
      %v2420 = vmax.f32 %v2366, 0.0
      %v2421 = vmax.f32 %v2367, 0.0
      %v2422 = vmax.f32 %v2368, 0.0
      %v2423 = vmax.f32 %v2369, 0.0
      %v2424 = vmax.f32 %v2370, 0.0
      %v2425 = vmax.f32 %v2371, 0.0
      %v2426 = vmax.f32 %v2372, 0.0
      %v2427 = vmax.f32 %v2373, 0.0
      %v2428 = vmax.f32 %v2374, 0.0
      %v2429 = vmax.f32 %v2375, 0.0
      %v2430 = vmax.f32 %v2376, 0.0
      %v2431 = vmax.f32 %v2377, 0.0
      %v2432 = vmax.f32 %v2378, 0.0
      %v2433 = vmax.f32 %v2379, 0.0
      %v2434 = vmax.f32 %v2380, 0.0
      %v2435 = vmax.f32 %v2381, 0.0
      %v2436 = vmax.f32 %v2382, 0.0
      %v2437 = vmax.f32 %v2383, 0.0
      %v2438 = vmax.f32 %v2384, 0.0
      %v2439 = vmax.f32 %v2385, 0.0
      %v2440 = vmax.f32 %v2386, 0.0
      %v2441 = vmax.f32 %v2387, 0.0
      %v2442 = vmax.f32 %v2388, 0.0
      %v2443 = vmax.f32 %v2389, 0.0
      %v2444 = vmax.f32 %v2390, 0.0
      %v2445 = vmax.f32 %v2391, 0.0
      %v2446 = vmax.f32 %v2392, 0.0
      %v2447 = vmax.f32 %v2393, 0.0
      %v2448 = vmax.f32 %v2394, 0.0
      %v2449 = vmax.f32 %v2395, 0.0
      %v2450 = vmax.f32 %v2396, 0.0
      %v2451 = vmax.f32 %v2397, 0.0
      %v2452 = vmax.f32 %v2398, 0.0
      %v2453 = vmax.f32 %v2399, 0.0
      %v2454 = vmax.f32 %v2400, 0.0
      %v2455 = vmax.f32 %v2401, 0.0
      %v2456 = vmax.f32 %v2402, 0.0
      %v2457 = vmax.f32 %v2403, 0.0
      %v2458 = vmax.f32 %v2404, 0.0
      %v2459 = vmax.f32 %v2405, 0.0
      %v2460 = vmax.f32 %v2406, 0.0
      %v2461 = vmax.f32 %v2407, 0.0
      %v2462 = vmax.f32 %v2408, 0.0
      %v2463 = vmax.f32 %v2409, 0.0
      %v2464 = vmax.f32 %v2410, 0.0
      %v2465 = vmax.f32 %v2411, 0.0
      %v2466 = vmax.f32 %v2412, 0.0
      %v2467 = vadd.s32 %v1505, 8
      %v2468 = vadd.s32 %v1505, 16
      %s2469 = smul.u32 %s21, 16
      %s2470 = ssub.s32 %s2469, 1
      %v2471 = vstv %s2470
      %v2472 = vadd.s32 %v2471, 1
      %v2473 = vadd.s32 %v2471, 2
      %v2474 = vadd.s32 %v2471, 3
      %v2475 = vadd.s32 %v2471, 4
      %v2476 = vadd.s32 %v2471, 5
      %v2477 = vadd.s32 %v2471, 6
      %v2478 = vadd.s32 %v2471, 7
      %v2479 = vadd.s32 %v2471, 8
      %v2480 = vadd.s32 %v2471, 9
      %v2481 = vadd.s32 %v2471, 10
      %v2482 = vadd.s32 %v2471, 11
      %v2483 = vadd.s32 %v2471, 12
      %v2484 = vadd.s32 %v2471, 13
      %v2485 = vadd.s32 %v2471, 14
      %v2486 = vadd.s32 %v2471, 15
      %v2487 = vadd.s32 %v2471, 16
      %v2488 = vadd.s32 %v2471, 17
      %vm2489 = vcmp.ge.s32.totalorder %v2471, 0
      %vm2490 = vcmp.ge.s32.totalorder %v2472, 0
      %vm2491 = vcmp.ge.s32.totalorder %v2473, 0
      %vm2492 = vcmp.ge.s32.totalorder %v2474, 0
      %vm2493 = vcmp.ge.s32.totalorder %v2475, 0
      %vm2494 = vcmp.ge.s32.totalorder %v2476, 0
      %vm2495 = vcmp.ge.s32.totalorder %v2477, 0
      %vm2496 = vcmp.ge.s32.totalorder %v2478, 0
      %vm2497 = vcmp.ge.s32.totalorder %v2479, 0
      %vm2498 = vcmp.ge.s32.totalorder %v2480, 0
      %vm2499 = vcmp.ge.s32.totalorder %v2481, 0
      %vm2500 = vcmp.ge.s32.totalorder %v2482, 0
      %vm2501 = vcmp.ge.s32.totalorder %v2483, 0
      %vm2502 = vcmp.ge.s32.totalorder %v2484, 0
      %vm2503 = vcmp.ge.s32.totalorder %v2485, 0
      %vm2504 = vcmp.ge.s32.totalorder %v2486, 0
      %vm2505 = vcmp.ge.s32.totalorder %v2487, 0
      %vm2506 = vcmp.ge.s32.totalorder %v2488, 0
      %vm2507 = vcmp.lt.s32.totalorder %v2471, 16
      %vm2508 = vcmp.lt.s32.totalorder %v2472, 16
      %vm2509 = vcmp.lt.s32.totalorder %v2473, 16
      %vm2510 = vcmp.lt.s32.totalorder %v2474, 16
      %vm2511 = vcmp.lt.s32.totalorder %v2475, 16
      %vm2512 = vcmp.lt.s32.totalorder %v2476, 16
      %vm2513 = vcmp.lt.s32.totalorder %v2477, 16
      %vm2514 = vcmp.lt.s32.totalorder %v2478, 16
      %vm2515 = vcmp.lt.s32.totalorder %v2479, 16
      %vm2516 = vcmp.lt.s32.totalorder %v2480, 16
      %vm2517 = vcmp.lt.s32.totalorder %v2481, 16
      %vm2518 = vcmp.lt.s32.totalorder %v2482, 16
      %vm2519 = vcmp.lt.s32.totalorder %v2483, 16
      %vm2520 = vcmp.lt.s32.totalorder %v2484, 16
      %vm2521 = vcmp.lt.s32.totalorder %v2485, 16
      %vm2522 = vcmp.lt.s32.totalorder %v2486, 16
      %vm2523 = vcmp.lt.s32.totalorder %v2487, 16
      %vm2524 = vcmp.lt.s32.totalorder %v2488, 16
      %vm2525 = vmand %vm2489, %vm2507
      %vm2526 = vmand %vm2490, %vm2508
      %vm2527 = vmand %vm2491, %vm2509
      %vm2528 = vmand %vm2492, %vm2510
      %vm2529 = vmand %vm2493, %vm2511
      %vm2530 = vmand %vm2494, %vm2512
      %vm2531 = vmand %vm2495, %vm2513
      %vm2532 = vmand %vm2496, %vm2514
      %vm2533 = vmand %vm2497, %vm2515
      %vm2534 = vmand %vm2498, %vm2516
      %vm2535 = vmand %vm2499, %vm2517
      %vm2536 = vmand %vm2500, %vm2518
      %vm2537 = vmand %vm2501, %vm2519
      %vm2538 = vmand %vm2502, %vm2520
      %vm2539 = vmand %vm2503, %vm2521
      %vm2540 = vmand %vm2504, %vm2522
      %vm2541 = vmand %vm2505, %vm2523
      %vm2542 = vmand %vm2506, %vm2524
      %vm2543 = vcmp.ge.s32.totalorder %v1505, 1
      %vm2544 = vcmp.ge.s32.totalorder %v2467, 1
      %vm2545 = vcmp.ge.s32.totalorder %v2468, 1
      %vm2546 = vmand %vm2525, %vm2543
      %vm2547 = vmand %vm2525, %vm2544
      %vm2548 = vmand %vm2525, %vm2545
      %vm2549 = vmand %vm2526, %vm2543
      %vm2550 = vmand %vm2526, %vm2544
      %vm2551 = vmand %vm2526, %vm2545
      %vm2552 = vmand %vm2527, %vm2543
      %vm2553 = vmand %vm2527, %vm2544
      %vm2554 = vmand %vm2527, %vm2545
      %vm2555 = vmand %vm2528, %vm2543
      %vm2556 = vmand %vm2528, %vm2544
      %vm2557 = vmand %vm2528, %vm2545
      %vm2558 = vmand %vm2529, %vm2543
      %vm2559 = vmand %vm2529, %vm2544
      %vm2560 = vmand %vm2529, %vm2545
      %vm2561 = vmand %vm2530, %vm2543
      %vm2562 = vmand %vm2530, %vm2544
      %vm2563 = vmand %vm2530, %vm2545
      %vm2564 = vmand %vm2531, %vm2543
      %vm2565 = vmand %vm2531, %vm2544
      %vm2566 = vmand %vm2531, %vm2545
      %vm2567 = vmand %vm2532, %vm2543
      %vm2568 = vmand %vm2532, %vm2544
      %vm2569 = vmand %vm2532, %vm2545
      %vm2570 = vmand %vm2533, %vm2543
      %vm2571 = vmand %vm2533, %vm2544
      %vm2572 = vmand %vm2533, %vm2545
      %vm2573 = vmand %vm2534, %vm2543
      %vm2574 = vmand %vm2534, %vm2544
      %vm2575 = vmand %vm2534, %vm2545
      %vm2576 = vmand %vm2535, %vm2543
      %vm2577 = vmand %vm2535, %vm2544
      %vm2578 = vmand %vm2535, %vm2545
      %vm2579 = vmand %vm2536, %vm2543
      %vm2580 = vmand %vm2536, %vm2544
      %vm2581 = vmand %vm2536, %vm2545
      %vm2582 = vmand %vm2537, %vm2543
      %vm2583 = vmand %vm2537, %vm2544
      %vm2584 = vmand %vm2537, %vm2545
      %vm2585 = vmand %vm2538, %vm2543
      %vm2586 = vmand %vm2538, %vm2544
      %vm2587 = vmand %vm2538, %vm2545
      %vm2588 = vmand %vm2539, %vm2543
      %vm2589 = vmand %vm2539, %vm2544
      %vm2590 = vmand %vm2539, %vm2545
      %vm2591 = vmand %vm2540, %vm2543
      %vm2592 = vmand %vm2540, %vm2544
      %vm2593 = vmand %vm2540, %vm2545
      %vm2594 = vmand %vm2541, %vm2543
      %vm2595 = vmand %vm2541, %vm2544
      %vm2596 = vmand %vm2541, %vm2545
      %vm2597 = vmand %vm2542, %vm2543
      %vm2598 = vmand %vm2542, %vm2544
      %vm2599 = vmand %vm2542, %vm2545
      %vm2600 = vcmp.le.s32.totalorder %v1505, 16
      %vm2601 = vcmp.le.s32.totalorder %v2467, 16
      %vm2602 = vcmp.le.s32.totalorder %v2468, 16
      %vm2603 = vmand %vm2546, %vm2600
      %vm2604 = vmand %vm2547, %vm2601
      %vm2605 = vmand %vm2548, %vm2602
      %vm2606 = vmand %vm2549, %vm2600
      %vm2607 = vmand %vm2550, %vm2601
      %vm2608 = vmand %vm2551, %vm2602
      %vm2609 = vmand %vm2552, %vm2600
      %vm2610 = vmand %vm2553, %vm2601
      %vm2611 = vmand %vm2554, %vm2602
      %vm2612 = vmand %vm2555, %vm2600
      %vm2613 = vmand %vm2556, %vm2601
      %vm2614 = vmand %vm2557, %vm2602
      %vm2615 = vmand %vm2558, %vm2600
      %vm2616 = vmand %vm2559, %vm2601
      %vm2617 = vmand %vm2560, %vm2602
      %vm2618 = vmand %vm2561, %vm2600
      %vm2619 = vmand %vm2562, %vm2601
      %vm2620 = vmand %vm2563, %vm2602
      %vm2621 = vmand %vm2564, %vm2600
      %vm2622 = vmand %vm2565, %vm2601
      %vm2623 = vmand %vm2566, %vm2602
      %vm2624 = vmand %vm2567, %vm2600
      %vm2625 = vmand %vm2568, %vm2601
      %vm2626 = vmand %vm2569, %vm2602
      %vm2627 = vmand %vm2570, %vm2600
      %vm2628 = vmand %vm2571, %vm2601
      %vm2629 = vmand %vm2572, %vm2602
      %vm2630 = vmand %vm2573, %vm2600
      %vm2631 = vmand %vm2574, %vm2601
      %vm2632 = vmand %vm2575, %vm2602
      %vm2633 = vmand %vm2576, %vm2600
      %vm2634 = vmand %vm2577, %vm2601
      %vm2635 = vmand %vm2578, %vm2602
      %vm2636 = vmand %vm2579, %vm2600
      %vm2637 = vmand %vm2580, %vm2601
      %vm2638 = vmand %vm2581, %vm2602
      %vm2639 = vmand %vm2582, %vm2600
      %vm2640 = vmand %vm2583, %vm2601
      %vm2641 = vmand %vm2584, %vm2602
      %vm2642 = vmand %vm2585, %vm2600
      %vm2643 = vmand %vm2586, %vm2601
      %vm2644 = vmand %vm2587, %vm2602
      %vm2645 = vmand %vm2588, %vm2600
      %vm2646 = vmand %vm2589, %vm2601
      %vm2647 = vmand %vm2590, %vm2602
      %vm2648 = vmand %vm2591, %vm2600
      %vm2649 = vmand %vm2592, %vm2601
      %vm2650 = vmand %vm2593, %vm2602
      %vm2651 = vmand %vm2594, %vm2600
      %vm2652 = vmand %vm2595, %vm2601
      %vm2653 = vmand %vm2596, %vm2602
      %vm2654 = vmand %vm2597, %vm2600
      %vm2655 = vmand %vm2598, %vm2601
      %vm2656 = vmand %vm2599, %vm2602
      %v2657 = vsel %vm2603, 1, 0
      %v2658 = vsel %vm2604, 1, 0
      %v2659 = vsel %vm2605, 1, 0
      %v2660 = vsel %vm2606, 1, 0
      %v2661 = vsel %vm2607, 1, 0
      %v2662 = vsel %vm2608, 1, 0
      %v2663 = vsel %vm2609, 1, 0
      %v2664 = vsel %vm2610, 1, 0
      %v2665 = vsel %vm2611, 1, 0
      %v2666 = vsel %vm2612, 1, 0
      %v2667 = vsel %vm2613, 1, 0
      %v2668 = vsel %vm2614, 1, 0
      %v2669 = vsel %vm2615, 1, 0
      %v2670 = vsel %vm2616, 1, 0
      %v2671 = vsel %vm2617, 1, 0
      %v2672 = vsel %vm2618, 1, 0
      %v2673 = vsel %vm2619, 1, 0
      %v2674 = vsel %vm2620, 1, 0
      %v2675 = vsel %vm2621, 1, 0
      %v2676 = vsel %vm2622, 1, 0
      %v2677 = vsel %vm2623, 1, 0
      %v2678 = vsel %vm2624, 1, 0
      %v2679 = vsel %vm2625, 1, 0
      %v2680 = vsel %vm2626, 1, 0
      %v2681 = vsel %vm2627, 1, 0
      %v2682 = vsel %vm2628, 1, 0
      %v2683 = vsel %vm2629, 1, 0
      %v2684 = vsel %vm2630, 1, 0
      %v2685 = vsel %vm2631, 1, 0
      %v2686 = vsel %vm2632, 1, 0
      %v2687 = vsel %vm2633, 1, 0
      %v2688 = vsel %vm2634, 1, 0
      %v2689 = vsel %vm2635, 1, 0
      %v2690 = vsel %vm2636, 1, 0
      %v2691 = vsel %vm2637, 1, 0
      %v2692 = vsel %vm2638, 1, 0
      %v2693 = vsel %vm2639, 1, 0
      %v2694 = vsel %vm2640, 1, 0
      %v2695 = vsel %vm2641, 1, 0
      %v2696 = vsel %vm2642, 1, 0
      %v2697 = vsel %vm2643, 1, 0
      %v2698 = vsel %vm2644, 1, 0
      %v2699 = vsel %vm2645, 1, 0
      %v2700 = vsel %vm2646, 1, 0
      %v2701 = vsel %vm2647, 1, 0
      %v2702 = vsel %vm2648, 1, 0
      %v2703 = vsel %vm2649, 1, 0
      %v2704 = vsel %vm2650, 1, 0
      %v2705 = vsel %vm2651, 1, 0
      %v2706 = vsel %vm2652, 1, 0
      %v2707 = vsel %vm2653, 1, 0
      %v2708 = vsel %vm2654, 1, 0
      %v2709 = vsel %vm2655, 1, 0
      %v2710 = vsel %vm2656, 1, 0
      %vm2711 = vcmp.eq.s32.totalorder %v2657, 1
      %vm2712 = vcmp.eq.s32.totalorder %v2658, 1
      %vm2713 = vcmp.eq.s32.totalorder %v2659, 1
      %vm2714 = vcmp.eq.s32.totalorder %v2660, 1
      %vm2715 = vcmp.eq.s32.totalorder %v2661, 1
      %vm2716 = vcmp.eq.s32.totalorder %v2662, 1
      %vm2717 = vcmp.eq.s32.totalorder %v2663, 1
      %vm2718 = vcmp.eq.s32.totalorder %v2664, 1
      %vm2719 = vcmp.eq.s32.totalorder %v2665, 1
      %vm2720 = vcmp.eq.s32.totalorder %v2666, 1
      %vm2721 = vcmp.eq.s32.totalorder %v2667, 1
      %vm2722 = vcmp.eq.s32.totalorder %v2668, 1
      %vm2723 = vcmp.eq.s32.totalorder %v2669, 1
      %vm2724 = vcmp.eq.s32.totalorder %v2670, 1
      %vm2725 = vcmp.eq.s32.totalorder %v2671, 1
      %vm2726 = vcmp.eq.s32.totalorder %v2672, 1
      %vm2727 = vcmp.eq.s32.totalorder %v2673, 1
      %vm2728 = vcmp.eq.s32.totalorder %v2674, 1
      %vm2729 = vcmp.eq.s32.totalorder %v2675, 1
      %vm2730 = vcmp.eq.s32.totalorder %v2676, 1
      %vm2731 = vcmp.eq.s32.totalorder %v2677, 1
      %vm2732 = vcmp.eq.s32.totalorder %v2678, 1
      %vm2733 = vcmp.eq.s32.totalorder %v2679, 1
      %vm2734 = vcmp.eq.s32.totalorder %v2680, 1
      %vm2735 = vcmp.eq.s32.totalorder %v2681, 1
      %vm2736 = vcmp.eq.s32.totalorder %v2682, 1
      %vm2737 = vcmp.eq.s32.totalorder %v2683, 1
      %vm2738 = vcmp.eq.s32.totalorder %v2684, 1
      %vm2739 = vcmp.eq.s32.totalorder %v2685, 1
      %vm2740 = vcmp.eq.s32.totalorder %v2686, 1
      %vm2741 = vcmp.eq.s32.totalorder %v2687, 1
      %vm2742 = vcmp.eq.s32.totalorder %v2688, 1
      %vm2743 = vcmp.eq.s32.totalorder %v2689, 1
      %vm2744 = vcmp.eq.s32.totalorder %v2690, 1
      %vm2745 = vcmp.eq.s32.totalorder %v2691, 1
      %vm2746 = vcmp.eq.s32.totalorder %v2692, 1
      %vm2747 = vcmp.eq.s32.totalorder %v2693, 1
      %vm2748 = vcmp.eq.s32.totalorder %v2694, 1
      %vm2749 = vcmp.eq.s32.totalorder %v2695, 1
      %vm2750 = vcmp.eq.s32.totalorder %v2696, 1
      %vm2751 = vcmp.eq.s32.totalorder %v2697, 1
      %vm2752 = vcmp.eq.s32.totalorder %v2698, 1
      %vm2753 = vcmp.eq.s32.totalorder %v2699, 1
      %vm2754 = vcmp.eq.s32.totalorder %v2700, 1
      %vm2755 = vcmp.eq.s32.totalorder %v2701, 1
      %vm2756 = vcmp.eq.s32.totalorder %v2702, 1
      %vm2757 = vcmp.eq.s32.totalorder %v2703, 1
      %vm2758 = vcmp.eq.s32.totalorder %v2704, 1
      %vm2759 = vcmp.eq.s32.totalorder %v2705, 1
      %vm2760 = vcmp.eq.s32.totalorder %v2706, 1
      %vm2761 = vcmp.eq.s32.totalorder %v2707, 1
      %vm2762 = vcmp.eq.s32.totalorder %v2708, 1
      %vm2763 = vcmp.eq.s32.totalorder %v2709, 1
      %vm2764 = vcmp.eq.s32.totalorder %v2710, 1
      %v2765 = vsel %vm2711, %v2413, 0.0
      %v2766 = vsel %vm2712, %v2414, 0.0
      %v2767 = vsel %vm2713, %v2415, 0.0
      %v2768 = vsel %vm2714, %v2416, 0.0
      %v2769 = vsel %vm2715, %v2417, 0.0
      %v2770 = vsel %vm2716, %v2418, 0.0
      %v2771 = vsel %vm2717, %v2419, 0.0
      %v2772 = vsel %vm2718, %v2420, 0.0
      %v2773 = vsel %vm2719, %v2421, 0.0
      %v2774 = vsel %vm2720, %v2422, 0.0
      %v2775 = vsel %vm2721, %v2423, 0.0
      %v2776 = vsel %vm2722, %v2424, 0.0
      %v2777 = vsel %vm2723, %v2425, 0.0
      %v2778 = vsel %vm2724, %v2426, 0.0
      %v2779 = vsel %vm2725, %v2427, 0.0
      %v2780 = vsel %vm2726, %v2428, 0.0
      %v2781 = vsel %vm2727, %v2429, 0.0
      %v2782 = vsel %vm2728, %v2430, 0.0
      %v2783 = vsel %vm2729, %v2431, 0.0
      %v2784 = vsel %vm2730, %v2432, 0.0
      %v2785 = vsel %vm2731, %v2433, 0.0
      %v2786 = vsel %vm2732, %v2434, 0.0
      %v2787 = vsel %vm2733, %v2435, 0.0
      %v2788 = vsel %vm2734, %v2436, 0.0
      %v2789 = vsel %vm2735, %v2437, 0.0
      %v2790 = vsel %vm2736, %v2438, 0.0
      %v2791 = vsel %vm2737, %v2439, 0.0
      %v2792 = vsel %vm2738, %v2440, 0.0
      %v2793 = vsel %vm2739, %v2441, 0.0
      %v2794 = vsel %vm2740, %v2442, 0.0
      %v2795 = vsel %vm2741, %v2443, 0.0
      %v2796 = vsel %vm2742, %v2444, 0.0
      %v2797 = vsel %vm2743, %v2445, 0.0
      %v2798 = vsel %vm2744, %v2446, 0.0
      %v2799 = vsel %vm2745, %v2447, 0.0
      %v2800 = vsel %vm2746, %v2448, 0.0
      %v2801 = vsel %vm2747, %v2449, 0.0
      %v2802 = vsel %vm2748, %v2450, 0.0
      %v2803 = vsel %vm2749, %v2451, 0.0
      %v2804 = vsel %vm2750, %v2452, 0.0
      %v2805 = vsel %vm2751, %v2453, 0.0
      %v2806 = vsel %vm2752, %v2454, 0.0
      %v2807 = vsel %vm2753, %v2455, 0.0
      %v2808 = vsel %vm2754, %v2456, 0.0
      %v2809 = vsel %vm2755, %v2457, 0.0
      %v2810 = vsel %vm2756, %v2458, 0.0
      %v2811 = vsel %vm2757, %v2459, 0.0
      %v2812 = vsel %vm2758, %v2460, 0.0
      %v2813 = vsel %vm2759, %v2461, 0.0
      %v2814 = vsel %vm2760, %v2462, 0.0
      %v2815 = vsel %vm2761, %v2463, 0.0
      %v2816 = vsel %vm2762, %v2464, 0.0
      %v2817 = vsel %vm2763, %v2465, 0.0
      %v2818 = vsel %vm2764, %v2466, 0.0
      %2819 = vst.msk [vmem:[#allocation3] sm:$0xff] %vm1026, %v2765
      %2820 = vst.msk [vmem:[#allocation3 + $0x8] sm:$0xff] %vm1026, %v2766
      %2821 = vst.msk [vmem:[#allocation3 + $0x10] sm:$0xff] %vm1026, %v2767
      %2822 = vst.msk [vmem:[#allocation3 + $0x18] sm:$0xff] %vm1026, %v2768
      %2823 = vst.msk [vmem:[#allocation3 + $0x20] sm:$0xff] %vm1026, %v2769
      %2824 = vst.msk [vmem:[#allocation3 + $0x28] sm:$0xff] %vm1026, %v2770
      %2825 = vst.msk [vmem:[#allocation3 + $0x30] sm:$0xff] %vm1026, %v2771
      %2826 = vst.msk [vmem:[#allocation3 + $0x38] sm:$0xff] %vm1026, %v2772
      %2827 = vst.msk [vmem:[#allocation3 + $0x40] sm:$0xff] %vm1026, %v2773
      %2828 = vst.msk [vmem:[#allocation3 + $0x48] sm:$0xff] %vm1026, %v2774
      %2829 = vst.msk [vmem:[#allocation3 + $0x50] sm:$0xff] %vm1026, %v2775
      %2830 = vst.msk [vmem:[#allocation3 + $0x58] sm:$0xff] %vm1026, %v2776
      %2831 = vst.msk [vmem:[#allocation3 + $0x60] sm:$0xff] %vm1026, %v2777
      %2832 = vst.msk [vmem:[#allocation3 + $0x68] sm:$0xff] %vm1026, %v2778
      %2833 = vst.msk [vmem:[#allocation3 + $0x70] sm:$0xff] %vm1026, %v2779
      %2834 = vst.msk [vmem:[#allocation3 + $0x78] sm:$0xff] %vm1026, %v2780
      %2835 = vst.msk [vmem:[#allocation3 + $0x80] sm:$0xff] %vm1026, %v2781
      %2836 = vst.msk [vmem:[#allocation3 + $0x88] sm:$0xff] %vm1026, %v2782
      %2837 = vst.msk [vmem:[#allocation3 + $0x90] sm:$0xff] %vm1026, %v2783
      %2838 = vst.msk [vmem:[#allocation3 + $0x98] sm:$0xff] %vm1026, %v2784
      %2839 = vst.msk [vmem:[#allocation3 + $0xa0] sm:$0xff] %vm1026, %v2785
      %2840 = vst.msk [vmem:[#allocation3 + $0xa8] sm:$0xff] %vm1026, %v2786
      %2841 = vst.msk [vmem:[#allocation3 + $0xb0] sm:$0xff] %vm1026, %v2787
      %2842 = vst.msk [vmem:[#allocation3 + $0xb8] sm:$0xff] %vm1026, %v2788
      %2843 = vst.msk [vmem:[#allocation3 + $0xc0] sm:$0xff] %vm1026, %v2789
      %2844 = vst.msk [vmem:[#allocation3 + $0xc8] sm:$0xff] %vm1026, %v2790
      %2845 = vst.msk [vmem:[#allocation3 + $0xd0] sm:$0xff] %vm1026, %v2791
      %2846 = vst.msk [vmem:[#allocation3 + $0xd8] sm:$0xff] %vm1026, %v2792
      %2847 = vst.msk [vmem:[#allocation3 + $0xe0] sm:$0xff] %vm1026, %v2793
      %2848 = vst.msk [vmem:[#allocation3 + $0xe8] sm:$0xff] %vm1026, %v2794
      %2849 = vst.msk [vmem:[#allocation3 + $0xf0] sm:$0xff] %vm1026, %v2795
      %2850 = vst.msk [vmem:[#allocation3 + $0xf8] sm:$0xff] %vm1026, %v2796
      %2851 = vst.msk [vmem:[#allocation3 + $0x100] sm:$0xff] %vm1026, %v2797
      %2852 = vst.msk [vmem:[#allocation3 + $0x108] sm:$0xff] %vm1026, %v2798
      %2853 = vst.msk [vmem:[#allocation3 + $0x110] sm:$0xff] %vm1026, %v2799
      %2854 = vst.msk [vmem:[#allocation3 + $0x118] sm:$0xff] %vm1026, %v2800
      %2855 = vst.msk [vmem:[#allocation3 + $0x120] sm:$0xff] %vm1026, %v2801
      %2856 = vst.msk [vmem:[#allocation3 + $0x128] sm:$0xff] %vm1026, %v2802
      %2857 = vst.msk [vmem:[#allocation3 + $0x130] sm:$0xff] %vm1026, %v2803
      %2858 = vst.msk [vmem:[#allocation3 + $0x138] sm:$0xff] %vm1026, %v2804
      %2859 = vst.msk [vmem:[#allocation3 + $0x140] sm:$0xff] %vm1026, %v2805
      %2860 = vst.msk [vmem:[#allocation3 + $0x148] sm:$0xff] %vm1026, %v2806
      %2861 = vst.msk [vmem:[#allocation3 + $0x150] sm:$0xff] %vm1026, %v2807
      %2862 = vst.msk [vmem:[#allocation3 + $0x158] sm:$0xff] %vm1026, %v2808
      %2863 = vst.msk [vmem:[#allocation3 + $0x160] sm:$0xff] %vm1026, %v2809
      %2864 = vst.msk [vmem:[#allocation3 + $0x168] sm:$0xff] %vm1026, %v2810
      %2865 = vst.msk [vmem:[#allocation3 + $0x170] sm:$0xff] %vm1026, %v2811
      %2866 = vst.msk [vmem:[#allocation3 + $0x178] sm:$0xff] %vm1026, %v2812
      %2867 = vst.msk [vmem:[#allocation3 + $0x180] sm:$0xff] %vm1026, %v2813
      %2868 = vst.msk [vmem:[#allocation3 + $0x188] sm:$0xff] %vm1026, %v2814
      %2869 = vst.msk [vmem:[#allocation3 + $0x190] sm:$0xff] %vm1026, %v2815
      %2870 = vst.msk [vmem:[#allocation3 + $0x198] sm:$0xff] %vm1026, %v2816
      %2871 = vst.msk [vmem:[#allocation3 + $0x1a0] sm:$0xff] %vm1026, %v2817
      %2872 = vst.msk [vmem:[#allocation3 + $0x1a8] sm:$0xff] %vm1026, %v2818
      %v2873 = vld [vmem:[#allocation3] sm:$0xff]
      %v2874 = vld [vmem:[#allocation3 + $0x8] sm:$0xff]
      %v2875 = vld [vmem:[#allocation3 + $0x10] sm:$0xff]
      %v2876 = vld [vmem:[#allocation3 + $0x18] sm:$0xff]
      %v2877 = vld [vmem:[#allocation3 + $0x20] sm:$0xff]
      %v2878 = vld [vmem:[#allocation3 + $0x28] sm:$0xff]
      %v2879 = vld [vmem:[#allocation3 + $0x30] sm:$0xff]
      %v2880 = vld [vmem:[#allocation3 + $0x38] sm:$0xff]
      %v2881 = vld [vmem:[#allocation3 + $0x40] sm:$0xff]
      %v2882 = vld [vmem:[#allocation3 + $0x48] sm:$0xff]
      %v2883 = vld [vmem:[#allocation3 + $0x50] sm:$0xff]
      %v2884 = vld [vmem:[#allocation3 + $0x58] sm:$0xff]
      %v2885 = vld [vmem:[#allocation3 + $0x60] sm:$0xff]
      %v2886 = vld [vmem:[#allocation3 + $0x68] sm:$0xff]
      %v2887 = vld [vmem:[#allocation3 + $0x70] sm:$0xff]
      %v2888 = vld [vmem:[#allocation3 + $0x78] sm:$0xff]
      %v2889 = vld [vmem:[#allocation3 + $0x80] sm:$0xff]
      %v2890 = vld [vmem:[#allocation3 + $0x88] sm:$0xff]
      %v2891 = vld [vmem:[#allocation3 + $0x90] sm:$0xff]
      %v2892 = vld [vmem:[#allocation3 + $0x98] sm:$0xff]
      %v2893 = vld [vmem:[#allocation3 + $0xa0] sm:$0xff]
      %v2894 = vld [vmem:[#allocation3 + $0xa8] sm:$0xff]
      %v2895 = vld [vmem:[#allocation3 + $0xb0] sm:$0xff]
      %v2896 = vld [vmem:[#allocation3 + $0xb8] sm:$0xff]
      %v2897 = vld [vmem:[#allocation3 + $0xc0] sm:$0xff]
      %v2898 = vld [vmem:[#allocation3 + $0xc8] sm:$0xff]
      %v2899 = vld [vmem:[#allocation3 + $0xd0] sm:$0xff]
      %v2900 = vld [vmem:[#allocation3 + $0xd8] sm:$0xff]
      %v2901 = vld [vmem:[#allocation3 + $0xe0] sm:$0xff]
      %v2902 = vld [vmem:[#allocation3 + $0xe8] sm:$0xff]
      %v2903 = vld [vmem:[#allocation3 + $0xf0] sm:$0xff]
      %v2904 = vld [vmem:[#allocation3 + $0xf8] sm:$0xff]
      %v2905 = vld [vmem:[#allocation3 + $0x100] sm:$0xff]
      %v2906 = vld [vmem:[#allocation3 + $0x108] sm:$0xff]
      %v2907 = vld [vmem:[#allocation3 + $0x110] sm:$0xff]
      %v2908 = vld [vmem:[#allocation3 + $0x118] sm:$0xff]
      %v2909 = vld [vmem:[#allocation3 + $0x120] sm:$0xff]
      %v2910 = vld [vmem:[#allocation3 + $0x128] sm:$0xff]
      %v2911 = vld [vmem:[#allocation3 + $0x130] sm:$0xff]
      %v2912 = vld [vmem:[#allocation3 + $0x138] sm:$0xff]
      %v2913 = vld [vmem:[#allocation3 + $0x140] sm:$0xff]
      %v2914 = vld [vmem:[#allocation3 + $0x148] sm:$0xff]
      %v2915 = vld [vmem:[#allocation3 + $0x150] sm:$0xff]
      %v2916 = vld [vmem:[#allocation3 + $0x158] sm:$0xff]
      %v2917 = vld [vmem:[#allocation3 + $0x160] sm:$0xff]
      %v2918 = vld [vmem:[#allocation3 + $0x168] sm:$0xff]
      %v2919 = vld [vmem:[#allocation3 + $0x170] sm:$0xff]
      %v2920 = vld [vmem:[#allocation3 + $0x178] sm:$0xff]
      %s2921 = scalar_lea.vmem [#allocation3], 24
      %v2922 = vld [vmem:[%s2921] sm:$0xff]
      %v2923 = vld [vmem:[%s2921 + $0x8] sm:$0xff]
      %v2924 = vld [vmem:[%s2921 + $0x10] sm:$0xff]
      %v2925 = vld [vmem:[%s2921 + $0x18] sm:$0xff]
      %v2926 = vld [vmem:[%s2921 + $0x20] sm:$0xff]
      %v2927 = vld [vmem:[%s2921 + $0x28] sm:$0xff]
      %v2928 = vld [vmem:[%s2921 + $0x30] sm:$0xff]
      %v2929 = vld [vmem:[%s2921 + $0x38] sm:$0xff]
      %v2930 = vld [vmem:[%s2921 + $0x40] sm:$0xff]
      %v2931 = vld [vmem:[%s2921 + $0x48] sm:$0xff]
      %v2932 = vld [vmem:[%s2921 + $0x50] sm:$0xff]
      %v2933 = vld [vmem:[%s2921 + $0x58] sm:$0xff]
      %v2934 = vld [vmem:[%s2921 + $0x60] sm:$0xff]
      %v2935 = vld [vmem:[%s2921 + $0x68] sm:$0xff]
      %v2936 = vld [vmem:[%s2921 + $0x70] sm:$0xff]
      %v2937 = vld [vmem:[%s2921 + $0x78] sm:$0xff]
      %v2938 = vld [vmem:[%s2921 + $0x80] sm:$0xff]
      %v2939 = vld [vmem:[%s2921 + $0x88] sm:$0xff]
      %v2940 = vld [vmem:[%s2921 + $0x90] sm:$0xff]
      %v2941 = vld [vmem:[%s2921 + $0x98] sm:$0xff]
      %v2942 = vld [vmem:[%s2921 + $0xa0] sm:$0xff]
      %v2943 = vld [vmem:[%s2921 + $0xa8] sm:$0xff]
      %v2944 = vld [vmem:[%s2921 + $0xb0] sm:$0xff]
      %v2945 = vld [vmem:[%s2921 + $0xb8] sm:$0xff]
      %v2946 = vld [vmem:[%s2921 + $0xc0] sm:$0xff]
      %v2947 = vld [vmem:[%s2921 + $0xc8] sm:$0xff]
      %v2948 = vld [vmem:[%s2921 + $0xd0] sm:$0xff]
      %v2949 = vld [vmem:[%s2921 + $0xd8] sm:$0xff]
      %v2950 = vld [vmem:[%s2921 + $0xe0] sm:$0xff]
      %v2951 = vld [vmem:[%s2921 + $0xe8] sm:$0xff]
      %v2952 = vld [vmem:[%s2921 + $0xf0] sm:$0xff]
      %v2953 = vld [vmem:[%s2921 + $0xf8] sm:$0xff]
      %v2954 = vld [vmem:[%s2921 + $0x100] sm:$0xff]
      %v2955 = vld [vmem:[%s2921 + $0x108] sm:$0xff]
      %v2956 = vld [vmem:[%s2921 + $0x110] sm:$0xff]
      %v2957 = vld [vmem:[%s2921 + $0x118] sm:$0xff]
      %v2958 = vld [vmem:[%s2921 + $0x120] sm:$0xff]
      %v2959 = vld [vmem:[%s2921 + $0x128] sm:$0xff]
      %v2960 = vld [vmem:[%s2921 + $0x130] sm:$0xff]
      %v2961 = vld [vmem:[%s2921 + $0x138] sm:$0xff]
      %v2962 = vld [vmem:[%s2921 + $0x140] sm:$0xff]
      %v2963 = vld [vmem:[%s2921 + $0x148] sm:$0xff]
      %v2964 = vld [vmem:[%s2921 + $0x150] sm:$0xff]
      %v2965 = vld [vmem:[%s2921 + $0x158] sm:$0xff]
      %v2966 = vld [vmem:[%s2921 + $0x160] sm:$0xff]
      %v2967 = vld [vmem:[%s2921 + $0x168] sm:$0xff]
      %v2968 = vld [vmem:[%s2921 + $0x170] sm:$0xff]
      %v2969 = vld [vmem:[%s2921 + $0x178] sm:$0xff]
      %s2970 = scalar_lea.vmem [#allocation3], 48
      %v2971 = vld [vmem:[%s2970] sm:$0xff]
      %v2972 = vld [vmem:[%s2970 + $0x8] sm:$0xff]
      %v2973 = vld [vmem:[%s2970 + $0x10] sm:$0xff]
      %v2974 = vld [vmem:[%s2970 + $0x18] sm:$0xff]
      %v2975 = vld [vmem:[%s2970 + $0x20] sm:$0xff]
      %v2976 = vld [vmem:[%s2970 + $0x28] sm:$0xff]
      %v2977 = vld [vmem:[%s2970 + $0x30] sm:$0xff]
      %v2978 = vld [vmem:[%s2970 + $0x38] sm:$0xff]
      %v2979 = vld [vmem:[%s2970 + $0x40] sm:$0xff]
      %v2980 = vld [vmem:[%s2970 + $0x48] sm:$0xff]
      %v2981 = vld [vmem:[%s2970 + $0x50] sm:$0xff]
      %v2982 = vld [vmem:[%s2970 + $0x58] sm:$0xff]
      %v2983 = vld [vmem:[%s2970 + $0x60] sm:$0xff]
      %v2984 = vld [vmem:[%s2970 + $0x68] sm:$0xff]
      %v2985 = vld [vmem:[%s2970 + $0x70] sm:$0xff]
      %v2986 = vld [vmem:[%s2970 + $0x78] sm:$0xff]
      %v2987 = vld [vmem:[%s2970 + $0x80] sm:$0xff]
      %v2988 = vld [vmem:[%s2970 + $0x88] sm:$0xff]
      %v2989 = vld [vmem:[%s2970 + $0x90] sm:$0xff]
      %v2990 = vld [vmem:[%s2970 + $0x98] sm:$0xff]
      %v2991 = vld [vmem:[%s2970 + $0xa0] sm:$0xff]
      %v2992 = vld [vmem:[%s2970 + $0xa8] sm:$0xff]
      %v2993 = vld [vmem:[%s2970 + $0xb0] sm:$0xff]
      %v2994 = vld [vmem:[%s2970 + $0xb8] sm:$0xff]
      %v2995 = vld [vmem:[%s2970 + $0xc0] sm:$0xff]
      %v2996 = vld [vmem:[%s2970 + $0xc8] sm:$0xff]
      %v2997 = vld [vmem:[%s2970 + $0xd0] sm:$0xff]
      %v2998 = vld [vmem:[%s2970 + $0xd8] sm:$0xff]
      %v2999 = vld [vmem:[%s2970 + $0xe0] sm:$0xff]
      %v3000 = vld [vmem:[%s2970 + $0xe8] sm:$0xff]
      %v3001 = vld [vmem:[%s2970 + $0xf0] sm:$0xff]
      %v3002 = vld [vmem:[%s2970 + $0xf8] sm:$0xff]
      %v3003 = vld [vmem:[%s2970 + $0x100] sm:$0xff]
      %v3004 = vld [vmem:[%s2970 + $0x108] sm:$0xff]
      %v3005 = vld [vmem:[%s2970 + $0x110] sm:$0xff]
      %v3006 = vld [vmem:[%s2970 + $0x118] sm:$0xff]
      %v3007 = vld [vmem:[%s2970 + $0x120] sm:$0xff]
      %v3008 = vld [vmem:[%s2970 + $0x128] sm:$0xff]
      %v3009 = vld [vmem:[%s2970 + $0x130] sm:$0xff]
      %v3010 = vld [vmem:[%s2970 + $0x138] sm:$0xff]
      %v3011 = vld [vmem:[%s2970 + $0x140] sm:$0xff]
      %v3012 = vld [vmem:[%s2970 + $0x148] sm:$0xff]
      %v3013 = vld [vmem:[%s2970 + $0x150] sm:$0xff]
      %v3014 = vld [vmem:[%s2970 + $0x158] sm:$0xff]
      %v3015 = vld [vmem:[%s2970 + $0x160] sm:$0xff]
      %v3016 = vld [vmem:[%s2970 + $0x168] sm:$0xff]
      %v3017 = vld [vmem:[%s2970 + $0x170] sm:$0xff]
      %v3018 = vld [vmem:[%s2970 + $0x178] sm:$0xff]
      %3067 = vrot.lane.b32.xlu0 %v2922, 8
      %v3068 = vpop.permute.xlu0 %3067
      %3069 = vrot.lane.b32.xlu0 %v2923, 8
      %v3070 = vpop.permute.xlu0 %3069
      %3071 = vrot.lane.b32.xlu0 %v2924, 8
      %v3072 = vpop.permute.xlu0 %3071
      %3073 = vrot.lane.b32.xlu0 %v2925, 8
      %v3074 = vpop.permute.xlu0 %3073
      %3075 = vrot.lane.b32.xlu0 %v2926, 8
      %v3076 = vpop.permute.xlu0 %3075
      %3077 = vrot.lane.b32.xlu0 %v2927, 8
      %v3078 = vpop.permute.xlu0 %3077
      %3079 = vrot.lane.b32.xlu0 %v2928, 8
      %v3080 = vpop.permute.xlu0 %3079
      %3081 = vrot.lane.b32.xlu0 %v2929, 8
      %v3082 = vpop.permute.xlu0 %3081
      %3083 = vrot.lane.b32.xlu0 %v2930, 8
      %v3084 = vpop.permute.xlu0 %3083
      %3085 = vrot.lane.b32.xlu0 %v2931, 8
      %v3086 = vpop.permute.xlu0 %3085
      %3087 = vrot.lane.b32.xlu0 %v2932, 8
      %v3088 = vpop.permute.xlu0 %3087
      %3089 = vrot.lane.b32.xlu0 %v2933, 8
      %v3090 = vpop.permute.xlu0 %3089
      %3091 = vrot.lane.b32.xlu0 %v2934, 8
      %v3092 = vpop.permute.xlu0 %3091
      %3093 = vrot.lane.b32.xlu0 %v2935, 8
      %v3094 = vpop.permute.xlu0 %3093
      %3095 = vrot.lane.b32.xlu0 %v2936, 8
      %v3096 = vpop.permute.xlu0 %3095
      %3097 = vrot.lane.b32.xlu0 %v2937, 8
      %v3098 = vpop.permute.xlu0 %3097
      %3099 = vrot.lane.b32.xlu0 %v2938, 8
      %v3100 = vpop.permute.xlu0 %3099
      %3101 = vrot.lane.b32.xlu0 %v2939, 8
      %v3102 = vpop.permute.xlu0 %3101
      %3103 = vrot.lane.b32.xlu0 %v2940, 8
      %v3104 = vpop.permute.xlu0 %3103
      %3105 = vrot.lane.b32.xlu0 %v2941, 8
      %v3106 = vpop.permute.xlu0 %3105
      %3107 = vrot.lane.b32.xlu0 %v2942, 8
      %v3108 = vpop.permute.xlu0 %3107
      %3109 = vrot.lane.b32.xlu0 %v2943, 8
      %v3110 = vpop.permute.xlu0 %3109
      %3111 = vrot.lane.b32.xlu0 %v2944, 8
      %v3112 = vpop.permute.xlu0 %3111
      %3113 = vrot.lane.b32.xlu0 %v2945, 8
      %v3114 = vpop.permute.xlu0 %3113
      %3115 = vrot.lane.b32.xlu0 %v2946, 8
      %v3116 = vpop.permute.xlu0 %3115
      %3117 = vrot.lane.b32.xlu0 %v2947, 8
      %v3118 = vpop.permute.xlu0 %3117
      %3119 = vrot.lane.b32.xlu0 %v2948, 8
      %v3120 = vpop.permute.xlu0 %3119
      %3121 = vrot.lane.b32.xlu0 %v2949, 8
      %v3122 = vpop.permute.xlu0 %3121
      %3123 = vrot.lane.b32.xlu0 %v2950, 8
      %v3124 = vpop.permute.xlu0 %3123
      %3125 = vrot.lane.b32.xlu0 %v2951, 8
      %v3126 = vpop.permute.xlu0 %3125
      %3127 = vrot.lane.b32.xlu0 %v2952, 8
      %v3128 = vpop.permute.xlu0 %3127
      %3129 = vrot.lane.b32.xlu0 %v2953, 8
      %v3130 = vpop.permute.xlu0 %3129
      %3131 = vrot.lane.b32.xlu0 %v2954, 8
      %v3132 = vpop.permute.xlu0 %3131
      %3133 = vrot.lane.b32.xlu0 %v2955, 8
      %v3134 = vpop.permute.xlu0 %3133
      %3135 = vrot.lane.b32.xlu0 %v2956, 8
      %v3136 = vpop.permute.xlu0 %3135
      %3137 = vrot.lane.b32.xlu0 %v2957, 8
      %v3138 = vpop.permute.xlu0 %3137
      %3139 = vrot.lane.b32.xlu0 %v2958, 8
      %v3140 = vpop.permute.xlu0 %3139
      %3141 = vrot.lane.b32.xlu0 %v2959, 8
      %v3142 = vpop.permute.xlu0 %3141
      %3143 = vrot.lane.b32.xlu0 %v2960, 8
      %v3144 = vpop.permute.xlu0 %3143
      %3145 = vrot.lane.b32.xlu0 %v2961, 8
      %v3146 = vpop.permute.xlu0 %3145
      %3147 = vrot.lane.b32.xlu0 %v2962, 8
      %v3148 = vpop.permute.xlu0 %3147
      %3149 = vrot.lane.b32.xlu0 %v2963, 8
      %v3150 = vpop.permute.xlu0 %3149
      %3151 = vrot.lane.b32.xlu0 %v2964, 8
      %v3152 = vpop.permute.xlu0 %3151
      %3153 = vrot.lane.b32.xlu0 %v2965, 8
      %v3154 = vpop.permute.xlu0 %3153
      %3155 = vrot.lane.b32.xlu0 %v2966, 8
      %v3156 = vpop.permute.xlu0 %3155
      %3157 = vrot.lane.b32.xlu0 %v2967, 8
      %v3158 = vpop.permute.xlu0 %3157
      %3159 = vrot.lane.b32.xlu0 %v2968, 8
      %v3160 = vpop.permute.xlu0 %3159
      %3161 = vrot.lane.b32.xlu0 %v2969, 8
      %v3162 = vpop.permute.xlu0 %3161
      %3259 = vrot.lane.b32.xlu0 %v2971, 16
      %v3260 = vpop.permute.xlu0 %3259
      %3261 = vrot.lane.b32.xlu0 %v2972, 16
      %v3262 = vpop.permute.xlu0 %3261
      %3263 = vrot.lane.b32.xlu0 %v2973, 16
      %v3264 = vpop.permute.xlu0 %3263
      %3265 = vrot.lane.b32.xlu0 %v2974, 16
      %v3266 = vpop.permute.xlu0 %3265
      %3267 = vrot.lane.b32.xlu0 %v2975, 16
      %v3268 = vpop.permute.xlu0 %3267
      %3269 = vrot.lane.b32.xlu0 %v2976, 16
      %v3270 = vpop.permute.xlu0 %3269
      %3271 = vrot.lane.b32.xlu0 %v2977, 16
      %v3272 = vpop.permute.xlu0 %3271
      %3273 = vrot.lane.b32.xlu0 %v2978, 16
      %v3274 = vpop.permute.xlu0 %3273
      %3275 = vrot.lane.b32.xlu0 %v2979, 16
      %v3276 = vpop.permute.xlu0 %3275
      %3277 = vrot.lane.b32.xlu0 %v2980, 16
      %v3278 = vpop.permute.xlu0 %3277
      %3279 = vrot.lane.b32.xlu0 %v2981, 16
      %v3280 = vpop.permute.xlu0 %3279
      %3281 = vrot.lane.b32.xlu0 %v2982, 16
      %v3282 = vpop.permute.xlu0 %3281
      %3283 = vrot.lane.b32.xlu0 %v2983, 16
      %v3284 = vpop.permute.xlu0 %3283
      %3285 = vrot.lane.b32.xlu0 %v2984, 16
      %v3286 = vpop.permute.xlu0 %3285
      %3287 = vrot.lane.b32.xlu0 %v2985, 16
      %v3288 = vpop.permute.xlu0 %3287
      %3289 = vrot.lane.b32.xlu0 %v2986, 16
      %v3290 = vpop.permute.xlu0 %3289
      %3291 = vrot.lane.b32.xlu0 %v2987, 16
      %v3292 = vpop.permute.xlu0 %3291
      %3293 = vrot.lane.b32.xlu0 %v2988, 16
      %v3294 = vpop.permute.xlu0 %3293
      %3295 = vrot.lane.b32.xlu0 %v2989, 16
      %v3296 = vpop.permute.xlu0 %3295
      %3297 = vrot.lane.b32.xlu0 %v2990, 16
      %v3298 = vpop.permute.xlu0 %3297
      %3299 = vrot.lane.b32.xlu0 %v2991, 16
      %v3300 = vpop.permute.xlu0 %3299
      %3301 = vrot.lane.b32.xlu0 %v2992, 16
      %v3302 = vpop.permute.xlu0 %3301
      %3303 = vrot.lane.b32.xlu0 %v2993, 16
      %v3304 = vpop.permute.xlu0 %3303
      %3305 = vrot.lane.b32.xlu0 %v2994, 16
      %v3306 = vpop.permute.xlu0 %3305
      %3307 = vrot.lane.b32.xlu0 %v2995, 16
      %v3308 = vpop.permute.xlu0 %3307
      %3309 = vrot.lane.b32.xlu0 %v2996, 16
      %v3310 = vpop.permute.xlu0 %3309
      %3311 = vrot.lane.b32.xlu0 %v2997, 16
      %v3312 = vpop.permute.xlu0 %3311
      %3313 = vrot.lane.b32.xlu0 %v2998, 16
      %v3314 = vpop.permute.xlu0 %3313
      %3315 = vrot.lane.b32.xlu0 %v2999, 16
      %v3316 = vpop.permute.xlu0 %3315
      %3317 = vrot.lane.b32.xlu0 %v3000, 16
      %v3318 = vpop.permute.xlu0 %3317
      %3319 = vrot.lane.b32.xlu0 %v3001, 16
      %v3320 = vpop.permute.xlu0 %3319
      %3321 = vrot.lane.b32.xlu0 %v3002, 16
      %v3322 = vpop.permute.xlu0 %3321
      %3323 = vrot.lane.b32.xlu0 %v3003, 16
      %v3324 = vpop.permute.xlu0 %3323
      %3325 = vrot.lane.b32.xlu0 %v3004, 16
      %v3326 = vpop.permute.xlu0 %3325
      %3327 = vrot.lane.b32.xlu0 %v3005, 16
      %v3328 = vpop.permute.xlu0 %3327
      %3329 = vrot.lane.b32.xlu0 %v3006, 16
      %v3330 = vpop.permute.xlu0 %3329
      %3331 = vrot.lane.b32.xlu0 %v3007, 16
      %v3332 = vpop.permute.xlu0 %3331
      %3333 = vrot.lane.b32.xlu0 %v3008, 16
      %v3334 = vpop.permute.xlu0 %3333
      %3335 = vrot.lane.b32.xlu0 %v3009, 16
      %v3336 = vpop.permute.xlu0 %3335
      %3337 = vrot.lane.b32.xlu0 %v3010, 16
      %v3338 = vpop.permute.xlu0 %3337
      %3339 = vrot.lane.b32.xlu0 %v3011, 16
      %v3340 = vpop.permute.xlu0 %3339
      %3341 = vrot.lane.b32.xlu0 %v3012, 16
      %v3342 = vpop.permute.xlu0 %3341
      %3343 = vrot.lane.b32.xlu0 %v3013, 16
      %v3344 = vpop.permute.xlu0 %3343
      %3345 = vrot.lane.b32.xlu0 %v3014, 16
      %v3346 = vpop.permute.xlu0 %3345
      %3347 = vrot.lane.b32.xlu0 %v3015, 16
      %v3348 = vpop.permute.xlu0 %3347
      %3349 = vrot.lane.b32.xlu0 %v3016, 16
      %v3350 = vpop.permute.xlu0 %3349
      %3351 = vrot.lane.b32.xlu0 %v3017, 16
      %v3352 = vpop.permute.xlu0 %3351
      %3353 = vrot.lane.b32.xlu0 %v3018, 16
      %v3354 = vpop.permute.xlu0 %3353
      %v3403 = vsel %vm1026, %v2873, %v3068
      %v3404 = vsel %vm1026, %v2874, %v3070
      %v3405 = vsel %vm1026, %v2875, %v3072
      %v3406 = vsel %vm1026, %v2876, %v3074
      %v3407 = vsel %vm1026, %v2877, %v3076
      %v3408 = vsel %vm1026, %v2878, %v3078
      %v3409 = vsel %vm1026, %v2879, %v3080
      %v3410 = vsel %vm1026, %v2880, %v3082
      %v3411 = vsel %vm1026, %v2881, %v3084
      %v3412 = vsel %vm1026, %v2882, %v3086
      %v3413 = vsel %vm1026, %v2883, %v3088
      %v3414 = vsel %vm1026, %v2884, %v3090
      %v3415 = vsel %vm1026, %v2885, %v3092
      %v3416 = vsel %vm1026, %v2886, %v3094
      %v3417 = vsel %vm1026, %v2887, %v3096
      %v3418 = vsel %vm1026, %v2888, %v3098
      %v3419 = vsel %vm1026, %v2889, %v3100
      %v3420 = vsel %vm1026, %v2890, %v3102
      %v3421 = vsel %vm1026, %v2891, %v3104
      %v3422 = vsel %vm1026, %v2892, %v3106
      %v3423 = vsel %vm1026, %v2893, %v3108
      %v3424 = vsel %vm1026, %v2894, %v3110
      %v3425 = vsel %vm1026, %v2895, %v3112
      %v3426 = vsel %vm1026, %v2896, %v3114
      %v3427 = vsel %vm1026, %v2897, %v3116
      %v3428 = vsel %vm1026, %v2898, %v3118
      %v3429 = vsel %vm1026, %v2899, %v3120
      %v3430 = vsel %vm1026, %v2900, %v3122
      %v3431 = vsel %vm1026, %v2901, %v3124
      %v3432 = vsel %vm1026, %v2902, %v3126
      %v3433 = vsel %vm1026, %v2903, %v3128
      %v3434 = vsel %vm1026, %v2904, %v3130
      %v3435 = vsel %vm1026, %v2905, %v3132
      %v3436 = vsel %vm1026, %v2906, %v3134
      %v3437 = vsel %vm1026, %v2907, %v3136
      %v3438 = vsel %vm1026, %v2908, %v3138
      %v3439 = vsel %vm1026, %v2909, %v3140
      %v3440 = vsel %vm1026, %v2910, %v3142
      %v3441 = vsel %vm1026, %v2911, %v3144
      %v3442 = vsel %vm1026, %v2912, %v3146
      %v3443 = vsel %vm1026, %v2913, %v3148
      %v3444 = vsel %vm1026, %v2914, %v3150
      %v3445 = vsel %vm1026, %v2915, %v3152
      %v3446 = vsel %vm1026, %v2916, %v3154
      %v3447 = vsel %vm1026, %v2917, %v3156
      %v3448 = vsel %vm1026, %v2918, %v3158
      %v3449 = vsel %vm1026, %v2919, %v3160
      %v3450 = vsel %vm1026, %v2920, %v3162
      %vm3451 = vcmask 130048
      %v3452 = vsel %vm3451, %v3403, %v3260
      %v3453 = vsel %vm3451, %v3404, %v3262
      %v3454 = vsel %vm3451, %v3405, %v3264
      %v3455 = vsel %vm3451, %v3406, %v3266
      %v3456 = vsel %vm3451, %v3407, %v3268
      %v3457 = vsel %vm3451, %v3408, %v3270
      %v3458 = vsel %vm3451, %v3409, %v3272
      %v3459 = vsel %vm3451, %v3410, %v3274
      %v3460 = vsel %vm3451, %v3411, %v3276
      %v3461 = vsel %vm3451, %v3412, %v3278
      %v3462 = vsel %vm3451, %v3413, %v3280
      %v3463 = vsel %vm3451, %v3414, %v3282
      %v3464 = vsel %vm3451, %v3415, %v3284
      %v3465 = vsel %vm3451, %v3416, %v3286
      %v3466 = vsel %vm3451, %v3417, %v3288
      %v3467 = vsel %vm3451, %v3418, %v3290
      %v3468 = vsel %vm3451, %v3419, %v3292
      %v3469 = vsel %vm3451, %v3420, %v3294
      %v3470 = vsel %vm3451, %v3421, %v3296
      %v3471 = vsel %vm3451, %v3422, %v3298
      %v3472 = vsel %vm3451, %v3423, %v3300
      %v3473 = vsel %vm3451, %v3424, %v3302
      %v3474 = vsel %vm3451, %v3425, %v3304
      %v3475 = vsel %vm3451, %v3426, %v3306
      %v3476 = vsel %vm3451, %v3427, %v3308
      %v3477 = vsel %vm3451, %v3428, %v3310
      %v3478 = vsel %vm3451, %v3429, %v3312
      %v3479 = vsel %vm3451, %v3430, %v3314
      %v3480 = vsel %vm3451, %v3431, %v3316
      %v3481 = vsel %vm3451, %v3432, %v3318
      %v3482 = vsel %vm3451, %v3433, %v3320
      %v3483 = vsel %vm3451, %v3434, %v3322
      %v3484 = vsel %vm3451, %v3435, %v3324
      %v3485 = vsel %vm3451, %v3436, %v3326
      %v3486 = vsel %vm3451, %v3437, %v3328
      %v3487 = vsel %vm3451, %v3438, %v3330
      %v3488 = vsel %vm3451, %v3439, %v3332
      %v3489 = vsel %vm3451, %v3440, %v3334
      %v3490 = vsel %vm3451, %v3441, %v3336
      %v3491 = vsel %vm3451, %v3442, %v3338
      %v3492 = vsel %vm3451, %v3443, %v3340
      %v3493 = vsel %vm3451, %v3444, %v3342
      %v3494 = vsel %vm3451, %v3445, %v3344
      %v3495 = vsel %vm3451, %v3446, %v3346
      %v3496 = vsel %vm3451, %v3447, %v3348
      %v3497 = vsel %vm3451, %v3448, %v3350
      %v3498 = vsel %vm3451, %v3449, %v3352
      %v3499 = vsel %vm3451, %v3450, %v3354
      %v3500 = vpack.c.bf16 %v3453, %v3452
      %v3501 = vpack.c.bf16 %v3455, %v3454
      %v3502 = vpack.c.bf16 %v3457, %v3456
      %v3503 = vpack.c.bf16 %v3459, %v3458
      %v3504 = vpack.c.bf16 %v3461, %v3460
      %v3505 = vpack.c.bf16 %v3463, %v3462
      %v3506 = vpack.c.bf16 %v3465, %v3464
      %v3507 = vpack.c.bf16 %v3467, %v3466
      %v3508 = vpack.c.bf16 %v3469, %v3468
      %v3509 = vpack.c.bf16 %v3471, %v3470
      %v3510 = vpack.c.bf16 %v3473, %v3472
      %v3511 = vpack.c.bf16 %v3475, %v3474
      %v3512 = vpack.c.bf16 %v3477, %v3476
      %v3513 = vpack.c.bf16 %v3479, %v3478
      %v3514 = vpack.c.bf16 %v3481, %v3480
      %v3515 = vpack.c.bf16 %v3483, %v3482
      %v3516 = vpack.c.bf16 %v3485, %v3484
      %v3517 = vpack.c.bf16 %v3487, %v3486
      %v3518 = vpack.c.bf16 %v3489, %v3488
      %v3519 = vpack.c.bf16 %v3491, %v3490
      %v3520 = vpack.c.bf16 %v3493, %v3492
      %v3521 = vpack.c.bf16 %v3495, %v3494
      %v3522 = vpack.c.bf16 %v3497, %v3496
      %v3523 = vpack.c.bf16 %v3499, %v3498
      %v3524 = vld [vmem:[%s3] sm:$0xf]
      %v3525 = vld [vmem:[%s3 + $0x4] sm:$0xf]
      %v3526 = vld [vmem:[%s3 + $0x8] sm:$0xf]
      %s3527 = scalar_lea.vmem %s3, 12
      %v3528 = vld [vmem:[%s3527] sm:$0xf]
      %v3529 = vld [vmem:[%s3527 + $0x4] sm:$0xf]
      %v3530 = vld [vmem:[%s3527 + $0x8] sm:$0xf]
      %v3534 = vunpack.c.l.b16 %v3528
      %v3535 = vunpack.c.l.b16 %v3529
      %v3536 = vunpack.c.l.b16 %v3530
      %v3537 = vpack.c.b16 %v3535, %v3534
      %v3538 = vpack.c.b16 %v3536, %v3536
      %vm3540 = vcmask 195584
      %v3542 = vsel %vm3540, %v3500, 0
      %v3545 = vsel %vm3540, %v3501, 0
      %v3548 = vsel %vm3540, %v3502, 0
      %v3551 = vsel %vm3540, %v3503, 0
      %v3554 = vsel %vm3540, %v3504, 0
      %v3557 = vsel %vm3540, %v3505, 0
      %v3560 = vsel %vm3540, %v3506, 0
      %v3563 = vsel %vm3540, %v3507, 0
      %v3566 = vsel %vm3540, %v3508, 0
      %v3569 = vsel %vm3540, %v3509, 0
      %v3572 = vsel %vm3540, %v3510, 0
      %v3575 = vsel %vm3540, %v3511, 0
      %v3578 = vsel %vm3540, %v3512, 0
      %v3581 = vsel %vm3540, %v3513, 0
      %v3584 = vsel %vm3540, %v3514, 0
      %v3587 = vsel %vm3540, %v3515, 0
      %v3590 = vsel %vm3540, %v3516, 0
      %v3593 = vsel %vm3540, %v3517, 0
      %v3596 = vsel %vm3540, %v3518, 0
      %v3599 = vsel %vm3540, %v3519, 0
      %v3602 = vsel %vm3540, %v3520, 0
      %v3605 = vsel %vm3540, %v3521, 0
      %v3608 = vsel %vm3540, %v3522, 0
      %v3611 = vsel %vm3540, %v3523, 0
      %vm3613 = vcmask 1043456
      %v3615 = vsel %vm3613, %v3538, 0
      %3617 = vmatprep.subr.bf16.mxu0 0
      %3618 = vmatpush1.bf16.msra.mxu0 %v3537
      %3619 = vmatprep.subr.bf16.mxu0 0
      %3620 = vmatpush1.bf16.msra.mxu0 %v3615
      %3621 = vmatprep.subr.bf16.mxu0 0
      %3622 = vmatpush1.bf16.msra.mxu0 0
      %3623 = vmatprep.subr.bf16.mxu0 0
      %3624 = vmatpush1.bf16.msra.mxu0 0
      %3625 = vmatprep.subr.bf16.mxu0 0
      %3626 = vmatpush1.bf16.msra.mxu0 0
      %3627 = vmatprep.subr.bf16.mxu0 0
      %3628 = vmatpush1.bf16.msra.mxu0 0
      %3629 = vmatprep.subr.bf16.mxu0 0
      %3630 = vmatpush1.bf16.msra.mxu0 0
      %3631 = vmatprep.subr.bf16.mxu0 0
      %3632 = vmatpush1.bf16.msra.mxu0 0
      %3633 = vmatprep.subr.bf16.mxu0 0
      %3634 = vmatpush1.bf16.msra.mxu0 0
      %3635 = vmatprep.subr.bf16.mxu0 0
      %3636 = vmatpush1.bf16.msra.mxu0 0
      %3637 = vmatprep.subr.bf16.mxu0 0
      %3638 = vmatpush1.bf16.msra.mxu0 0
      %3639 = vmatprep.subr.bf16.mxu0 0
      %3640 = vmatpush1.bf16.msra.mxu0 0
      %3641 = vmatprep.subr.bf16.mxu0 0
      %3642 = vmatpush1.bf16.msra.mxu0 0
      %3643 = vmatprep.subr.bf16.mxu0 0
      %3644 = vmatpush1.bf16.msra.mxu0 0
      %3645 = vmatprep.subr.bf16.mxu0 0
      %3646 = vmatpush1.bf16.msra.mxu0 0
      %3647 = vmatprep.subr.bf16.mxu0 0
      %3648 = vmatpush1.bf16.msra.mxu0 0
      %3649 = vmatprep.mubr.bf16.mxu0 0
      %3650 = vmatmul.mubr.bf16.gmra.mrb[0].mxu0 %v3542
      %v3651 = vpop.f32.mrb[0].mxu0
      %v3652 = vadd.f32 0.0, %v3651
      %v3653 = vpop.f32.mrb[0].mxu0
      %v3654 = vpop.f32.mrb[0].mxu0
      %v3655 = vadd.f32 0.0, %v3654
      %v3656 = vpop.f32.mrb[0].mxu0
      %3657 = vmatprep.mubr.bf16.mxu0 0
      %3658 = vmatmul.mubr.bf16.gmra.mrb[0].mxu0 %v3545
      %v3659 = vpop.f32.mrb[0].mxu0
      %v3660 = vadd.f32 0.0, %v3659
      %v3661 = vpop.f32.mrb[0].mxu0
      %v3662 = vpop.f32.mrb[0].mxu0
      %v3663 = vadd.f32 0.0, %v3662
      %v3664 = vpop.f32.mrb[0].mxu0
      %3665 = vmatprep.mubr.bf16.mxu0 0
      %3666 = vmatmul.mubr.bf16.gmra.mrb[0].mxu0 %v3548
      %v3667 = vpop.f32.mrb[0].mxu0
      %v3668 = vadd.f32 0.0, %v3667
      %v3669 = vpop.f32.mrb[0].mxu0
      %v3670 = vpop.f32.mrb[0].mxu0
      %v3671 = vadd.f32 0.0, %v3670
      %v3672 = vpop.f32.mrb[0].mxu0
      %3673 = vmatprep.mubr.bf16.mxu0 0
      %3674 = vmatmul.mubr.bf16.gmra.mrb[0].mxu0 %v3551
      %v3675 = vpop.f32.mrb[0].mxu0
      %v3676 = vadd.f32 0.0, %v3675
      %v3677 = vpop.f32.mrb[0].mxu0
      %v3678 = vpop.f32.mrb[0].mxu0
      %v3679 = vadd.f32 0.0, %v3678
      %v3680 = vpop.f32.mrb[0].mxu0
      %3681 = vmatprep.mubr.bf16.mxu0 0
      %3682 = vmatmul.mubr.bf16.gmra.mrb[0].mxu0 %v3554
      %v3683 = vpop.f32.mrb[0].mxu0
      %v3684 = vadd.f32 0.0, %v3683
      %v3685 = vpop.f32.mrb[0].mxu0
      %v3686 = vpop.f32.mrb[0].mxu0
      %v3687 = vadd.f32 0.0, %v3686
      %v3688 = vpop.f32.mrb[0].mxu0
      %3689 = vmatprep.mubr.bf16.mxu0 0
      %3690 = vmatmul.mubr.bf16.gmra.mrb[0].mxu0 %v3557
      %v3691 = vpop.f32.mrb[0].mxu0
      %v3692 = vadd.f32 0.0, %v3691
      %v3693 = vpop.f32.mrb[0].mxu0
      %v3694 = vpop.f32.mrb[0].mxu0
      %v3695 = vadd.f32 0.0, %v3694
      %v3696 = vpop.f32.mrb[0].mxu0
      %3697 = vmatprep.mubr.bf16.mxu0 0
      %3698 = vmatmul.mubr.bf16.gmra.mrb[0].mxu0 %v3560
      %v3699 = vpop.f32.mrb[0].mxu0
      %v3700 = vadd.f32 0.0, %v3699
      %v3701 = vpop.f32.mrb[0].mxu0
      %v3702 = vpop.f32.mrb[0].mxu0
      %v3703 = vadd.f32 0.0, %v3702
      %v3704 = vpop.f32.mrb[0].mxu0
      %3705 = vmatprep.mubr.bf16.mxu0 0
      %3706 = vmatmul.mubr.bf16.gmra.mrb[0].mxu0 %v3563
      %v3707 = vpop.f32.mrb[0].mxu0
      %v3708 = vadd.f32 0.0, %v3707
      %v3709 = vpop.f32.mrb[0].mxu0
      %v3710 = vpop.f32.mrb[0].mxu0
      %v3711 = vadd.f32 0.0, %v3710
      %v3712 = vpop.f32.mrb[0].mxu0
      %3713 = vmatprep.mubr.bf16.mxu0 0
      %3714 = vmatmul.mubr.bf16.gmra.mrb[0].mxu0 %v3566
      %v3715 = vpop.f32.mrb[0].mxu0
      %v3716 = vadd.f32 0.0, %v3715
      %v3717 = vpop.f32.mrb[0].mxu0
      %v3718 = vpop.f32.mrb[0].mxu0
      %v3719 = vadd.f32 0.0, %v3718
      %v3720 = vpop.f32.mrb[0].mxu0
      %3721 = vmatprep.mubr.bf16.mxu0 0
      %3722 = vmatmul.mubr.bf16.gmra.mrb[0].mxu0 %v3569
      %v3723 = vpop.f32.mrb[0].mxu0
      %v3724 = vadd.f32 0.0, %v3723
      %v3725 = vpop.f32.mrb[0].mxu0
      %v3726 = vpop.f32.mrb[0].mxu0
      %v3727 = vadd.f32 0.0, %v3726
      %v3728 = vpop.f32.mrb[0].mxu0
      %3729 = vmatprep.mubr.bf16.mxu0 0
      %3730 = vmatmul.mubr.bf16.gmra.mrb[0].mxu0 %v3572
      %v3731 = vpop.f32.mrb[0].mxu0
      %v3732 = vadd.f32 0.0, %v3731
      %v3733 = vpop.f32.mrb[0].mxu0
      %v3734 = vpop.f32.mrb[0].mxu0
      %v3735 = vadd.f32 0.0, %v3734
      %v3736 = vpop.f32.mrb[0].mxu0
      %3737 = vmatprep.mubr.bf16.mxu0 0
      %3738 = vmatmul.mubr.bf16.gmra.mrb[0].mxu0 %v3575
      %v3739 = vpop.f32.mrb[0].mxu0
      %v3740 = vadd.f32 0.0, %v3739
      %v3741 = vpop.f32.mrb[0].mxu0
      %v3742 = vpop.f32.mrb[0].mxu0
      %v3743 = vadd.f32 0.0, %v3742
      %v3744 = vpop.f32.mrb[0].mxu0
      %3745 = vmatprep.mubr.bf16.mxu0 0
      %3746 = vmatmul.mubr.bf16.gmra.mrb[0].mxu0 %v3578
      %v3747 = vpop.f32.mrb[0].mxu0
      %v3748 = vadd.f32 0.0, %v3747
      %v3749 = vpop.f32.mrb[0].mxu0
      %v3750 = vpop.f32.mrb[0].mxu0
      %v3751 = vadd.f32 0.0, %v3750
      %v3752 = vpop.f32.mrb[0].mxu0
      %3753 = vmatprep.mubr.bf16.mxu0 0
      %3754 = vmatmul.mubr.bf16.gmra.mrb[0].mxu0 %v3581
      %v3755 = vpop.f32.mrb[0].mxu0
      %v3756 = vadd.f32 0.0, %v3755
      %v3757 = vpop.f32.mrb[0].mxu0
      %v3758 = vpop.f32.mrb[0].mxu0
      %v3759 = vadd.f32 0.0, %v3758
      %v3760 = vpop.f32.mrb[0].mxu0
      %3761 = vmatprep.mubr.bf16.mxu0 0
      %3762 = vmatmul.mubr.bf16.gmra.mrb[0].mxu0 %v3584
      %v3763 = vpop.f32.mrb[0].mxu0
      %v3764 = vadd.f32 0.0, %v3763
      %v3765 = vpop.f32.mrb[0].mxu0
      %v3766 = vpop.f32.mrb[0].mxu0
      %v3767 = vadd.f32 0.0, %v3766
      %v3768 = vpop.f32.mrb[0].mxu0
      %3769 = vmatprep.mubr.bf16.mxu0 0
      %3770 = vmatmul.mubr.bf16.gmra.mrb[0].mxu0 %v3587
      %v3771 = vpop.f32.mrb[0].mxu0
      %v3772 = vadd.f32 0.0, %v3771
      %v3773 = vpop.f32.mrb[0].mxu0
      %v3774 = vpop.f32.mrb[0].mxu0
      %v3775 = vadd.f32 0.0, %v3774
      %v3776 = vpop.f32.mrb[0].mxu0
      %3777 = vmatprep.mubr.bf16.mxu0 0
      %3778 = vmatmul.mubr.bf16.gmra.mrb[0].mxu0 %v3590
      %v3779 = vpop.f32.mrb[0].mxu0
      %v3780 = vadd.f32 0.0, %v3779
      %v3781 = vpop.f32.mrb[0].mxu0
      %v3782 = vpop.f32.mrb[0].mxu0
      %v3783 = vadd.f32 0.0, %v3782
      %v3784 = vpop.f32.mrb[0].mxu0
      %3785 = vmatprep.mubr.bf16.mxu0 0
      %3786 = vmatmul.mubr.bf16.gmra.mrb[0].mxu0 %v3593
      %v3787 = vpop.f32.mrb[0].mxu0
      %v3788 = vadd.f32 0.0, %v3787
      %v3789 = vpop.f32.mrb[0].mxu0
      %v3790 = vpop.f32.mrb[0].mxu0
      %v3791 = vadd.f32 0.0, %v3790
      %v3792 = vpop.f32.mrb[0].mxu0
      %3793 = vmatprep.mubr.bf16.mxu0 0
      %3794 = vmatmul.mubr.bf16.gmra.mrb[0].mxu0 %v3596
      %v3795 = vpop.f32.mrb[0].mxu0
      %v3796 = vadd.f32 0.0, %v3795
      %v3797 = vpop.f32.mrb[0].mxu0
      %v3798 = vpop.f32.mrb[0].mxu0
      %v3799 = vadd.f32 0.0, %v3798
      %v3800 = vpop.f32.mrb[0].mxu0
      %3801 = vmatprep.mubr.bf16.mxu0 0
      %3802 = vmatmul.mubr.bf16.gmra.mrb[0].mxu0 %v3599
      %v3803 = vpop.f32.mrb[0].mxu0
      %v3804 = vadd.f32 0.0, %v3803
      %v3805 = vpop.f32.mrb[0].mxu0
      %v3806 = vpop.f32.mrb[0].mxu0
      %v3807 = vadd.f32 0.0, %v3806
      %v3808 = vpop.f32.mrb[0].mxu0
      %3809 = vmatprep.mubr.bf16.mxu0 0
      %3810 = vmatmul.mubr.bf16.gmra.mrb[0].mxu0 %v3602
      %v3811 = vpop.f32.mrb[0].mxu0
      %v3812 = vadd.f32 0.0, %v3811
      %v3813 = vpop.f32.mrb[0].mxu0
      %v3814 = vpop.f32.mrb[0].mxu0
      %v3815 = vadd.f32 0.0, %v3814
      %v3816 = vpop.f32.mrb[0].mxu0
      %3817 = vmatprep.mubr.bf16.mxu0 0
      %3818 = vmatmul.mubr.bf16.gmra.mrb[0].mxu0 %v3605
      %v3819 = vpop.f32.mrb[0].mxu0
      %v3820 = vadd.f32 0.0, %v3819
      %v3821 = vpop.f32.mrb[0].mxu0
      %v3822 = vpop.f32.mrb[0].mxu0
      %v3823 = vadd.f32 0.0, %v3822
      %v3824 = vpop.f32.mrb[0].mxu0
      %3825 = vmatprep.mubr.bf16.mxu0 0
      %3826 = vmatmul.mubr.bf16.gmra.mrb[0].mxu0 %v3608
      %v3827 = vpop.f32.mrb[0].mxu0
      %v3828 = vadd.f32 0.0, %v3827
      %v3829 = vpop.f32.mrb[0].mxu0
      %v3830 = vpop.f32.mrb[0].mxu0
      %v3831 = vadd.f32 0.0, %v3830
      %v3832 = vpop.f32.mrb[0].mxu0
      %3833 = vmatprep.mubr.bf16.mxu0 0
      %3834 = vmatmul.mubr.bf16.gmra.mrb[0].mxu0 %v3611
      %v3835 = vpop.f32.mrb[0].mxu0
      %v3836 = vadd.f32 0.0, %v3835
      %v3837 = vpop.f32.mrb[0].mxu0
      %v3838 = vpop.f32.mrb[0].mxu0
      %v3839 = vadd.f32 0.0, %v3838
      %v3840 = vpop.f32.mrb[0].mxu0
      %3841 = vdwg.mxu0
      %v3842 = vrot.slane %v3652, 1
      %v3843 = vrot.slane %v3655, 1
      %v3844 = vrot.slane %v3660, 1
      %v3845 = vrot.slane %v3663, 1
      %v3846 = vrot.slane %v3668, 1
      %v3847 = vrot.slane %v3671, 1
      %v3848 = vrot.slane %v3676, 1
      %v3849 = vrot.slane %v3679, 1
      %v3850 = vrot.slane %v3684, 1
      %v3851 = vrot.slane %v3687, 1
      %v3852 = vrot.slane %v3692, 1
      %v3853 = vrot.slane %v3695, 1
      %v3854 = vrot.slane %v3700, 1
      %v3855 = vrot.slane %v3703, 1
      %v3856 = vrot.slane %v3708, 1
      %v3857 = vrot.slane %v3711, 1
      %v3858 = vrot.slane %v3716, 1
      %v3859 = vrot.slane %v3719, 1
      %v3860 = vrot.slane %v3724, 1
      %v3861 = vrot.slane %v3727, 1
      %v3862 = vrot.slane %v3732, 1
      %v3863 = vrot.slane %v3735, 1
      %v3864 = vrot.slane %v3740, 1
      %v3865 = vrot.slane %v3743, 1
      %v3866 = vrot.slane %v3748, 1
      %v3867 = vrot.slane %v3751, 1
      %v3868 = vrot.slane %v3756, 1
      %v3869 = vrot.slane %v3759, 1
      %v3870 = vrot.slane %v3764, 1
      %v3871 = vrot.slane %v3767, 1
      %v3872 = vrot.slane %v3772, 1
      %v3873 = vrot.slane %v3775, 1
      %v3874 = vrot.slane %v3780, 1
      %v3875 = vrot.slane %v3783, 1
      %v3876 = vrot.slane %v3788, 1
      %v3877 = vrot.slane %v3791, 1
      %v3878 = vrot.slane %v3796, 1
      %v3879 = vrot.slane %v3799, 1
      %v3880 = vrot.slane %v3804, 1
      %v3881 = vrot.slane %v3807, 1
      %v3882 = vrot.slane %v3812, 1
      %v3883 = vrot.slane %v3815, 1
      %v3884 = vrot.slane %v3820, 1
      %v3885 = vrot.slane %v3823, 1
      %v3886 = vrot.slane %v3828, 1
      %v3887 = vrot.slane %v3831, 1
      %v3888 = vrot.slane %v3836, 1
      %v3889 = vrot.slane %v3839, 1
      %v3890 = vsel %vm2243, %v3888, %v3889
      %v3891 = vsel %vm2243, %v3887, %v3888
      %v3892 = vsel %vm2243, %v3885, %v3886
      %v3893 = vsel %vm2243, %v3884, %v3885
      %v3894 = vsel %vm2243, %v3882, %v3883
      %v3895 = vsel %vm2243, %v3881, %v3882
      %v3896 = vsel %vm2243, %v3879, %v3880
      %v3897 = vsel %vm2243, %v3878, %v3879
      %v3898 = vsel %vm2243, %v3876, %v3877
      %v3899 = vsel %vm2243, %v3875, %v3876
      %v3900 = vsel %vm2243, %v3873, %v3874
      %v3901 = vsel %vm2243, %v3872, %v3873
      %v3902 = vsel %vm2243, %v3870, %v3871
      %v3903 = vsel %vm2243, %v3869, %v3870
      %v3904 = vsel %vm2243, %v3867, %v3868
      %v3905 = vsel %vm2243, %v3866, %v3867
      %v3906 = vsel %vm2243, %v3864, %v3865
      %v3907 = vsel %vm2243, %v3863, %v3864
      %v3908 = vsel %vm2243, %v3861, %v3862
      %v3909 = vsel %vm2243, %v3860, %v3861
      %v3910 = vsel %vm2243, %v3858, %v3859
      %v3911 = vsel %vm2243, %v3857, %v3858
      %v3912 = vsel %vm2243, %v3855, %v3856
      %v3913 = vsel %vm2243, %v3854, %v3855
      %v3914 = vsel %vm2243, %v3852, %v3853
      %v3915 = vsel %vm2243, %v3851, %v3852
      %v3916 = vsel %vm2243, %v3849, %v3850
      %v3917 = vsel %vm2243, %v3848, %v3849
      %v3918 = vsel %vm2243, %v3846, %v3847
      %v3919 = vsel %vm2243, %v3845, %v3846
      %v3920 = vsel %vm2243, %v3843, %v3844
      %v3921 = vsel %vm2243, %v3842, %v3843
      %v3925 = vunpack.c.l.b16 %v3524
      %v3926 = vunpack.c.l.b16 %v3525
      %v3927 = vunpack.c.l.b16 %v3526
      %v3928 = vpack.c.b16 %v3926, %v3925
      %v3929 = vpack.c.b16 %v3927, %v3927
      %v3932 = vsel %vm3613, %v3929, 0
      %3934 = vmatprep.subr.bf16.mxu0 0
      %3935 = vmatpush1.bf16.msra.mxu0 %v3928
      %3936 = vmatprep.subr.bf16.mxu0 0
      %3937 = vmatpush1.bf16.msra.mxu0 %v3932
      %3938 = vmatprep.subr.bf16.mxu0 0
      %3939 = vmatpush1.bf16.msra.mxu0 0
      %3940 = vmatprep.subr.bf16.mxu0 0
      %3941 = vmatpush1.bf16.msra.mxu0 0
      %3942 = vmatprep.subr.bf16.mxu0 0
      %3943 = vmatpush1.bf16.msra.mxu0 0
      %3944 = vmatprep.subr.bf16.mxu0 0
      %3945 = vmatpush1.bf16.msra.mxu0 0
      %3946 = vmatprep.subr.bf16.mxu0 0
      %3947 = vmatpush1.bf16.msra.mxu0 0
      %3948 = vmatprep.subr.bf16.mxu0 0
      %3949 = vmatpush1.bf16.msra.mxu0 0
      %3950 = vmatprep.subr.bf16.mxu0 0
      %3951 = vmatpush1.bf16.msra.mxu0 0
      %3952 = vmatprep.subr.bf16.mxu0 0
      %3953 = vmatpush1.bf16.msra.mxu0 0
      %3954 = vmatprep.subr.bf16.mxu0 0
      %3955 = vmatpush1.bf16.msra.mxu0 0
      %3956 = vmatprep.subr.bf16.mxu0 0
      %3957 = vmatpush1.bf16.msra.mxu0 0
      %3958 = vmatprep.subr.bf16.mxu0 0
      %3959 = vmatpush1.bf16.msra.mxu0 0
      %3960 = vmatprep.subr.bf16.mxu0 0
      %3961 = vmatpush1.bf16.msra.mxu0 0
      %3962 = vmatprep.subr.bf16.mxu0 0
      %3963 = vmatpush1.bf16.msra.mxu0 0
      %3964 = vmatprep.subr.bf16.mxu0 0
      %3965 = vmatpush1.bf16.msra.mxu0 0
      %3966 = vmatprep.mubr.bf16.mxu0 0
      %3967 = vmatmul.mubr.bf16.gmra.mrb[0].mxu0 %v3542
      %v3968 = vpop.f32.mrb[0].mxu0
      %v3969 = vadd.f32 %v3921, %v3968
      %v3970 = vpop.f32.mrb[0].mxu0
      %v3971 = vpop.f32.mrb[0].mxu0
      %v3972 = vadd.f32 %v3920, %v3971
      %v3973 = vpop.f32.mrb[0].mxu0
      %3974 = vmatprep.mubr.bf16.mxu0 0
      %3975 = vmatmul.mubr.bf16.gmra.mrb[0].mxu0 %v3545
      %v3976 = vpop.f32.mrb[0].mxu0
      %v3977 = vpop.f32.mrb[0].mxu0
      %v3978 = vpop.f32.mrb[0].mxu0
      %v3979 = vadd.f32 %v3919, %v3978
      %v3980 = vpop.f32.mrb[0].mxu0
      %3981 = vmatprep.mubr.bf16.mxu0 0
      %3982 = vmatmul.mubr.bf16.gmra.mrb[0].mxu0 %v3548
      %v3983 = vpop.f32.mrb[0].mxu0
      %v3984 = vadd.f32 %v3918, %v3983
      %v3985 = vpop.f32.mrb[0].mxu0
      %v3986 = vpop.f32.mrb[0].mxu0
      %v3987 = vpop.f32.mrb[0].mxu0
      %3988 = vmatprep.mubr.bf16.mxu0 0
      %3989 = vmatmul.mubr.bf16.gmra.mrb[0].mxu0 %v3551
      %v3990 = vpop.f32.mrb[0].mxu0
      %v3991 = vadd.f32 %v3917, %v3990
      %v3992 = vpop.f32.mrb[0].mxu0
      %v3993 = vpop.f32.mrb[0].mxu0
      %v3994 = vadd.f32 %v3916, %v3993
      %v3995 = vpop.f32.mrb[0].mxu0
      %3996 = vmatprep.mubr.bf16.mxu0 0
      %3997 = vmatmul.mubr.bf16.gmra.mrb[0].mxu0 %v3554
      %v3998 = vpop.f32.mrb[0].mxu0
      %v3999 = vpop.f32.mrb[0].mxu0
      %v4000 = vpop.f32.mrb[0].mxu0
      %v4001 = vadd.f32 %v3915, %v4000
      %v4002 = vpop.f32.mrb[0].mxu0
      %4003 = vmatprep.mubr.bf16.mxu0 0
      %4004 = vmatmul.mubr.bf16.gmra.mrb[0].mxu0 %v3557
      %v4005 = vpop.f32.mrb[0].mxu0
      %v4006 = vadd.f32 %v3914, %v4005
      %v4007 = vpop.f32.mrb[0].mxu0
      %v4008 = vpop.f32.mrb[0].mxu0
      %v4009 = vpop.f32.mrb[0].mxu0
      %4010 = vmatprep.mubr.bf16.mxu0 0
      %4011 = vmatmul.mubr.bf16.gmra.mrb[0].mxu0 %v3560
      %v4012 = vpop.f32.mrb[0].mxu0
      %v4013 = vadd.f32 %v3913, %v4012
      %v4014 = vpop.f32.mrb[0].mxu0
      %v4015 = vpop.f32.mrb[0].mxu0
      %v4016 = vadd.f32 %v3912, %v4015
      %v4017 = vpop.f32.mrb[0].mxu0
      %4018 = vmatprep.mubr.bf16.mxu0 0
      %4019 = vmatmul.mubr.bf16.gmra.mrb[0].mxu0 %v3563
      %v4020 = vpop.f32.mrb[0].mxu0
      %v4021 = vpop.f32.mrb[0].mxu0
      %v4022 = vpop.f32.mrb[0].mxu0
      %v4023 = vadd.f32 %v3911, %v4022
      %v4024 = vpop.f32.mrb[0].mxu0
      %4025 = vmatprep.mubr.bf16.mxu0 0
      %4026 = vmatmul.mubr.bf16.gmra.mrb[0].mxu0 %v3566
      %v4027 = vpop.f32.mrb[0].mxu0
      %v4028 = vadd.f32 %v3910, %v4027
      %v4029 = vpop.f32.mrb[0].mxu0
      %v4030 = vpop.f32.mrb[0].mxu0
      %v4031 = vpop.f32.mrb[0].mxu0
      %4032 = vmatprep.mubr.bf16.mxu0 0
      %4033 = vmatmul.mubr.bf16.gmra.mrb[0].mxu0 %v3569
      %v4034 = vpop.f32.mrb[0].mxu0
      %v4035 = vadd.f32 %v3909, %v4034
      %v4036 = vpop.f32.mrb[0].mxu0
      %v4037 = vpop.f32.mrb[0].mxu0
      %v4038 = vadd.f32 %v3908, %v4037
      %v4039 = vpop.f32.mrb[0].mxu0
      %4040 = vmatprep.mubr.bf16.mxu0 0
      %4041 = vmatmul.mubr.bf16.gmra.mrb[0].mxu0 %v3572
      %v4042 = vpop.f32.mrb[0].mxu0
      %v4043 = vpop.f32.mrb[0].mxu0
      %v4044 = vpop.f32.mrb[0].mxu0
      %v4045 = vadd.f32 %v3907, %v4044
      %v4046 = vpop.f32.mrb[0].mxu0
      %4047 = vmatprep.mubr.bf16.mxu0 0
      %4048 = vmatmul.mubr.bf16.gmra.mrb[0].mxu0 %v3575
      %v4049 = vpop.f32.mrb[0].mxu0
      %v4050 = vadd.f32 %v3906, %v4049
      %v4051 = vpop.f32.mrb[0].mxu0
      %v4052 = vpop.f32.mrb[0].mxu0
      %v4053 = vpop.f32.mrb[0].mxu0
      %4054 = vmatprep.mubr.bf16.mxu0 0
      %4055 = vmatmul.mubr.bf16.gmra.mrb[0].mxu0 %v3578
      %v4056 = vpop.f32.mrb[0].mxu0
      %v4057 = vadd.f32 %v3905, %v4056
      %v4058 = vpop.f32.mrb[0].mxu0
      %v4059 = vpop.f32.mrb[0].mxu0
      %v4060 = vadd.f32 %v3904, %v4059
      %v4061 = vpop.f32.mrb[0].mxu0
      %4062 = vmatprep.mubr.bf16.mxu0 0
      %4063 = vmatmul.mubr.bf16.gmra.mrb[0].mxu0 %v3581
      %v4064 = vpop.f32.mrb[0].mxu0
      %v4065 = vpop.f32.mrb[0].mxu0
      %v4066 = vpop.f32.mrb[0].mxu0
      %v4067 = vadd.f32 %v3903, %v4066
      %v4068 = vpop.f32.mrb[0].mxu0
      %4069 = vmatprep.mubr.bf16.mxu0 0
      %4070 = vmatmul.mubr.bf16.gmra.mrb[0].mxu0 %v3584
      %v4071 = vpop.f32.mrb[0].mxu0
      %v4072 = vadd.f32 %v3902, %v4071
      %v4073 = vpop.f32.mrb[0].mxu0
      %v4074 = vpop.f32.mrb[0].mxu0
      %v4075 = vpop.f32.mrb[0].mxu0
      %4076 = vmatprep.mubr.bf16.mxu0 0
      %4077 = vmatmul.mubr.bf16.gmra.mrb[0].mxu0 %v3587
      %v4078 = vpop.f32.mrb[0].mxu0
      %v4079 = vadd.f32 %v3901, %v4078
      %v4080 = vpop.f32.mrb[0].mxu0
      %v4081 = vpop.f32.mrb[0].mxu0
      %v4082 = vadd.f32 %v3900, %v4081
      %v4083 = vpop.f32.mrb[0].mxu0
      %4084 = vmatprep.mubr.bf16.mxu0 0
      %4085 = vmatmul.mubr.bf16.gmra.mrb[0].mxu0 %v3590
      %v4086 = vpop.f32.mrb[0].mxu0
      %v4087 = vpop.f32.mrb[0].mxu0
      %v4088 = vpop.f32.mrb[0].mxu0
      %v4089 = vadd.f32 %v3899, %v4088
      %v4090 = vpop.f32.mrb[0].mxu0
      %4091 = vmatprep.mubr.bf16.mxu0 0
      %4092 = vmatmul.mubr.bf16.gmra.mrb[0].mxu0 %v3593
      %v4093 = vpop.f32.mrb[0].mxu0
      %v4094 = vadd.f32 %v3898, %v4093
      %v4095 = vpop.f32.mrb[0].mxu0
      %v4096 = vpop.f32.mrb[0].mxu0
      %v4097 = vpop.f32.mrb[0].mxu0
      %4098 = vmatprep.mubr.bf16.mxu0 0
      %4099 = vmatmul.mubr.bf16.gmra.mrb[0].mxu0 %v3596
      %v4100 = vpop.f32.mrb[0].mxu0
      %v4101 = vadd.f32 %v3897, %v4100
      %v4102 = vpop.f32.mrb[0].mxu0
      %v4103 = vpop.f32.mrb[0].mxu0
      %v4104 = vadd.f32 %v3896, %v4103
      %v4105 = vpop.f32.mrb[0].mxu0
      %4106 = vmatprep.mubr.bf16.mxu0 0
      %4107 = vmatmul.mubr.bf16.gmra.mrb[0].mxu0 %v3599
      %v4108 = vpop.f32.mrb[0].mxu0
      %v4109 = vpop.f32.mrb[0].mxu0
      %v4110 = vpop.f32.mrb[0].mxu0
      %v4111 = vadd.f32 %v3895, %v4110
      %v4112 = vpop.f32.mrb[0].mxu0
      %4113 = vmatprep.mubr.bf16.mxu0 0
      %4114 = vmatmul.mubr.bf16.gmra.mrb[0].mxu0 %v3602
      %v4115 = vpop.f32.mrb[0].mxu0
      %v4116 = vadd.f32 %v3894, %v4115
      %v4117 = vpop.f32.mrb[0].mxu0
      %v4118 = vpop.f32.mrb[0].mxu0
      %v4119 = vpop.f32.mrb[0].mxu0
      %4120 = vmatprep.mubr.bf16.mxu0 0
      %4121 = vmatmul.mubr.bf16.gmra.mrb[0].mxu0 %v3605
      %v4122 = vpop.f32.mrb[0].mxu0
      %v4123 = vadd.f32 %v3893, %v4122
      %v4124 = vpop.f32.mrb[0].mxu0
      %v4125 = vpop.f32.mrb[0].mxu0
      %v4126 = vadd.f32 %v3892, %v4125
      %v4127 = vpop.f32.mrb[0].mxu0
      %4128 = vmatprep.mubr.bf16.mxu0 0
      %4129 = vmatmul.mubr.bf16.gmra.mrb[0].mxu0 %v3608
      %v4130 = vpop.f32.mrb[0].mxu0
      %v4131 = vpop.f32.mrb[0].mxu0
      %v4132 = vpop.f32.mrb[0].mxu0
      %v4133 = vadd.f32 %v3891, %v4132
      %v4134 = vpop.f32.mrb[0].mxu0
      %4135 = vmatprep.mubr.bf16.mxu0 0
      %4136 = vmatmul.mubr.bf16.gmra.mrb[0].mxu0 %v3611
      %v4137 = vpop.f32.mrb[0].mxu0
      %v4138 = vadd.f32 %v3890, %v4137
      %v4139 = vpop.f32.mrb[0].mxu0
      %v4140 = vpop.f32.mrb[0].mxu0
      %v4141 = vpop.f32.mrb[0].mxu0
      %4142 = vdwg.mxu0
      %s4143 = scalar_lea.vmem %s3, 24
      %v4144 = vld [vmem:[%s4143] sm:$0xf]
      %v4145 = vld [vmem:[%s4143 + $0x4] sm:$0xf]
      %v4146 = vld [vmem:[%s4143 + $0x8] sm:$0xf]
      %v4150 = vunpack.c.l.b16 %v4144
      %v4151 = vunpack.c.l.b16 %v4145
      %v4152 = vunpack.c.l.b16 %v4146
      %v4153 = vpack.c.b16 %v4151, %v4150
      %v4154 = vpack.c.b16 %v4152, %v4152
      %v4157 = vsel %vm3613, %v4154, 0
      %4159 = vmatprep.subr.bf16.mxu0 0
      %4160 = vmatpush1.bf16.msra.mxu0 %v4153
      %4161 = vmatprep.subr.bf16.mxu0 0
      %4162 = vmatpush1.bf16.msra.mxu0 %v4157
      %4163 = vmatprep.subr.bf16.mxu0 0
      %4164 = vmatpush1.bf16.msra.mxu0 0
      %4165 = vmatprep.subr.bf16.mxu0 0
      %4166 = vmatpush1.bf16.msra.mxu0 0
      %4167 = vmatprep.subr.bf16.mxu0 0
      %4168 = vmatpush1.bf16.msra.mxu0 0
      %4169 = vmatprep.subr.bf16.mxu0 0
      %4170 = vmatpush1.bf16.msra.mxu0 0
      %4171 = vmatprep.subr.bf16.mxu0 0
      %4172 = vmatpush1.bf16.msra.mxu0 0
      %4173 = vmatprep.subr.bf16.mxu0 0
      %4174 = vmatpush1.bf16.msra.mxu0 0
      %4175 = vmatprep.subr.bf16.mxu0 0
      %4176 = vmatpush1.bf16.msra.mxu0 0
      %4177 = vmatprep.subr.bf16.mxu0 0
      %4178 = vmatpush1.bf16.msra.mxu0 0
      %4179 = vmatprep.subr.bf16.mxu0 0
      %4180 = vmatpush1.bf16.msra.mxu0 0
      %4181 = vmatprep.subr.bf16.mxu0 0
      %4182 = vmatpush1.bf16.msra.mxu0 0
      %4183 = vmatprep.subr.bf16.mxu0 0
      %4184 = vmatpush1.bf16.msra.mxu0 0
      %4185 = vmatprep.subr.bf16.mxu0 0
      %4186 = vmatpush1.bf16.msra.mxu0 0
      %4187 = vmatprep.subr.bf16.mxu0 0
      %4188 = vmatpush1.bf16.msra.mxu0 0
      %4189 = vmatprep.subr.bf16.mxu0 0
      %4190 = vmatpush1.bf16.msra.mxu0 0
      %4191 = vmatprep.mubr.bf16.mxu0 0
      %4192 = vmatmul.mubr.bf16.gmra.mrb[0].mxu0 %v3542
      %v4193 = vpop.f32.mrb[0].mxu0
      %v4194 = vadd.f32 0.0, %v4193
      %v4195 = vpop.f32.mrb[0].mxu0
      %v4196 = vpop.f32.mrb[0].mxu0
      %v4197 = vadd.f32 0.0, %v4196
      %v4198 = vpop.f32.mrb[0].mxu0
      %4199 = vmatprep.mubr.bf16.mxu0 0
      %4200 = vmatmul.mubr.bf16.gmra.mrb[0].mxu0 %v3545
      %v4201 = vpop.f32.mrb[0].mxu0
      %v4202 = vadd.f32 0.0, %v4201
      %v4203 = vpop.f32.mrb[0].mxu0
      %v4204 = vpop.f32.mrb[0].mxu0
      %v4205 = vadd.f32 0.0, %v4204
      %v4206 = vpop.f32.mrb[0].mxu0
      %4207 = vmatprep.mubr.bf16.mxu0 0
      %4208 = vmatmul.mubr.bf16.gmra.mrb[0].mxu0 %v3548
      %v4209 = vpop.f32.mrb[0].mxu0
      %v4210 = vadd.f32 0.0, %v4209
      %v4211 = vpop.f32.mrb[0].mxu0
      %v4212 = vpop.f32.mrb[0].mxu0
      %v4213 = vadd.f32 0.0, %v4212
      %v4214 = vpop.f32.mrb[0].mxu0
      %4215 = vmatprep.mubr.bf16.mxu0 0
      %4216 = vmatmul.mubr.bf16.gmra.mrb[0].mxu0 %v3551
      %v4217 = vpop.f32.mrb[0].mxu0
      %v4218 = vadd.f32 0.0, %v4217
      %v4219 = vpop.f32.mrb[0].mxu0
      %v4220 = vpop.f32.mrb[0].mxu0
      %v4221 = vadd.f32 0.0, %v4220
      %v4222 = vpop.f32.mrb[0].mxu0
      %4223 = vmatprep.mubr.bf16.mxu0 0
      %4224 = vmatmul.mubr.bf16.gmra.mrb[0].mxu0 %v3554
      %v4225 = vpop.f32.mrb[0].mxu0
      %v4226 = vadd.f32 0.0, %v4225
      %v4227 = vpop.f32.mrb[0].mxu0
      %v4228 = vpop.f32.mrb[0].mxu0
      %v4229 = vadd.f32 0.0, %v4228
      %v4230 = vpop.f32.mrb[0].mxu0
      %4231 = vmatprep.mubr.bf16.mxu0 0
      %4232 = vmatmul.mubr.bf16.gmra.mrb[0].mxu0 %v3557
      %v4233 = vpop.f32.mrb[0].mxu0
      %v4234 = vadd.f32 0.0, %v4233
      %v4235 = vpop.f32.mrb[0].mxu0
      %v4236 = vpop.f32.mrb[0].mxu0
      %v4237 = vadd.f32 0.0, %v4236
      %v4238 = vpop.f32.mrb[0].mxu0
      %4239 = vmatprep.mubr.bf16.mxu0 0
      %4240 = vmatmul.mubr.bf16.gmra.mrb[0].mxu0 %v3560
      %v4241 = vpop.f32.mrb[0].mxu0
      %v4242 = vadd.f32 0.0, %v4241
      %v4243 = vpop.f32.mrb[0].mxu0
      %v4244 = vpop.f32.mrb[0].mxu0
      %v4245 = vadd.f32 0.0, %v4244
      %v4246 = vpop.f32.mrb[0].mxu0
      %4247 = vmatprep.mubr.bf16.mxu0 0
      %4248 = vmatmul.mubr.bf16.gmra.mrb[0].mxu0 %v3563
      %v4249 = vpop.f32.mrb[0].mxu0
      %v4250 = vadd.f32 0.0, %v4249
      %v4251 = vpop.f32.mrb[0].mxu0
      %v4252 = vpop.f32.mrb[0].mxu0
      %v4253 = vadd.f32 0.0, %v4252
      %v4254 = vpop.f32.mrb[0].mxu0
      %4255 = vmatprep.mubr.bf16.mxu0 0
      %4256 = vmatmul.mubr.bf16.gmra.mrb[0].mxu0 %v3566
      %v4257 = vpop.f32.mrb[0].mxu0
      %v4258 = vadd.f32 0.0, %v4257
      %v4259 = vpop.f32.mrb[0].mxu0
      %v4260 = vpop.f32.mrb[0].mxu0
      %v4261 = vadd.f32 0.0, %v4260
      %v4262 = vpop.f32.mrb[0].mxu0
      %4263 = vmatprep.mubr.bf16.mxu0 0
      %4264 = vmatmul.mubr.bf16.gmra.mrb[0].mxu0 %v3569
      %v4265 = vpop.f32.mrb[0].mxu0
      %v4266 = vadd.f32 0.0, %v4265
      %v4267 = vpop.f32.mrb[0].mxu0
      %v4268 = vpop.f32.mrb[0].mxu0
      %v4269 = vadd.f32 0.0, %v4268
      %v4270 = vpop.f32.mrb[0].mxu0
      %4271 = vmatprep.mubr.bf16.mxu0 0
      %4272 = vmatmul.mubr.bf16.gmra.mrb[0].mxu0 %v3572
      %v4273 = vpop.f32.mrb[0].mxu0
      %v4274 = vadd.f32 0.0, %v4273
      %v4275 = vpop.f32.mrb[0].mxu0
      %v4276 = vpop.f32.mrb[0].mxu0
      %v4277 = vadd.f32 0.0, %v4276
      %v4278 = vpop.f32.mrb[0].mxu0
      %4279 = vmatprep.mubr.bf16.mxu0 0
      %4280 = vmatmul.mubr.bf16.gmra.mrb[0].mxu0 %v3575
      %v4281 = vpop.f32.mrb[0].mxu0
      %v4282 = vadd.f32 0.0, %v4281
      %v4283 = vpop.f32.mrb[0].mxu0
      %v4284 = vpop.f32.mrb[0].mxu0
      %v4285 = vadd.f32 0.0, %v4284
      %v4286 = vpop.f32.mrb[0].mxu0
      %4287 = vmatprep.mubr.bf16.mxu0 0
      %4288 = vmatmul.mubr.bf16.gmra.mrb[0].mxu0 %v3578
      %v4289 = vpop.f32.mrb[0].mxu0
      %v4290 = vadd.f32 0.0, %v4289
      %v4291 = vpop.f32.mrb[0].mxu0
      %v4292 = vpop.f32.mrb[0].mxu0
      %v4293 = vadd.f32 0.0, %v4292
      %v4294 = vpop.f32.mrb[0].mxu0
      %4295 = vmatprep.mubr.bf16.mxu0 0
      %4296 = vmatmul.mubr.bf16.gmra.mrb[0].mxu0 %v3581
      %v4297 = vpop.f32.mrb[0].mxu0
      %v4298 = vadd.f32 0.0, %v4297
      %v4299 = vpop.f32.mrb[0].mxu0
      %v4300 = vpop.f32.mrb[0].mxu0
      %v4301 = vadd.f32 0.0, %v4300
      %v4302 = vpop.f32.mrb[0].mxu0
      %4303 = vmatprep.mubr.bf16.mxu0 0
      %4304 = vmatmul.mubr.bf16.gmra.mrb[0].mxu0 %v3584
      %v4305 = vpop.f32.mrb[0].mxu0
      %v4306 = vadd.f32 0.0, %v4305
      %v4307 = vpop.f32.mrb[0].mxu0
      %v4308 = vpop.f32.mrb[0].mxu0
      %v4309 = vadd.f32 0.0, %v4308
      %v4310 = vpop.f32.mrb[0].mxu0
      %4311 = vmatprep.mubr.bf16.mxu0 0
      %4312 = vmatmul.mubr.bf16.gmra.mrb[0].mxu0 %v3587
      %v4313 = vpop.f32.mrb[0].mxu0
      %v4314 = vadd.f32 0.0, %v4313
      %v4315 = vpop.f32.mrb[0].mxu0
      %v4316 = vpop.f32.mrb[0].mxu0
      %v4317 = vadd.f32 0.0, %v4316
      %v4318 = vpop.f32.mrb[0].mxu0
      %4319 = vmatprep.mubr.bf16.mxu0 0
      %4320 = vmatmul.mubr.bf16.gmra.mrb[0].mxu0 %v3590
      %v4321 = vpop.f32.mrb[0].mxu0
      %v4322 = vadd.f32 0.0, %v4321
      %v4323 = vpop.f32.mrb[0].mxu0
      %v4324 = vpop.f32.mrb[0].mxu0
      %v4325 = vadd.f32 0.0, %v4324
      %v4326 = vpop.f32.mrb[0].mxu0
      %4327 = vmatprep.mubr.bf16.mxu0 0
      %4328 = vmatmul.mubr.bf16.gmra.mrb[0].mxu0 %v3593
      %v4329 = vpop.f32.mrb[0].mxu0
      %v4330 = vadd.f32 0.0, %v4329
      %v4331 = vpop.f32.mrb[0].mxu0
      %v4332 = vpop.f32.mrb[0].mxu0
      %v4333 = vadd.f32 0.0, %v4332
      %v4334 = vpop.f32.mrb[0].mxu0
      %4335 = vmatprep.mubr.bf16.mxu0 0
      %4336 = vmatmul.mubr.bf16.gmra.mrb[0].mxu0 %v3596
      %v4337 = vpop.f32.mrb[0].mxu0
      %v4338 = vadd.f32 0.0, %v4337
      %v4339 = vpop.f32.mrb[0].mxu0
      %v4340 = vpop.f32.mrb[0].mxu0
      %v4341 = vadd.f32 0.0, %v4340
      %v4342 = vpop.f32.mrb[0].mxu0
      %4343 = vmatprep.mubr.bf16.mxu0 0
      %4344 = vmatmul.mubr.bf16.gmra.mrb[0].mxu0 %v3599
      %v4345 = vpop.f32.mrb[0].mxu0
      %v4346 = vadd.f32 0.0, %v4345
      %v4347 = vpop.f32.mrb[0].mxu0
      %v4348 = vpop.f32.mrb[0].mxu0
      %v4349 = vadd.f32 0.0, %v4348
      %v4350 = vpop.f32.mrb[0].mxu0
      %4351 = vmatprep.mubr.bf16.mxu0 0
      %4352 = vmatmul.mubr.bf16.gmra.mrb[0].mxu0 %v3602
      %v4353 = vpop.f32.mrb[0].mxu0
      %v4354 = vadd.f32 0.0, %v4353
      %v4355 = vpop.f32.mrb[0].mxu0
      %v4356 = vpop.f32.mrb[0].mxu0
      %v4357 = vadd.f32 0.0, %v4356
      %v4358 = vpop.f32.mrb[0].mxu0
      %4359 = vmatprep.mubr.bf16.mxu0 0
      %4360 = vmatmul.mubr.bf16.gmra.mrb[0].mxu0 %v3605
      %v4361 = vpop.f32.mrb[0].mxu0
      %v4362 = vadd.f32 0.0, %v4361
      %v4363 = vpop.f32.mrb[0].mxu0
      %v4364 = vpop.f32.mrb[0].mxu0
      %v4365 = vadd.f32 0.0, %v4364
      %v4366 = vpop.f32.mrb[0].mxu0
      %4367 = vmatprep.mubr.bf16.mxu0 0
      %4368 = vmatmul.mubr.bf16.gmra.mrb[0].mxu0 %v3608
      %v4369 = vpop.f32.mrb[0].mxu0
      %v4370 = vadd.f32 0.0, %v4369
      %v4371 = vpop.f32.mrb[0].mxu0
      %v4372 = vpop.f32.mrb[0].mxu0
      %v4373 = vadd.f32 0.0, %v4372
      %v4374 = vpop.f32.mrb[0].mxu0
      %4375 = vmatprep.mubr.bf16.mxu0 0
      %4376 = vmatmul.mubr.bf16.gmra.mrb[0].mxu0 %v3611
      %v4377 = vpop.f32.mrb[0].mxu0
      %v4378 = vadd.f32 0.0, %v4377
      %v4379 = vpop.f32.mrb[0].mxu0
      %v4380 = vpop.f32.mrb[0].mxu0
      %v4381 = vadd.f32 0.0, %v4380
      %v4382 = vpop.f32.mrb[0].mxu0
      %4383 = vdwg.mxu0
      %v4384 = vrot.slane %v4194, 2
      %v4385 = vrot.slane %v4197, 2
      %v4386 = vrot.slane %v4202, 2
      %v4387 = vrot.slane %v4205, 2
      %v4388 = vrot.slane %v4210, 2
      %v4389 = vrot.slane %v4213, 2
      %v4390 = vrot.slane %v4218, 2
      %v4391 = vrot.slane %v4221, 2
      %v4392 = vrot.slane %v4226, 2
      %v4393 = vrot.slane %v4229, 2
      %v4394 = vrot.slane %v4234, 2
      %v4395 = vrot.slane %v4237, 2
      %v4396 = vrot.slane %v4242, 2
      %v4397 = vrot.slane %v4245, 2
      %v4398 = vrot.slane %v4250, 2
      %v4399 = vrot.slane %v4253, 2
      %v4400 = vrot.slane %v4258, 2
      %v4401 = vrot.slane %v4261, 2
      %v4402 = vrot.slane %v4266, 2
      %v4403 = vrot.slane %v4269, 2
      %v4404 = vrot.slane %v4274, 2
      %v4405 = vrot.slane %v4277, 2
      %v4406 = vrot.slane %v4282, 2
      %v4407 = vrot.slane %v4285, 2
      %v4408 = vrot.slane %v4290, 2
      %v4409 = vrot.slane %v4293, 2
      %v4410 = vrot.slane %v4298, 2
      %v4411 = vrot.slane %v4301, 2
      %v4412 = vrot.slane %v4306, 2
      %v4413 = vrot.slane %v4309, 2
      %v4414 = vrot.slane %v4314, 2
      %v4415 = vrot.slane %v4317, 2
      %v4416 = vrot.slane %v4322, 2
      %v4417 = vrot.slane %v4325, 2
      %v4418 = vrot.slane %v4330, 2
      %v4419 = vrot.slane %v4333, 2
      %v4420 = vrot.slane %v4338, 2
      %v4421 = vrot.slane %v4341, 2
      %v4422 = vrot.slane %v4346, 2
      %v4423 = vrot.slane %v4349, 2
      %v4424 = vrot.slane %v4354, 2
      %v4425 = vrot.slane %v4357, 2
      %v4426 = vrot.slane %v4362, 2
      %v4427 = vrot.slane %v4365, 2
      %v4428 = vrot.slane %v4370, 2
      %v4429 = vrot.slane %v4373, 2
      %v4430 = vrot.slane %v4378, 2
      %v4431 = vrot.slane %v4381, 2
      %vm4432 = vcmp.lt.s32.totalorder %v1505, 6
      %v4433 = vsel %vm4432, %v4430, %v4431
      %v4434 = vsel %vm4432, %v4429, %v4430
      %v4435 = vsel %vm4432, %v4427, %v4428
      %v4436 = vsel %vm4432, %v4426, %v4427
      %v4437 = vsel %vm4432, %v4424, %v4425
      %v4438 = vsel %vm4432, %v4423, %v4424
      %v4439 = vsel %vm4432, %v4421, %v4422
      %v4440 = vsel %vm4432, %v4420, %v4421
      %v4441 = vsel %vm4432, %v4418, %v4419
      %v4442 = vsel %vm4432, %v4417, %v4418
      %v4443 = vsel %vm4432, %v4415, %v4416
      %v4444 = vsel %vm4432, %v4414, %v4415
      %v4445 = vsel %vm4432, %v4412, %v4413
      %v4446 = vsel %vm4432, %v4411, %v4412
      %v4447 = vsel %vm4432, %v4409, %v4410
      %v4448 = vsel %vm4432, %v4408, %v4409
      %v4449 = vsel %vm4432, %v4406, %v4407
      %v4450 = vsel %vm4432, %v4405, %v4406
      %v4451 = vsel %vm4432, %v4403, %v4404
      %v4452 = vsel %vm4432, %v4402, %v4403
      %v4453 = vsel %vm4432, %v4400, %v4401
      %v4454 = vsel %vm4432, %v4399, %v4400
      %v4455 = vsel %vm4432, %v4397, %v4398
      %v4456 = vsel %vm4432, %v4396, %v4397
      %v4457 = vsel %vm4432, %v4394, %v4395
      %v4458 = vsel %vm4432, %v4393, %v4394
      %v4459 = vsel %vm4432, %v4391, %v4392
      %v4460 = vsel %vm4432, %v4390, %v4391
      %v4461 = vsel %vm4432, %v4388, %v4389
      %v4462 = vsel %vm4432, %v4387, %v4388
      %v4463 = vsel %vm4432, %v4385, %v4386
      %v4464 = vsel %vm4432, %v4384, %v4385
      %v4465 = vadd.f32 %v3969, %v4464
      %v4466 = vadd.f32 %v3972, %v4463
      %v4467 = vadd.f32 %v3979, %v4462
      %v4468 = vadd.f32 %v3984, %v4461
      %v4469 = vadd.f32 %v3991, %v4460
      %v4470 = vadd.f32 %v3994, %v4459
      %v4471 = vadd.f32 %v4001, %v4458
      %v4472 = vadd.f32 %v4006, %v4457
      %v4473 = vadd.f32 %v4013, %v4456
      %v4474 = vadd.f32 %v4016, %v4455
      %v4475 = vadd.f32 %v4023, %v4454
      %v4476 = vadd.f32 %v4028, %v4453
      %v4477 = vadd.f32 %v4035, %v4452
      %v4478 = vadd.f32 %v4038, %v4451
      %v4479 = vadd.f32 %v4045, %v4450
      %v4480 = vadd.f32 %v4050, %v4449
      %v4481 = vadd.f32 %v4057, %v4448
      %v4482 = vadd.f32 %v4060, %v4447
      %v4483 = vadd.f32 %v4067, %v4446
      %v4484 = vadd.f32 %v4072, %v4445
      %v4485 = vadd.f32 %v4079, %v4444
      %v4486 = vadd.f32 %v4082, %v4443
      %v4487 = vadd.f32 %v4089, %v4442
      %v4488 = vadd.f32 %v4094, %v4441
      %v4489 = vadd.f32 %v4101, %v4440
      %v4490 = vadd.f32 %v4104, %v4439
      %v4491 = vadd.f32 %v4111, %v4438
      %v4492 = vadd.f32 %v4116, %v4437
      %v4493 = vadd.f32 %v4123, %v4436
      %v4494 = vadd.f32 %v4126, %v4435
      %v4495 = vadd.f32 %v4133, %v4434
      %v4496 = vadd.f32 %v4138, %v4433
      %v4497 = vld [vmem:[%s4] sm:$0x1]
      %v4499 = vlaneseq
      %v4500 = vshrl.u32 %v4499, 7
      %v4501 = vsub.s32 0, %v4500
      %v4502 = vrot.slane %v4497, %v4501
      %v4504 = vadd.f32 %v4465, %v4502
      %v4505 = vadd.f32 %v4466, %v4502
      %v4506 = vadd.f32 %v4467, %v4502
      %v4507 = vadd.f32 %v4468, %v4502
      %v4508 = vadd.f32 %v4469, %v4502
      %v4509 = vadd.f32 %v4470, %v4502
      %v4510 = vadd.f32 %v4471, %v4502
      %v4511 = vadd.f32 %v4472, %v4502
      %v4512 = vadd.f32 %v4473, %v4502
      %v4513 = vadd.f32 %v4474, %v4502
      %v4514 = vadd.f32 %v4475, %v4502
      %v4515 = vadd.f32 %v4476, %v4502
      %v4516 = vadd.f32 %v4477, %v4502
      %v4517 = vadd.f32 %v4478, %v4502
      %v4518 = vadd.f32 %v4479, %v4502
      %v4519 = vadd.f32 %v4480, %v4502
      %v4520 = vadd.f32 %v4481, %v4502
      %v4521 = vadd.f32 %v4482, %v4502
      %v4522 = vadd.f32 %v4483, %v4502
      %v4523 = vadd.f32 %v4484, %v4502
      %v4524 = vadd.f32 %v4485, %v4502
      %v4525 = vadd.f32 %v4486, %v4502
      %v4526 = vadd.f32 %v4487, %v4502
      %v4527 = vadd.f32 %v4488, %v4502
      %v4528 = vadd.f32 %v4489, %v4502
      %v4529 = vadd.f32 %v4490, %v4502
      %v4530 = vadd.f32 %v4491, %v4502
      %v4531 = vadd.f32 %v4492, %v4502
      %v4532 = vadd.f32 %v4493, %v4502
      %v4533 = vadd.f32 %v4494, %v4502
      %v4534 = vadd.f32 %v4495, %v4502
      %v4535 = vadd.f32 %v4496, %v4502
      %4536 = vst.msk [vmem:[%s248] sm:$0xff] %vm1026, %v4504
      %4537 = vst.msk [vmem:[%s248 + $0x8] sm:$0xff] %vm1026, %v4505
      %4538 = vst.msk [vmem:[%s248 + $0x10] sm:$0xff] %vm1026, %v4506
      %4539 = vst.msk [vmem:[%s248 + $0x18] sm:$0xff] %vm1026, %v4507
      %4540 = vst.msk [vmem:[%s248 + $0x20] sm:$0xff] %vm1026, %v4508
      %4541 = vst.msk [vmem:[%s248 + $0x28] sm:$0xff] %vm1026, %v4509
      %4542 = vst.msk [vmem:[%s248 + $0x30] sm:$0xff] %vm1026, %v4510
      %4543 = vst.msk [vmem:[%s248 + $0x38] sm:$0xff] %vm1026, %v4511
      %4544 = vst.msk [vmem:[%s248 + $0x40] sm:$0xff] %vm1026, %v4512
      %4545 = vst.msk [vmem:[%s248 + $0x48] sm:$0xff] %vm1026, %v4513
      %4546 = vst.msk [vmem:[%s248 + $0x50] sm:$0xff] %vm1026, %v4514
      %4547 = vst.msk [vmem:[%s248 + $0x58] sm:$0xff] %vm1026, %v4515
      %4548 = vst.msk [vmem:[%s248 + $0x60] sm:$0xff] %vm1026, %v4516
      %4549 = vst.msk [vmem:[%s248 + $0x68] sm:$0xff] %vm1026, %v4517
      %4550 = vst.msk [vmem:[%s248 + $0x70] sm:$0xff] %vm1026, %v4518
      %4551 = vst.msk [vmem:[%s248 + $0x78] sm:$0xff] %vm1026, %v4519
      %4552 = vst.msk [vmem:[%s248 + $0x80] sm:$0xff] %vm1026, %v4520
      %4553 = vst.msk [vmem:[%s248 + $0x88] sm:$0xff] %vm1026, %v4521
      %4554 = vst.msk [vmem:[%s248 + $0x90] sm:$0xff] %vm1026, %v4522
      %4555 = vst.msk [vmem:[%s248 + $0x98] sm:$0xff] %vm1026, %v4523
      %4556 = vst.msk [vmem:[%s248 + $0xa0] sm:$0xff] %vm1026, %v4524
      %4557 = vst.msk [vmem:[%s248 + $0xa8] sm:$0xff] %vm1026, %v4525
      %4558 = vst.msk [vmem:[%s248 + $0xb0] sm:$0xff] %vm1026, %v4526
      %4559 = vst.msk [vmem:[%s248 + $0xb8] sm:$0xff] %vm1026, %v4527
      %4560 = vst.msk [vmem:[%s248 + $0xc0] sm:$0xff] %vm1026, %v4528
      %4561 = vst.msk [vmem:[%s248 + $0xc8] sm:$0xff] %vm1026, %v4529
      %4562 = vst.msk [vmem:[%s248 + $0xd0] sm:$0xff] %vm1026, %v4530
      %4563 = vst.msk [vmem:[%s248 + $0xd8] sm:$0xff] %vm1026, %v4531
      %4564 = vst.msk [vmem:[%s248 + $0xe0] sm:$0xff] %vm1026, %v4532
      %4565 = vst.msk [vmem:[%s248 + $0xe8] sm:$0xff] %vm1026, %v4533
      %4566 = vst.msk [vmem:[%s248 + $0xf0] sm:$0xff] %vm1026, %v4534
      %4567 = vst.msk [vmem:[%s248 + $0xf8] sm:$0xff] %vm1026, %v4535
      %s4568 = smul.u32 16, %s21
      %p4569 = scmp.lt.s32.totalorder %s20, 1
      %s4570 = scalar_select %p4569, %s20, 1
      %p4571 = scmp.lt.s32.totalorder %s4568, 15
      %s4572 = scalar_select %p4571, %s4568, 15
      %s4573 = smul.addr %s4572, 2
      %s4574 = smul.addr %s4570, 32
      %s4575 = sadd.s32 %s4573, %s4574
      %s4576 = smul.addr %s4575, 8
      %s4577 = scalar_lea.vmem %s5, %s4576
      // Predicated region
      $region41: #{tpu_custom_call.1} parent=39 // pred_check
        %p4578 = pneg %p158
      $region42: #{tpu_custom_call.1} parent=39 // pred_check_branch
        %4580 = sbr.rel (%p4578) target = $region44
      $region43: #{tpu_custom_call.1} parent=39 // pred_region
        %s4581 = smul.u32 16, %s21
      $region44: #{tpu_custom_call.1} parent=39 // pred_fallthru
        _
    $region40: #{tpu_custom_call.1} parent=5 // pred_fallthru
      _
    %p4582 = scmp.le.s32.totalorder 2, %s11
    // Predicated region
    $region45: #{tpu_custom_call.1} parent=5 // pred_check
      %p4583 = pneg %p4582
    $region46: #{tpu_custom_call.1} parent=5 // pred_check_branch
      %4585 = sbr.rel (%p4583) target = $region48
    $region47: #{tpu_custom_call.1} parent=5 // pred_region
      %s4586 = ssub.s32 %s11, 2
      // Predicated region
      $region49: #{tpu_custom_call.1} parent=47 // pred_check
        %p4587 = pneg %p164
      $region50: #{tpu_custom_call.1} parent=47 // pred_check_branch
        %4589 = sbr.rel (%p4587) target = $region52
      $region51: #{tpu_custom_call.1} parent=47 // pred_region
        %s4590 = smul.u32 16, %s23
        %p4591 = scmp.lt.s32.totalorder %s22, 1
        %s4592 = scalar_select %p4591, %s22, 1
        %p4593 = scmp.lt.s32.totalorder %s4590, 15
        %s4594 = scalar_select %p4593, %s4590, 15
        %s4595 = smul.addr %s4594, 2
        %s4596 = smul.addr %s4592, 32
        %s4597 = sadd.s32 %s4595, %s4596
        %s4598 = smul.addr %s4597, 8
        %s4599 = scalar_lea.vmem %s5, %s4598
      $region52: #{tpu_custom_call.1} parent=47 // pred_fallthru
        _
    $region48: #{tpu_custom_call.1} parent=5 // pred_fallthru
      _
  $region6: #{tpu_custom_call.1} parent=0 // loop_footer
    %s15 = sadd.s32 1, %s11
  $region7: #{tpu_custom_call.1} parent=0 // loop_footer_branch
    %10 = sbr.rel target = $region3
  $region8: #{tpu_custom_call.1} parent=0 // loop_exit
    _

</llo_original>
